<compile_context>
chip_gen: v6e
topology: v6e:2x2x1
jax: 0.10.0
libtpu: 0.0.40
codegen_flags: <defaults>
</compile_context>

<pallas_src>
import functools

import jax
import jax.numpy as jnp
from jax.experimental import pallas as pl
from jax.experimental.pallas import tpu as pltpu


_VMEM = pl.BlockSpec(memory_space=pltpu.MemorySpace.VMEM)


# ---------------------------------------------------------------------------
# Fused Pallas kernel
# ---------------------------------------------------------------------------

def fused_lstm_kernel(x_ref, wx0a_ref, wx0b_ref, b0_ref, whh0_ref,
                      w1a_ref, w1b_ref, b1_ref, whh1_ref,
                      wh1_ref, bh1_ref, wh2_ref, bh2_ref,
                      o_ref,
                      gx_scr, out_scr,
                      *, T, B, H):
    """Full LSTMBaseline forward (folded input Linear -> 2-layer bi-LSTM -> MLP head).

    x_ref:       (T*B, Din)  time-major flattened input (row = t*B + b), B padded to 8.
    wx0a/wx0b:   (Din, 8H)   layer-0 input->gate weights with the input Linear folded in;
                             'a' fills the forward-direction gate columns from the original
                             time order, 'b' the backward-direction columns from the
                             time-reversed sequence (pre-aligned gx).
    b0, b1:      (1, 8H)     fused gate biases.
    whh0, whh1:  (2H, 8H)    block-diagonal recurrent weights (fwd rows -> fwd cols, bwd->bwd).
    w1a/w1b:     (2H, 8H)    layer-1 input->gate weights over the layer-0 output scratch and
                             its time-reversed copy.
    wh1/bh1/wh2/bh2:         MLP head.
    o_ref:       (B, O)
    Gate column layout (both layers): [i_f,i_b,f_f,f_b,o_f,o_b,g_f,g_b]
      -> sigmoid over the first 6H columns, tanh over the trailing 2H columns.
    """
    H2 = 2 * H
    H6 = 6 * H

    def reverse_time(v):
        # Bulk time reversal of a (T*B, K) value; runs once per layer, off the serial chain.
        return jnp.concatenate(
            [v[(T - 1 - t) * B:(T - t) * B, :] for t in range(T)], axis=0)

    def bilstm_layer(whh_blk, store_outputs):
        """Shared fwd/bwd recurrence over the pre-aligned gx_scr.

        Row block s of gx_scr holds the fwd-direction gates for time s in the fwd columns and
        the bwd-direction gates for time T-1-s in the bwd columns, so both directions advance
        with a single contiguous load per step.  Returns the final [h_fwd | h_bwd].
        """
        h_cat = jnp.zeros((B, H2), jnp.float32)   # [h_fwd | h_bwd]
        c_cat = jnp.zeros((B, H2), jnp.float32)   # [c_fwd | c_bwd]
        for s in range(T):                        # static unroll: short fixed T, static offsets
            gates = (gx_scr[pl.ds(s * B, B), :]
                     + jnp.dot(h_cat, whh_blk, preferred_element_type=jnp.float32))
            sig = jax.nn.sigmoid(gates[:, :H6])   # i | f | o   (one contiguous 6H slice)
            g_g = jnp.tanh(gates[:, H6:])         # g           (trailing contiguous 2H)
            i_g = sig[:, 0 * H2:1 * H2]
            f_g = sig[:, 1 * H2:2 * H2]
            o_g = sig[:, 2 * H2:3 * H2]
            c_cat = f_g * c_cat + i_g * g_g
            h_cat = o_g * jnp.tanh(c_cat)
            if store_outputs:
                out_scr[pl.ds(s * B, B), :] = h_cat   # ONE lane-dense (B, 2H) store per step
        return h_cat

    # ---- layer 0: hoisted input->gates (input Linear already folded into wx0a/wx0b) -------
    xv = x_ref[...]                                               # (T*B, Din)
    gx_scr[...] = (jnp.dot(xv, wx0a_ref[...], preferred_element_type=jnp.float32)
                   + jnp.dot(reverse_time(xv), wx0b_ref[...],
                             preferred_element_type=jnp.float32)
                   + b0_ref[...])                                 # (T*B, 8H), pre-aligned
    bilstm_layer(whh0_ref[...], store_outputs=True)

    # ---- layer 1: hoisted input->gates over the whole layer-0 output sequence --------------
    seq = out_scr[...]                                            # A[s] = [h_f(s) | h_b(T-1-s)]
    gx_scr[...] = (jnp.dot(seq, w1a_ref[...], preferred_element_type=jnp.float32)
                   + jnp.dot(reverse_time(seq), w1b_ref[...],
                             preferred_element_type=jnp.float32)
                   + b1_ref[...])                                 # (T*B, 8H), pre-aligned
    last_hidden = bilstm_layer(whh1_ref[...], store_outputs=False)   # (B, 2H)
    # last_hidden == torch.cat([hidden[-2], hidden[-1]], dim=1)

    # ---- head: Linear -> ReLU -> Dropout(identity in eval) -> Linear -----------------------
    hmid = (jnp.dot(last_hidden, wh1_ref[...], preferred_element_type=jnp.float32)
            + bh1_ref[...])
    hmid = jnp.maximum(hmid, 0.0)
    o_ref[...] = (jnp.dot(hmid, wh2_ref[...], preferred_element_type=jnp.float32)
                  + bh2_ref[...])


# ---------------------------------------------------------------------------
# Parameter re-layout (one-time, outside the kernel)
# ---------------------------------------------------------------------------

def prepare_fused_params(params):
    """Re-layout PyTorch-style per-direction LSTM weights for the fused kernel."""
    (wih_f0, whh_f0, b_f0), (wih_b0, whh_b0, b_b0) = params["lstm"][0]
    (wih_f1, whh_f1, b_f1), (wih_b1, whh_b1, b_b1) = params["lstm"][1]
    H = whh_f0.shape[0]

    def fuse(mf, mb):
        # natural per-direction gate order [i,f,g,o] (K,4H) x2
        #   -> fused (K,8H) layout [i_f,i_b,f_f,f_b,o_f,o_b,g_f,g_b]
        def sp(m):
            return m[:, 0:H], m[:, H:2 * H], m[:, 2 * H:3 * H], m[:, 3 * H:4 * H]
        i_f, f_f, g_f, o_f = sp(mf)
        i_b, f_b, g_b, o_b = sp(mb)
        return jnp.concatenate([i_f, i_b, f_f, f_b, o_f, o_b, g_f, g_b], axis=1)

    zE = jnp.zeros_like(wih_f0)               # (E, 4H)
    zH = jnp.zeros((H, 4 * H), jnp.float32)

    w_in, b_in = params["w_in"], params["b_in"]
    # layer 0: fold the input Linear -> (x @ w_in + b_in) @ W + b == x @ (w_in @ W) + (b_in @ W + b)
    wx0a = w_in @ fuse(wih_f0, zE)                              # (Din, 8H) fwd cols only
    wx0b = w_in @ fuse(zE, wih_b0)                              # (Din, 8H) bwd cols only
    b0 = b_in @ fuse(wih_f0, wih_b0) + fuse(b_f0, b_b0)         # (1, 8H)
    whh0 = jnp.concatenate([fuse(whh_f0, zH), fuse(zH, whh_b0)], axis=0)   # (2H, 8H)

    # layer 1 consumes the layer-0 output scratch A[s] = [h_fwd(s) | h_bwd(T-1-s)]
    # and its time-reversed copy A_rev[s] = [h_fwd(T-1-s) | h_bwd(s)]:
    #   fwd cols(s)  = h_fwd(s)     @ wih_f1[:H] + h_bwd(s)     @ wih_f1[H:]
    #   bwd cols(s)  = h_fwd(T-1-s) @ wih_b1[:H] + h_bwd(T-1-s) @ wih_b1[H:]
    w1a = jnp.concatenate([fuse(wih_f1[:H], zH), fuse(zH, wih_b1[H:])], axis=0)  # (2H, 8H)
    w1b = jnp.concatenate([fuse(zH, wih_b1[:H]), fuse(wih_f1[H:], zH)], axis=0)  # (2H, 8H)
    b1 = fuse(b_f1, b_b1)
    whh1 = jnp.concatenate([fuse(whh_f1, zH), fuse(zH, whh_b1)], axis=0)

    return dict(wx0a=wx0a, wx0b=wx0b, b0=b0, whh0=whh0,
                w1a=w1a, w1b=w1b, b1=b1, whh1=whh1,
                wh1=params["w_h1"], bh1=params["b_h1"],
                wh2=params["w_h2"], bh2=params["b_h2"])


# ---------------------------------------------------------------------------
# Full model forward (single pallas_call)
# ---------------------------------------------------------------------------

def lstm_baseline_forward(params, x):
    """x: (B, T, input_dim) -> (B, output_dim)."""
    assert len(params["lstm"]) == 2, "fused kernel is specialised for num_layers=2"
    B, T, D = x.shape
    H = params["lstm"][0][0][1].shape[0]     # hidden_dim
    O = params["w_h2"].shape[1]              # output_dim
    Bp = ((B + 7) // 8) * 8                  # pad batch to the 8-row sublane tile
    fp = prepare_fused_params(params)

    # time-major, flattened to 2-D (row = t*Bp + b); padded rows are zeros and sliced off
    x_pad = jnp.pad(x.astype(jnp.float32), ((0, Bp - B), (0, 0), (0, 0)))
    x_tm = jnp.transpose(x_pad, (1, 0, 2)).reshape(T * Bp, D)

    kernel = functools.partial(fused_lstm_kernel, T=T, B=Bp, H=H)
    out = pl.pallas_call(
        kernel,
        out_shape=jax.ShapeDtypeStruct((Bp, O), jnp.float32),
        in_specs=[_VMEM] * 13,
        out_specs=_VMEM,
        scratch_shapes=[
            pltpu.VMEM((T * Bp, 8 * H), jnp.float32),  # pre-aligned input->gate activations
            pltpu.VMEM((T * Bp, 2 * H), jnp.float32),  # layer-0 per-step hidden sequence
        ],
    )(x_tm, fp["wx0a"], fp["wx0b"], fp["b0"], fp["whh0"],
      fp["w1a"], fp["w1b"], fp["b1"], fp["whh1"],
      fp["wh1"], fp["bh1"], fp["wh2"], fp["bh2"])
    return out[:B]


# ---------------------------------------------------------------------------
# Pure-JAX reference (mirrors the PyTorch module, for correctness check)
# ---------------------------------------------------------------------------

def _ref_lstm_dir(x_seq, w_ih, w_hh, b):
    H = w_hh.shape[0]
    B = x_seq.shape[1]

    def step(carry, x_t):
        hh, cc = carry
        gates = x_t @ w_ih + hh @ w_hh + b[0]
        i = jax.nn.sigmoid(gates[:, 0 * H:1 * H])
        f = jax.nn.sigmoid(gates[:, 1 * H:2 * H])
        g = jnp.tanh(gates[:, 2 * H:3 * H])
        o = jax.nn.sigmoid(gates[:, 3 * H:4 * H])
        cc = f * cc + i * g
        hh = o * jnp.tanh(cc)
        return (hh, cc), hh

    init = (jnp.zeros((B, H), jnp.float32), jnp.zeros((B, H), jnp.float32))
    _, hs = jax.lax.scan(step, init, x_seq)
    return hs


def lstm_baseline_reference(params, x):
    B, T, D = x.shape
    embed_dim = params["w_in"].shape[1]
    h = (x.reshape(B * T, D) @ params["w_in"] + params["b_in"]).reshape(B, T, embed_dim)
    inp = jnp.transpose(h, (1, 0, 2))
    h_fwd_last = h_bwd_last = None
    for (wih_f, whh_f, b_f), (wih_b, whh_b, b_b) in params["lstm"]:
        fwd = _ref_lstm_dir(inp, wih_f, whh_f, b_f)
        bwd = _ref_lstm_dir(inp[::-1], wih_b, whh_b, b_b)
        inp = jnp.concatenate([fwd, bwd[::-1]], axis=-1)
        h_fwd_last, h_bwd_last = fwd[-1], bwd[-1]
    last_hidden = jnp.concatenate([h_fwd_last, h_bwd_last], axis=1)
    hmid = jnp.maximum(last_hidden @ params["w_h1"] + params["b_h1"], 0.0)
    return hmid @ params["w_h2"] + params["b_h2"]


# ---------------------------------------------------------------------------
# Deterministic parameter init (shapes per LSTMBaseline.__init__, regression task)
# ---------------------------------------------------------------------------

def init_params(key, *, input_dim, embed_dim, hidden_dim, num_layers, output_dim):
    keys = iter(jax.random.split(key, 64))

    def unif(shape, fan):
        bound = 1.0 / float(fan) ** 0.5
        return jax.random.uniform(next(keys), shape, jnp.float32, -bound, bound)

    params = {}
    # nn.Linear(input_dim, embed_dim)
    params["w_in"] = unif((input_dim, embed_dim), input_dim)
    params["b_in"] = unif((1, embed_dim), input_dim)

    # nn.LSTM(embed_dim, hidden_dim, num_layers, bidirectional=True)
    params["lstm"] = []
    for layer in range(num_layers):
        in_dim = embed_dim if layer == 0 else 2 * hidden_dim
        dirs = []
        for _d in range(2):  # forward, backward
            w_ih = unif((in_dim, 4 * hidden_dim), hidden_dim)       # weight_ih^T
            w_hh = unif((hidden_dim, 4 * hidden_dim), hidden_dim)   # weight_hh^T
            b = unif((1, 4 * hidden_dim), hidden_dim) + unif((1, 4 * hidden_dim), hidden_dim)
            dirs.append((w_ih, w_hh, b))
        params["lstm"].append(tuple(dirs))

    # head: Linear(2H, H) -> ReLU -> Dropout -> Linear(H, output_dim)
    lstm_out = 2 * hidden_dim
    params["w_h1"] = unif((lstm_out, lstm_out // 2), lstm_out)
    params["b_h1"] = unif((1, lstm_out // 2), lstm_out)
    params["w_h2"] = unif((lstm_out // 2, output_dim), lstm_out // 2)
    params["b_h2"] = unif((1, output_dim), lstm_out // 2)
    return params


# ---------------------------------------------------------------------------

if __name__ == "__main__":
    B, T = 2, 8
    INPUT_DIM, EMBED_DIM, HIDDEN_DIM, NUM_LAYERS, OUTPUT_DIM = 16, 32, 32, 2, 1

    key = jax.random.PRNGKey(0)
    k_par, k_x = jax.random.split(key)
    params = init_params(
        k_par,
        input_dim=INPUT_DIM,
        embed_dim=EMBED_DIM,
        hidden_dim=HIDDEN_DIM,
        num_layers=NUM_LAYERS,
        output_dim=OUTPUT_DIM,
    )
    x = jax.random.normal(k_x, (B, T, INPUT_DIM), dtype=jnp.float32)

    fwd = jax.jit(functools.partial(lstm_baseline_forward, params))
    out = fwd(x)
    jax.block_until_ready(out)

    ref = lstm_baseline_reference(params, x)
    assert out.shape == (B, OUTPUT_DIM), out.shape
    assert jnp.allclose(out, ref, rtol=1e-4, atol=1e-4), (out, ref)

    print("KERNEL_OK")
</pallas_src>

<mosaic_0001>
module attributes {stable_mosaic.version = 11 : i64} {
  func.func @fused_lstm_kernel(%arg0: memref<64x16xf32, #tpu.memory_space<vmem>>, %arg1: memref<16x256xf32, #tpu.memory_space<vmem>>, %arg2: memref<16x256xf32, #tpu.memory_space<vmem>>, %arg3: memref<1x256xf32, #tpu.memory_space<vmem>>, %arg4: memref<64x256xf32, #tpu.memory_space<vmem>>, %arg5: memref<64x256xf32, #tpu.memory_space<vmem>>, %arg6: memref<64x256xf32, #tpu.memory_space<vmem>>, %arg7: memref<1x256xf32, #tpu.memory_space<vmem>>, %arg8: memref<64x256xf32, #tpu.memory_space<vmem>>, %arg9: memref<64x32xf32, #tpu.memory_space<vmem>>, %arg10: memref<1x32xf32, #tpu.memory_space<vmem>>, %arg11: memref<32x1xf32, #tpu.memory_space<vmem>>, %arg12: memref<1x1xf32, #tpu.memory_space<vmem>>, %arg13: memref<8x1xf32, #tpu.memory_space<vmem>>, %arg14: memref<64x256xf32, #tpu.memory_space<vmem>>, %arg15: memref<64x64xf32, #tpu.memory_space<vmem>>) attributes {dimension_semantics = [], scalar_prefetch = 0 : i64, scratch_operands = 2 : i64, tpu.core_type = #tpu.core_type<tc>} {
    %c0 = arith.constant 0 : index
    %c0_0 = arith.constant 0 : index
    %0 = vector.load %arg0[%c0, %c0_0] : memref<64x16xf32, #tpu.memory_space<vmem>>, vector<64x16xf32>
    %c0_1 = arith.constant 0 : index
    %c0_2 = arith.constant 0 : index
    %1 = vector.load %arg1[%c0_1, %c0_2] : memref<16x256xf32, #tpu.memory_space<vmem>>, vector<16x256xf32>
    %cst = arith.constant dense<0.000000e+00> : vector<64x256xf32>
    %2 = tpu.matmul %0, %1, %cst {dimension_numbers = #tpu.dot_dimension_numbers<[1], [0], [0], [1], [0, 0, 1, 1], [], []>} : vector<64x16xf32>, vector<16x256xf32>, vector<64x256xf32> -> vector<64x256xf32>
    %3 = vector.extract_strided_slice %0 {offsets = [56, 0], sizes = [8, 16], strides = [1, 1]} : vector<64x16xf32> to vector<8x16xf32>
    %4 = vector.extract_strided_slice %0 {offsets = [48, 0], sizes = [8, 16], strides = [1, 1]} : vector<64x16xf32> to vector<8x16xf32>
    %5 = vector.extract_strided_slice %0 {offsets = [40, 0], sizes = [8, 16], strides = [1, 1]} : vector<64x16xf32> to vector<8x16xf32>
    %6 = vector.extract_strided_slice %0 {offsets = [32, 0], sizes = [8, 16], strides = [1, 1]} : vector<64x16xf32> to vector<8x16xf32>
    %7 = vector.extract_strided_slice %0 {offsets = [24, 0], sizes = [8, 16], strides = [1, 1]} : vector<64x16xf32> to vector<8x16xf32>
    %8 = vector.extract_strided_slice %0 {offsets = [16, 0], sizes = [8, 16], strides = [1, 1]} : vector<64x16xf32> to vector<8x16xf32>
    %9 = vector.extract_strided_slice %0 {offsets = [8, 0], sizes = [8, 16], strides = [1, 1]} : vector<64x16xf32> to vector<8x16xf32>
    %10 = vector.extract_strided_slice %0 {offsets = [0, 0], sizes = [8, 16], strides = [1, 1]} : vector<64x16xf32> to vector<8x16xf32>
    %11 = tpu.concatenate %3, %4, %5, %6, %7, %8, %9, %10 in 0 : vector<8x16xf32>, vector<8x16xf32>, vector<8x16xf32>, vector<8x16xf32>, vector<8x16xf32>, vector<8x16xf32>, vector<8x16xf32>, vector<8x16xf32> -> vector<64x16xf32>
    %c0_3 = arith.constant 0 : index
    %c0_4 = arith.constant 0 : index
    %12 = vector.load %arg2[%c0_3, %c0_4] : memref<16x256xf32, #tpu.memory_space<vmem>>, vector<16x256xf32>
    %cst_5 = arith.constant dense<0.000000e+00> : vector<64x256xf32>
    %13 = tpu.matmul %11, %12, %cst_5 {dimension_numbers = #tpu.dot_dimension_numbers<[1], [0], [0], [1], [0, 0, 1, 1], [], []>} : vector<64x16xf32>, vector<16x256xf32>, vector<64x256xf32> -> vector<64x256xf32>
    %14 = arith.addf %2, %13 : vector<64x256xf32>
    %c0_6 = arith.constant 0 : index
    %c0_7 = arith.constant 0 : index
    %15 = vector.load %arg3[%c0_6, %c0_7] : memref<1x256xf32, #tpu.memory_space<vmem>>, vector<1x256xf32>
    %16 = vector.broadcast %15 : vector<1x256xf32> to vector<64x256xf32>
    %17 = arith.addf %14, %16 : vector<64x256xf32>
    %c0_8 = arith.constant 0 : index
    %c0_9 = arith.constant 0 : index
    %18 = vector.load %arg14[%c0_8, %c0_9] : memref<64x256xf32, #tpu.memory_space<vmem>>, vector<64x256xf32>
    tpu.vector_store %arg14[%c0_8, %c0_9], %17 {strides = array<i32>} : memref<64x256xf32, #tpu.memory_space<vmem>>, vector<64x256xf32>,
    %c0_10 = arith.constant 0 : index
    %c0_11 = arith.constant 0 : index
    %19 = vector.load %arg4[%c0_10, %c0_11] : memref<64x256xf32, #tpu.memory_space<vmem>>, vector<64x256xf32>
    %cst_12 = arith.constant 0.000000e+00 : f32
    %20 = vector.broadcast %cst_12 : f32 to vector<8x64xf32>
    %cst_13 = arith.constant 0.000000e+00 : f32
    %21 = vector.broadcast %cst_13 : f32 to vector<8x64xf32>
    %c0_14 = arith.constant 0 : index
    %c0_15 = arith.constant 0 : index
    %22 = vector.load %arg14[%c0_14, %c0_15] : memref<64x256xf32, #tpu.memory_space<vmem>>, vector<8x256xf32>
    %cst_16 = arith.constant dense<0.000000e+00> : vector<8x256xf32>
    %23 = tpu.matmul %20, %19, %cst_16 {dimension_numbers = #tpu.dot_dimension_numbers<[1], [0], [0], [1], [0, 0, 1, 1], [], []>} : vector<8x64xf32>, vector<64x256xf32>, vector<8x256xf32> -> vector<8x256xf32>
    %24 = arith.addf %22, %23 : vector<8x256xf32>
    %25 = vector.extract_strided_slice %24 {offsets = [0, 0], sizes = [8, 192], strides = [1, 1]} : vector<8x256xf32> to vector<8x192xf32>
    %26 = arith.negf %25 : vector<8x192xf32>
    %27 = math.exp %26 : vector<8x192xf32>
    %cst_17 = arith.constant 1.000000e+00 : f32
    %28 = vector.broadcast %cst_17 : f32 to vector<8x192xf32>
    %29 = arith.addf %28, %27 : vector<8x192xf32>
    %30 = arith.divf %28, %29 : vector<8x192xf32>
    %31 = vector.extract_strided_slice %24 {offsets = [0, 192], sizes = [8, 64], strides = [1, 1]} : vector<8x256xf32> to vector<8x64xf32>
    %32 = math.tanh %31 : vector<8x64xf32>
    %33 = vector.extract_strided_slice %30 {offsets = [0, 0], sizes = [8, 64], strides = [1, 1]} : vector<8x192xf32> to vector<8x64xf32>
    %34 = vector.extract_strided_slice %30 {offsets = [0, 64], sizes = [8, 64], strides = [1, 1]} : vector<8x192xf32> to vector<8x64xf32>
    %35 = vector.extract_strided_slice %30 {offsets = [0, 128], sizes = [8, 64], strides = [1, 1]} : vector<8x192xf32> to vector<8x64xf32>
    %36 = arith.mulf %34, %21 : vector<8x64xf32>
    %37 = arith.mulf %33, %32 : vector<8x64xf32>
    %38 = arith.addf %36, %37 : vector<8x64xf32>
    %39 = math.tanh %38 : vector<8x64xf32>
    %40 = arith.mulf %35, %39 : vector<8x64xf32>
    %c0_18 = arith.constant 0 : index
    %c0_19 = arith.constant 0 : index
    %41 = vector.load %arg15[%c0_18, %c0_19] : memref<64x64xf32, #tpu.memory_space<vmem>>, vector<8x64xf32>
    tpu.vector_store %arg15[%c0_18, %c0_19], %40 {strides = array<i32>} : memref<64x64xf32, #tpu.memory_space<vmem>>, vector<8x64xf32>,
    %c8 = arith.constant 8 : index
    %c0_20 = arith.constant 0 : index
    %42 = vector.load %arg14[%c8, %c0_20] : memref<64x256xf32, #tpu.memory_space<vmem>>, vector<8x256xf32>
    %cst_21 = arith.constant dense<0.000000e+00> : vector<8x256xf32>
    %43 = tpu.matmul %40, %19, %cst_21 {dimension_numbers = #tpu.dot_dimension_numbers<[1], [0], [0], [1], [0, 0, 1, 1], [], []>} : vector<8x64xf32>, vector<64x256xf32>, vector<8x256xf32> -> vector<8x256xf32>
    %44 = arith.addf %42, %43 : vector<8x256xf32>
    %45 = vector.extract_strided_slice %44 {offsets = [0, 0], sizes = [8, 192], strides = [1, 1]} : vector<8x256xf32> to vector<8x192xf32>
    %46 = arith.negf %45 : vector<8x192xf32>
    %47 = math.exp %46 : vector<8x192xf32>
    %cst_22 = arith.constant 1.000000e+00 : f32
    %48 = vector.broadcast %cst_22 : f32 to vector<8x192xf32>
    %49 = arith.addf %48, %47 : vector<8x192xf32>
    %50 = arith.divf %48, %49 : vector<8x192xf32>
    %51 = vector.extract_strided_slice %44 {offsets = [0, 192], sizes = [8, 64], strides = [1, 1]} : vector<8x256xf32> to vector<8x64xf32>
    %52 = math.tanh %51 : vector<8x64xf32>
    %53 = vector.extract_strided_slice %50 {offsets = [0, 0], sizes = [8, 64], strides = [1, 1]} : vector<8x192xf32> to vector<8x64xf32>
    %54 = vector.extract_strided_slice %50 {offsets = [0, 64], sizes = [8, 64], strides = [1, 1]} : vector<8x192xf32> to vector<8x64xf32>
    %55 = vector.extract_strided_slice %50 {offsets = [0, 128], sizes = [8, 64], strides = [1, 1]} : vector<8x192xf32> to vector<8x64xf32>
    %56 = arith.mulf %54, %38 : vector<8x64xf32>
    %57 = arith.mulf %53, %52 : vector<8x64xf32>
    %58 = arith.addf %56, %57 : vector<8x64xf32>
    %59 = math.tanh %58 : vector<8x64xf32>
    %60 = arith.mulf %55, %59 : vector<8x64xf32>
    %c8_23 = arith.constant 8 : index
    %c0_24 = arith.constant 0 : index
    %61 = vector.load %arg15[%c8_23, %c0_24] : memref<64x64xf32, #tpu.memory_space<vmem>>, vector<8x64xf32>
    tpu.vector_store %arg15[%c8_23, %c0_24], %60 {strides = array<i32>} : memref<64x64xf32, #tpu.memory_space<vmem>>, vector<8x64xf32>,
    %c16 = arith.constant 16 : index
    %c0_25 = arith.constant 0 : index
    %62 = vector.load %arg14[%c16, %c0_25] : memref<64x256xf32, #tpu.memory_space<vmem>>, vector<8x256xf32>
    %cst_26 = arith.constant dense<0.000000e+00> : vector<8x256xf32>
    %63 = tpu.matmul %60, %19, %cst_26 {dimension_numbers = #tpu.dot_dimension_numbers<[1], [0], [0], [1], [0, 0, 1, 1], [], []>} : vector<8x64xf32>, vector<64x256xf32>, vector<8x256xf32> -> vector<8x256xf32>
    %64 = arith.addf %62, %63 : vector<8x256xf32>
    %65 = vector.extract_strided_slice %64 {offsets = [0, 0], sizes = [8, 192], strides = [1, 1]} : vector<8x256xf32> to vector<8x192xf32>
    %66 = arith.negf %65 : vector<8x192xf32>
    %67 = math.exp %66 : vector<8x192xf32>
    %cst_27 = arith.constant 1.000000e+00 : f32
    %68 = vector.broadcast %cst_27 : f32 to vector<8x192xf32>
    %69 = arith.addf %68, %67 : vector<8x192xf32>
    %70 = arith.divf %68, %69 : vector<8x192xf32>
    %71 = vector.extract_strided_slice %64 {offsets = [0, 192], sizes = [8, 64], strides = [1, 1]} : vector<8x256xf32> to vector<8x64xf32>
    %72 = math.tanh %71 : vector<8x64xf32>
    %73 = vector.extract_strided_slice %70 {offsets = [0, 0], sizes = [8, 64], strides = [1, 1]} : vector<8x192xf32> to vector<8x64xf32>
    %74 = vector.extract_strided_slice %70 {offsets = [0, 64], sizes = [8, 64], strides = [1, 1]} : vector<8x192xf32> to vector<8x64xf32>
    %75 = vector.extract_strided_slice %70 {offsets = [0, 128], sizes = [8, 64], strides = [1, 1]} : vector<8x192xf32> to vector<8x64xf32>
    %76 = arith.mulf %74, %58 : vector<8x64xf32>
    %77 = arith.mulf %73, %72 : vector<8x64xf32>
    %78 = arith.addf %76, %77 : vector<8x64xf32>
    %79 = math.tanh %78 : vector<8x64xf32>
    %80 = arith.mulf %75, %79 : vector<8x64xf32>
    %c16_28 = arith.constant 16 : index
    %c0_29 = arith.constant 0 : index
    %81 = vector.load %arg15[%c16_28, %c0_29] : memref<64x64xf32, #tpu.memory_space<vmem>>, vector<8x64xf32>
    tpu.vector_store %arg15[%c16_28, %c0_29], %80 {strides = array<i32>} : memref<64x64xf32, #tpu.memory_space<vmem>>, vector<8x64xf32>,
    %c24 = arith.constant 24 : index
    %c0_30 = arith.constant 0 : index
    %82 = vector.load %arg14[%c24, %c0_30] : memref<64x256xf32, #tpu.memory_space<vmem>>, vector<8x256xf32>
    %cst_31 = arith.constant dense<0.000000e+00> : vector<8x256xf32>
    %83 = tpu.matmul %80, %19, %cst_31 {dimension_numbers = #tpu.dot_dimension_numbers<[1], [0], [0], [1], [0, 0, 1, 1], [], []>} : vector<8x64xf32>, vector<64x256xf32>, vector<8x256xf32> -> vector<8x256xf32>
    %84 = arith.addf %82, %83 : vector<8x256xf32>
    %85 = vector.extract_strided_slice %84 {offsets = [0, 0], sizes = [8, 192], strides = [1, 1]} : vector<8x256xf32> to vector<8x192xf32>
    %86 = arith.negf %85 : vector<8x192xf32>
    %87 = math.exp %86 : vector<8x192xf32>
    %cst_32 = arith.constant 1.000000e+00 : f32
    %88 = vector.broadcast %cst_32 : f32 to vector<8x192xf32>
    %89 = arith.addf %88, %87 : vector<8x192xf32>
    %90 = arith.divf %88, %89 : vector<8x192xf32>
    %91 = vector.extract_strided_slice %84 {offsets = [0, 192], sizes = [8, 64], strides = [1, 1]} : vector<8x256xf32> to vector<8x64xf32>
    %92 = math.tanh %91 : vector<8x64xf32>
    %93 = vector.extract_strided_slice %90 {offsets = [0, 0], sizes = [8, 64], strides = [1, 1]} : vector<8x192xf32> to vector<8x64xf32>
    %94 = vector.extract_strided_slice %90 {offsets = [0, 64], sizes = [8, 64], strides = [1, 1]} : vector<8x192xf32> to vector<8x64xf32>
    %95 = vector.extract_strided_slice %90 {offsets = [0, 128], sizes = [8, 64], strides = [1, 1]} : vector<8x192xf32> to vector<8x64xf32>
    %96 = arith.mulf %94, %78 : vector<8x64xf32>
    %97 = arith.mulf %93, %92 : vector<8x64xf32>
    %98 = arith.addf %96, %97 : vector<8x64xf32>
    %99 = math.tanh %98 : vector<8x64xf32>
    %100 = arith.mulf %95, %99 : vector<8x64xf32>
    %c24_33 = arith.constant 24 : index
    %c0_34 = arith.constant 0 : index
    %101 = vector.load %arg15[%c24_33, %c0_34] : memref<64x64xf32, #tpu.memory_space<vmem>>, vector<8x64xf32>
    tpu.vector_store %arg15[%c24_33, %c0_34], %100 {strides = array<i32>} : memref<64x64xf32, #tpu.memory_space<vmem>>, vector<8x64xf32>,
    %c32 = arith.constant 32 : index
    %c0_35 = arith.constant 0 : index
    %102 = vector.load %arg14[%c32, %c0_35] : memref<64x256xf32, #tpu.memory_space<vmem>>, vector<8x256xf32>
    %cst_36 = arith.constant dense<0.000000e+00> : vector<8x256xf32>
    %103 = tpu.matmul %100, %19, %cst_36 {dimension_numbers = #tpu.dot_dimension_numbers<[1], [0], [0], [1], [0, 0, 1, 1], [], []>} : vector<8x64xf32>, vector<64x256xf32>, vector<8x256xf32> -> vector<8x256xf32>
    %104 = arith.addf %102, %103 : vector<8x256xf32>
    %105 = vector.extract_strided_slice %104 {offsets = [0, 0], sizes = [8, 192], strides = [1, 1]} : vector<8x256xf32> to vector<8x192xf32>
    %106 = arith.negf %105 : vector<8x192xf32>
    %107 = math.exp %106 : vector<8x192xf32>
    %cst_37 = arith.constant 1.000000e+00 : f32
    %108 = vector.broadcast %cst_37 : f32 to vector<8x192xf32>
    %109 = arith.addf %108, %107 : vector<8x192xf32>
    %110 = arith.divf %108, %109 : vector<8x192xf32>
    %111 = vector.extract_strided_slice %104 {offsets = [0, 192], sizes = [8, 64], strides = [1, 1]} : vector<8x256xf32> to vector<8x64xf32>
    %112 = math.tanh %111 : vector<8x64xf32>
    %113 = vector.extract_strided_slice %110 {offsets = [0, 0], sizes = [8, 64], strides = [1, 1]} : vector<8x192xf32> to vector<8x64xf32>
    %114 = vector.extract_strided_slice %110 {offsets = [0, 64], sizes = [8, 64], strides = [1, 1]} : vector<8x192xf32> to vector<8x64xf32>
    %115 = vector.extract_strided_slice %110 {offsets = [0, 128], sizes = [8, 64], strides = [1, 1]} : vector<8x192xf32> to vector<8x64xf32>
    %116 = arith.mulf %114, %98 : vector<8x64xf32>
    %117 = arith.mulf %113, %112 : vector<8x64xf32>
    %118 = arith.addf %116, %117 : vector<8x64xf32>
    %119 = math.tanh %118 : vector<8x64xf32>
    %120 = arith.mulf %115, %119 : vector<8x64xf32>
    %c32_38 = arith.constant 32 : index
    %c0_39 = arith.constant 0 : index
    %121 = vector.load %arg15[%c32_38, %c0_39] : memref<64x64xf32, #tpu.memory_space<vmem>>, vector<8x64xf32>
    tpu.vector_store %arg15[%c32_38, %c0_39], %120 {strides = array<i32>} : memref<64x64xf32, #tpu.memory_space<vmem>>, vector<8x64xf32>,
    %c40 = arith.constant 40 : index
    %c0_40 = arith.constant 0 : index
    %122 = vector.load %arg14[%c40, %c0_40] : memref<64x256xf32, #tpu.memory_space<vmem>>, vector<8x256xf32>
    %cst_41 = arith.constant dense<0.000000e+00> : vector<8x256xf32>
    %123 = tpu.matmul %120, %19, %cst_41 {dimension_numbers = #tpu.dot_dimension_numbers<[1], [0], [0], [1], [0, 0, 1, 1], [], []>} : vector<8x64xf32>, vector<64x256xf32>, vector<8x256xf32> -> vector<8x256xf32>
    %124 = arith.addf %122, %123 : vector<8x256xf32>
    %125 = vector.extract_strided_slice %124 {offsets = [0, 0], sizes = [8, 192], strides = [1, 1]} : vector<8x256xf32> to vector<8x192xf32>
    %126 = arith.negf %125 : vector<8x192xf32>
    %127 = math.exp %126 : vector<8x192xf32>
    %cst_42 = arith.constant 1.000000e+00 : f32
    %128 = vector.broadcast %cst_42 : f32 to vector<8x192xf32>
    %129 = arith.addf %128, %127 : vector<8x192xf32>
    %130 = arith.divf %128, %129 : vector<8x192xf32>
    %131 = vector.extract_strided_slice %124 {offsets = [0, 192], sizes = [8, 64], strides = [1, 1]} : vector<8x256xf32> to vector<8x64xf32>
    %132 = math.tanh %131 : vector<8x64xf32>
    %133 = vector.extract_strided_slice %130 {offsets = [0, 0], sizes = [8, 64], strides = [1, 1]} : vector<8x192xf32> to vector<8x64xf32>
    %134 = vector.extract_strided_slice %130 {offsets = [0, 64], sizes = [8, 64], strides = [1, 1]} : vector<8x192xf32> to vector<8x64xf32>
    %135 = vector.extract_strided_slice %130 {offsets = [0, 128], sizes = [8, 64], strides = [1, 1]} : vector<8x192xf32> to vector<8x64xf32>
    %136 = arith.mulf %134, %118 : vector<8x64xf32>
    %137 = arith.mulf %133, %132 : vector<8x64xf32>
    %138 = arith.addf %136, %137 : vector<8x64xf32>
    %139 = math.tanh %138 : vector<8x64xf32>
    %140 = arith.mulf %135, %139 : vector<8x64xf32>
    %c40_43 = arith.constant 40 : index
    %c0_44 = arith.constant 0 : index
    %141 = vector.load %arg15[%c40_43, %c0_44] : memref<64x64xf32, #tpu.memory_space<vmem>>, vector<8x64xf32>
    tpu.vector_store %arg15[%c40_43, %c0_44], %140 {strides = array<i32>} : memref<64x64xf32, #tpu.memory_space<vmem>>, vector<8x64xf32>,
    %c48 = arith.constant 48 : index
    %c0_45 = arith.constant 0 : index
    %142 = vector.load %arg14[%c48, %c0_45] : memref<64x256xf32, #tpu.memory_space<vmem>>, vector<8x256xf32>
    %cst_46 = arith.constant dense<0.000000e+00> : vector<8x256xf32>
    %143 = tpu.matmul %140, %19, %cst_46 {dimension_numbers = #tpu.dot_dimension_numbers<[1], [0], [0], [1], [0, 0, 1, 1], [], []>} : vector<8x64xf32>, vector<64x256xf32>, vector<8x256xf32> -> vector<8x256xf32>
    %144 = arith.addf %142, %143 : vector<8x256xf32>
    %145 = vector.extract_strided_slice %144 {offsets = [0, 0], sizes = [8, 192], strides = [1, 1]} : vector<8x256xf32> to vector<8x192xf32>
    %146 = arith.negf %145 : vector<8x192xf32>
    %147 = math.exp %146 : vector<8x192xf32>
    %cst_47 = arith.constant 1.000000e+00 : f32
    %148 = vector.broadcast %cst_47 : f32 to vector<8x192xf32>
    %149 = arith.addf %148, %147 : vector<8x192xf32>
    %150 = arith.divf %148, %149 : vector<8x192xf32>
    %151 = vector.extract_strided_slice %144 {offsets = [0, 192], sizes = [8, 64], strides = [1, 1]} : vector<8x256xf32> to vector<8x64xf32>
    %152 = math.tanh %151 : vector<8x64xf32>
    %153 = vector.extract_strided_slice %150 {offsets = [0, 0], sizes = [8, 64], strides = [1, 1]} : vector<8x192xf32> to vector<8x64xf32>
    %154 = vector.extract_strided_slice %150 {offsets = [0, 64], sizes = [8, 64], strides = [1, 1]} : vector<8x192xf32> to vector<8x64xf32>
    %155 = vector.extract_strided_slice %150 {offsets = [0, 128], sizes = [8, 64], strides = [1, 1]} : vector<8x192xf32> to vector<8x64xf32>
    %156 = arith.mulf %154, %138 : vector<8x64xf32>
    %157 = arith.mulf %153, %152 : vector<8x64xf32>
    %158 = arith.addf %156, %157 : vector<8x64xf32>
    %159 = math.tanh %158 : vector<8x64xf32>
    %160 = arith.mulf %155, %159 : vector<8x64xf32>
    %c48_48 = arith.constant 48 : index
    %c0_49 = arith.constant 0 : index
    %161 = vector.load %arg15[%c48_48, %c0_49] : memref<64x64xf32, #tpu.memory_space<vmem>>, vector<8x64xf32>
    tpu.vector_store %arg15[%c48_48, %c0_49], %160 {strides = array<i32>} : memref<64x64xf32, #tpu.memory_space<vmem>>, vector<8x64xf32>,
    %c56 = arith.constant 56 : index
    %c0_50 = arith.constant 0 : index
    %162 = vector.load %arg14[%c56, %c0_50] : memref<64x256xf32, #tpu.memory_space<vmem>>, vector<8x256xf32>
    %cst_51 = arith.constant dense<0.000000e+00> : vector<8x256xf32>
    %163 = tpu.matmul %160, %19, %cst_51 {dimension_numbers = #tpu.dot_dimension_numbers<[1], [0], [0], [1], [0, 0, 1, 1], [], []>} : vector<8x64xf32>, vector<64x256xf32>, vector<8x256xf32> -> vector<8x256xf32>
    %164 = arith.addf %162, %163 : vector<8x256xf32>
    %165 = vector.extract_strided_slice %164 {offsets = [0, 0], sizes = [8, 192], strides = [1, 1]} : vector<8x256xf32> to vector<8x192xf32>
    %166 = arith.negf %165 : vector<8x192xf32>
    %167 = math.exp %166 : vector<8x192xf32>
    %cst_52 = arith.constant 1.000000e+00 : f32
    %168 = vector.broadcast %cst_52 : f32 to vector<8x192xf32>
    %169 = arith.addf %168, %167 : vector<8x192xf32>
    %170 = arith.divf %168, %169 : vector<8x192xf32>
    %171 = vector.extract_strided_slice %164 {offsets = [0, 192], sizes = [8, 64], strides = [1, 1]} : vector<8x256xf32> to vector<8x64xf32>
    %172 = math.tanh %171 : vector<8x64xf32>
    %173 = vector.extract_strided_slice %170 {offsets = [0, 0], sizes = [8, 64], strides = [1, 1]} : vector<8x192xf32> to vector<8x64xf32>
    %174 = vector.extract_strided_slice %170 {offsets = [0, 64], sizes = [8, 64], strides = [1, 1]} : vector<8x192xf32> to vector<8x64xf32>
    %175 = vector.extract_strided_slice %170 {offsets = [0, 128], sizes = [8, 64], strides = [1, 1]} : vector<8x192xf32> to vector<8x64xf32>
    %176 = arith.mulf %174, %158 : vector<8x64xf32>
    %177 = arith.mulf %173, %172 : vector<8x64xf32>
    %178 = arith.addf %176, %177 : vector<8x64xf32>
    %179 = math.tanh %178 : vector<8x64xf32>
    %180 = arith.mulf %175, %179 : vector<8x64xf32>
    %c56_53 = arith.constant 56 : index
    %c0_54 = arith.constant 0 : index
    %181 = vector.load %arg15[%c56_53, %c0_54] : memref<64x64xf32, #tpu.memory_space<vmem>>, vector<8x64xf32>
    tpu.vector_store %arg15[%c56_53, %c0_54], %180 {strides = array<i32>} : memref<64x64xf32, #tpu.memory_space<vmem>>, vector<8x64xf32>,
    %c0_55 = arith.constant 0 : index
    %c0_56 = arith.constant 0 : index
    %182 = vector.load %arg15[%c0_55, %c0_56] : memref<64x64xf32, #tpu.memory_space<vmem>>, vector<64x64xf32>
    %c0_57 = arith.constant 0 : index
    %c0_58 = arith.constant 0 : index
    %183 = vector.load %arg5[%c0_57, %c0_58] : memref<64x256xf32, #tpu.memory_space<vmem>>, vector<64x256xf32>
    %cst_59 = arith.constant dense<0.000000e+00> : vector<64x256xf32>
    %184 = tpu.matmul %182, %183, %cst_59 {dimension_numbers = #tpu.dot_dimension_numbers<[1], [0], [0], [1], [0, 0, 1, 1], [], []>} : vector<64x64xf32>, vector<64x256xf32>, vector<64x256xf32> -> vector<64x256xf32>
    %185 = vector.extract_strided_slice %182 {offsets = [56, 0], sizes = [8, 64], strides = [1, 1]} : vector<64x64xf32> to vector<8x64xf32>
    %186 = vector.extract_strided_slice %182 {offsets = [48, 0], sizes = [8, 64], strides = [1, 1]} : vector<64x64xf32> to vector<8x64xf32>
    %187 = vector.extract_strided_slice %182 {offsets = [40, 0], sizes = [8, 64], strides = [1, 1]} : vector<64x64xf32> to vector<8x64xf32>
    %188 = vector.extract_strided_slice %182 {offsets = [32, 0], sizes = [8, 64], strides = [1, 1]} : vector<64x64xf32> to vector<8x64xf32>
    %189 = vector.extract_strided_slice %182 {offsets = [24, 0], sizes = [8, 64], strides = [1, 1]} : vector<64x64xf32> to vector<8x64xf32>
    %190 = vector.extract_strided_slice %182 {offsets = [16, 0], sizes = [8, 64], strides = [1, 1]} : vector<64x64xf32> to vector<8x64xf32>
    %191 = vector.extract_strided_slice %182 {offsets = [8, 0], sizes = [8, 64], strides = [1, 1]} : vector<64x64xf32> to vector<8x64xf32>
    %192 = vector.extract_strided_slice %182 {offsets = [0, 0], sizes = [8, 64], strides = [1, 1]} : vector<64x64xf32> to vector<8x64xf32>
    %193 = tpu.concatenate %185, %186, %187, %188, %189, %190, %191, %192 in 0 : vector<8x64xf32>, vector<8x64xf32>, vector<8x64xf32>, vector<8x64xf32>, vector<8x64xf32>, vector<8x64xf32>, vector<8x64xf32>, vector<8x64xf32> -> vector<64x64xf32>
    %c0_60 = arith.constant 0 : index
    %c0_61 = arith.constant 0 : index
    %194 = vector.load %arg6[%c0_60, %c0_61] : memref<64x256xf32, #tpu.memory_space<vmem>>, vector<64x256xf32>
    %cst_62 = arith.constant dense<0.000000e+00> : vector<64x256xf32>
    %195 = tpu.matmul %193, %194, %cst_62 {dimension_numbers = #tpu.dot_dimension_numbers<[1], [0], [0], [1], [0, 0, 1, 1], [], []>} : vector<64x64xf32>, vector<64x256xf32>, vector<64x256xf32> -> vector<64x256xf32>
    %196 = arith.addf %184, %195 : vector<64x256xf32>
    %c0_63 = arith.constant 0 : index
    %c0_64 = arith.constant 0 : index
    %197 = vector.load %arg7[%c0_63, %c0_64] : memref<1x256xf32, #tpu.memory_space<vmem>>, vector<1x256xf32>
    %198 = vector.broadcast %197 : vector<1x256xf32> to vector<64x256xf32>
    %199 = arith.addf %196, %198 : vector<64x256xf32>
    %c0_65 = arith.constant 0 : index
    %c0_66 = arith.constant 0 : index
    %200 = vector.load %arg14[%c0_65, %c0_66] : memref<64x256xf32, #tpu.memory_space<vmem>>, vector<64x256xf32>
    tpu.vector_store %arg14[%c0_65, %c0_66], %199 {strides = array<i32>} : memref<64x256xf32, #tpu.memory_space<vmem>>, vector<64x256xf32>,
    %c0_67 = arith.constant 0 : index
    %c0_68 = arith.constant 0 : index
    %201 = vector.load %arg8[%c0_67, %c0_68] : memref<64x256xf32, #tpu.memory_space<vmem>>, vector<64x256xf32>
    %cst_69 = arith.constant 0.000000e+00 : f32
    %202 = vector.broadcast %cst_69 : f32 to vector<8x64xf32>
    %cst_70 = arith.constant 0.000000e+00 : f32
    %203 = vector.broadcast %cst_70 : f32 to vector<8x64xf32>
    %c0_71 = arith.constant 0 : index
    %c0_72 = arith.constant 0 : index
    %204 = vector.load %arg14[%c0_71, %c0_72] : memref<64x256xf32, #tpu.memory_space<vmem>>, vector<8x256xf32>
    %cst_73 = arith.constant dense<0.000000e+00> : vector<8x256xf32>
    %205 = tpu.matmul %202, %201, %cst_73 {dimension_numbers = #tpu.dot_dimension_numbers<[1], [0], [0], [1], [0, 0, 1, 1], [], []>} : vector<8x64xf32>, vector<64x256xf32>, vector<8x256xf32> -> vector<8x256xf32>
    %206 = arith.addf %204, %205 : vector<8x256xf32>
    %207 = vector.extract_strided_slice %206 {offsets = [0, 0], sizes = [8, 192], strides = [1, 1]} : vector<8x256xf32> to vector<8x192xf32>
    %208 = arith.negf %207 : vector<8x192xf32>
    %209 = math.exp %208 : vector<8x192xf32>
    %cst_74 = arith.constant 1.000000e+00 : f32
    %210 = vector.broadcast %cst_74 : f32 to vector<8x192xf32>
    %211 = arith.addf %210, %209 : vector<8x192xf32>
    %212 = arith.divf %210, %211 : vector<8x192xf32>
    %213 = vector.extract_strided_slice %206 {offsets = [0, 192], sizes = [8, 64], strides = [1, 1]} : vector<8x256xf32> to vector<8x64xf32>
    %214 = math.tanh %213 : vector<8x64xf32>
    %215 = vector.extract_strided_slice %212 {offsets = [0, 0], sizes = [8, 64], strides = [1, 1]} : vector<8x192xf32> to vector<8x64xf32>
    %216 = vector.extract_strided_slice %212 {offsets = [0, 64], sizes = [8, 64], strides = [1, 1]} : vector<8x192xf32> to vector<8x64xf32>
    %217 = vector.extract_strided_slice %212 {offsets = [0, 128], sizes = [8, 64], strides = [1, 1]} : vector<8x192xf32> to vector<8x64xf32>
    %218 = arith.mulf %216, %203 : vector<8x64xf32>
    %219 = arith.mulf %215, %214 : vector<8x64xf32>
    %220 = arith.addf %218, %219 : vector<8x64xf32>
    %221 = math.tanh %220 : vector<8x64xf32>
    %222 = arith.mulf %217, %221 : vector<8x64xf32>
    %c8_75 = arith.constant 8 : index
    %c0_76 = arith.constant 0 : index
    %223 = vector.load %arg14[%c8_75, %c0_76] : memref<64x256xf32, #tpu.memory_space<vmem>>, vector<8x256xf32>
    %cst_77 = arith.constant dense<0.000000e+00> : vector<8x256xf32>
    %224 = tpu.matmul %222, %201, %cst_77 {dimension_numbers = #tpu.dot_dimension_numbers<[1], [0], [0], [1], [0, 0, 1, 1], [], []>} : vector<8x64xf32>, vector<64x256xf32>, vector<8x256xf32> -> vector<8x256xf32>
    %225 = arith.addf %223, %224 : vector<8x256xf32>
    %226 = vector.extract_strided_slice %225 {offsets = [0, 0], sizes = [8, 192], strides = [1, 1]} : vector<8x256xf32> to vector<8x192xf32>
    %227 = arith.negf %226 : vector<8x192xf32>
    %228 = math.exp %227 : vector<8x192xf32>
    %cst_78 = arith.constant 1.000000e+00 : f32
    %229 = vector.broadcast %cst_78 : f32 to vector<8x192xf32>
    %230 = arith.addf %229, %228 : vector<8x192xf32>
    %231 = arith.divf %229, %230 : vector<8x192xf32>
    %232 = vector.extract_strided_slice %225 {offsets = [0, 192], sizes = [8, 64], strides = [1, 1]} : vector<8x256xf32> to vector<8x64xf32>
    %233 = math.tanh %232 : vector<8x64xf32>
    %234 = vector.extract_strided_slice %231 {offsets = [0, 0], sizes = [8, 64], strides = [1, 1]} : vector<8x192xf32> to vector<8x64xf32>
    %235 = vector.extract_strided_slice %231 {offsets = [0, 64], sizes = [8, 64], strides = [1, 1]} : vector<8x192xf32> to vector<8x64xf32>
    %236 = vector.extract_strided_slice %231 {offsets = [0, 128], sizes = [8, 64], strides = [1, 1]} : vector<8x192xf32> to vector<8x64xf32>
    %237 = arith.mulf %235, %220 : vector<8x64xf32>
    %238 = arith.mulf %234, %233 : vector<8x64xf32>
    %239 = arith.addf %237, %238 : vector<8x64xf32>
    %240 = math.tanh %239 : vector<8x64xf32>
    %241 = arith.mulf %236, %240 : vector<8x64xf32>
    %c16_79 = arith.constant 16 : index
    %c0_80 = arith.constant 0 : index
    %242 = vector.load %arg14[%c16_79, %c0_80] : memref<64x256xf32, #tpu.memory_space<vmem>>, vector<8x256xf32>
    %cst_81 = arith.constant dense<0.000000e+00> : vector<8x256xf32>
    %243 = tpu.matmul %241, %201, %cst_81 {dimension_numbers = #tpu.dot_dimension_numbers<[1], [0], [0], [1], [0, 0, 1, 1], [], []>} : vector<8x64xf32>, vector<64x256xf32>, vector<8x256xf32> -> vector<8x256xf32>
    %244 = arith.addf %242, %243 : vector<8x256xf32>
    %245 = vector.extract_strided_slice %244 {offsets = [0, 0], sizes = [8, 192], strides = [1, 1]} : vector<8x256xf32> to vector<8x192xf32>
    %246 = arith.negf %245 : vector<8x192xf32>
    %247 = math.exp %246 : vector<8x192xf32>
    %cst_82 = arith.constant 1.000000e+00 : f32
    %248 = vector.broadcast %cst_82 : f32 to vector<8x192xf32>
    %249 = arith.addf %248, %247 : vector<8x192xf32>
    %250 = arith.divf %248, %249 : vector<8x192xf32>
    %251 = vector.extract_strided_slice %244 {offsets = [0, 192], sizes = [8, 64], strides = [1, 1]} : vector<8x256xf32> to vector<8x64xf32>
    %252 = math.tanh %251 : vector<8x64xf32>
    %253 = vector.extract_strided_slice %250 {offsets = [0, 0], sizes = [8, 64], strides = [1, 1]} : vector<8x192xf32> to vector<8x64xf32>
    %254 = vector.extract_strided_slice %250 {offsets = [0, 64], sizes = [8, 64], strides = [1, 1]} : vector<8x192xf32> to vector<8x64xf32>
    %255 = vector.extract_strided_slice %250 {offsets = [0, 128], sizes = [8, 64], strides = [1, 1]} : vector<8x192xf32> to vector<8x64xf32>
    %256 = arith.mulf %254, %239 : vector<8x64xf32>
    %257 = arith.mulf %253, %252 : vector<8x64xf32>
    %258 = arith.addf %256, %257 : vector<8x64xf32>
    %259 = math.tanh %258 : vector<8x64xf32>
    %260 = arith.mulf %255, %259 : vector<8x64xf32>
    %c24_83 = arith.constant 24 : index
    %c0_84 = arith.constant 0 : index
    %261 = vector.load %arg14[%c24_83, %c0_84] : memref<64x256xf32, #tpu.memory_space<vmem>>, vector<8x256xf32>
    %cst_85 = arith.constant dense<0.000000e+00> : vector<8x256xf32>
    %262 = tpu.matmul %260, %201, %cst_85 {dimension_numbers = #tpu.dot_dimension_numbers<[1], [0], [0], [1], [0, 0, 1, 1], [], []>} : vector<8x64xf32>, vector<64x256xf32>, vector<8x256xf32> -> vector<8x256xf32>
    %263 = arith.addf %261, %262 : vector<8x256xf32>
    %264 = vector.extract_strided_slice %263 {offsets = [0, 0], sizes = [8, 192], strides = [1, 1]} : vector<8x256xf32> to vector<8x192xf32>
    %265 = arith.negf %264 : vector<8x192xf32>
    %266 = math.exp %265 : vector<8x192xf32>
    %cst_86 = arith.constant 1.000000e+00 : f32
    %267 = vector.broadcast %cst_86 : f32 to vector<8x192xf32>
    %268 = arith.addf %267, %266 : vector<8x192xf32>
    %269 = arith.divf %267, %268 : vector<8x192xf32>
    %270 = vector.extract_strided_slice %263 {offsets = [0, 192], sizes = [8, 64], strides = [1, 1]} : vector<8x256xf32> to vector<8x64xf32>
    %271 = math.tanh %270 : vector<8x64xf32>
    %272 = vector.extract_strided_slice %269 {offsets = [0, 0], sizes = [8, 64], strides = [1, 1]} : vector<8x192xf32> to vector<8x64xf32>
    %273 = vector.extract_strided_slice %269 {offsets = [0, 64], sizes = [8, 64], strides = [1, 1]} : vector<8x192xf32> to vector<8x64xf32>
    %274 = vector.extract_strided_slice %269 {offsets = [0, 128], sizes = [8, 64], strides = [1, 1]} : vector<8x192xf32> to vector<8x64xf32>
    %275 = arith.mulf %273, %258 : vector<8x64xf32>
    %276 = arith.mulf %272, %271 : vector<8x64xf32>
    %277 = arith.addf %275, %276 : vector<8x64xf32>
    %278 = math.tanh %277 : vector<8x64xf32>
    %279 = arith.mulf %274, %278 : vector<8x64xf32>
    %c32_87 = arith.constant 32 : index
    %c0_88 = arith.constant 0 : index
    %280 = vector.load %arg14[%c32_87, %c0_88] : memref<64x256xf32, #tpu.memory_space<vmem>>, vector<8x256xf32>
    %cst_89 = arith.constant dense<0.000000e+00> : vector<8x256xf32>
    %281 = tpu.matmul %279, %201, %cst_89 {dimension_numbers = #tpu.dot_dimension_numbers<[1], [0], [0], [1], [0, 0, 1, 1], [], []>} : vector<8x64xf32>, vector<64x256xf32>, vector<8x256xf32> -> vector<8x256xf32>
    %282 = arith.addf %280, %281 : vector<8x256xf32>
    %283 = vector.extract_strided_slice %282 {offsets = [0, 0], sizes = [8, 192], strides = [1, 1]} : vector<8x256xf32> to vector<8x192xf32>
    %284 = arith.negf %283 : vector<8x192xf32>
    %285 = math.exp %284 : vector<8x192xf32>
    %cst_90 = arith.constant 1.000000e+00 : f32
    %286 = vector.broadcast %cst_90 : f32 to vector<8x192xf32>
    %287 = arith.addf %286, %285 : vector<8x192xf32>
    %288 = arith.divf %286, %287 : vector<8x192xf32>
    %289 = vector.extract_strided_slice %282 {offsets = [0, 192], sizes = [8, 64], strides = [1, 1]} : vector<8x256xf32> to vector<8x64xf32>
    %290 = math.tanh %289 : vector<8x64xf32>
    %291 = vector.extract_strided_slice %288 {offsets = [0, 0], sizes = [8, 64], strides = [1, 1]} : vector<8x192xf32> to vector<8x64xf32>
    %292 = vector.extract_strided_slice %288 {offsets = [0, 64], sizes = [8, 64], strides = [1, 1]} : vector<8x192xf32> to vector<8x64xf32>
    %293 = vector.extract_strided_slice %288 {offsets = [0, 128], sizes = [8, 64], strides = [1, 1]} : vector<8x192xf32> to vector<8x64xf32>
    %294 = arith.mulf %292, %277 : vector<8x64xf32>
    %295 = arith.mulf %291, %290 : vector<8x64xf32>
    %296 = arith.addf %294, %295 : vector<8x64xf32>
    %297 = math.tanh %296 : vector<8x64xf32>
    %298 = arith.mulf %293, %297 : vector<8x64xf32>
    %c40_91 = arith.constant 40 : index
    %c0_92 = arith.constant 0 : index
    %299 = vector.load %arg14[%c40_91, %c0_92] : memref<64x256xf32, #tpu.memory_space<vmem>>, vector<8x256xf32>
    %cst_93 = arith.constant dense<0.000000e+00> : vector<8x256xf32>
    %300 = tpu.matmul %298, %201, %cst_93 {dimension_numbers = #tpu.dot_dimension_numbers<[1], [0], [0], [1], [0, 0, 1, 1], [], []>} : vector<8x64xf32>, vector<64x256xf32>, vector<8x256xf32> -> vector<8x256xf32>
    %301 = arith.addf %299, %300 : vector<8x256xf32>
    %302 = vector.extract_strided_slice %301 {offsets = [0, 0], sizes = [8, 192], strides = [1, 1]} : vector<8x256xf32> to vector<8x192xf32>
    %303 = arith.negf %302 : vector<8x192xf32>
    %304 = math.exp %303 : vector<8x192xf32>
    %cst_94 = arith.constant 1.000000e+00 : f32
    %305 = vector.broadcast %cst_94 : f32 to vector<8x192xf32>
    %306 = arith.addf %305, %304 : vector<8x192xf32>
    %307 = arith.divf %305, %306 : vector<8x192xf32>
    %308 = vector.extract_strided_slice %301 {offsets = [0, 192], sizes = [8, 64], strides = [1, 1]} : vector<8x256xf32> to vector<8x64xf32>
    %309 = math.tanh %308 : vector<8x64xf32>
    %310 = vector.extract_strided_slice %307 {offsets = [0, 0], sizes = [8, 64], strides = [1, 1]} : vector<8x192xf32> to vector<8x64xf32>
    %311 = vector.extract_strided_slice %307 {offsets = [0, 64], sizes = [8, 64], strides = [1, 1]} : vector<8x192xf32> to vector<8x64xf32>
    %312 = vector.extract_strided_slice %307 {offsets = [0, 128], sizes = [8, 64], strides = [1, 1]} : vector<8x192xf32> to vector<8x64xf32>
    %313 = arith.mulf %311, %296 : vector<8x64xf32>
    %314 = arith.mulf %310, %309 : vector<8x64xf32>
    %315 = arith.addf %313, %314 : vector<8x64xf32>
    %316 = math.tanh %315 : vector<8x64xf32>
    %317 = arith.mulf %312, %316 : vector<8x64xf32>
    %c48_95 = arith.constant 48 : index
    %c0_96 = arith.constant 0 : index
    %318 = vector.load %arg14[%c48_95, %c0_96] : memref<64x256xf32, #tpu.memory_space<vmem>>, vector<8x256xf32>
    %cst_97 = arith.constant dense<0.000000e+00> : vector<8x256xf32>
    %319 = tpu.matmul %317, %201, %cst_97 {dimension_numbers = #tpu.dot_dimension_numbers<[1], [0], [0], [1], [0, 0, 1, 1], [], []>} : vector<8x64xf32>, vector<64x256xf32>, vector<8x256xf32> -> vector<8x256xf32>
    %320 = arith.addf %318, %319 : vector<8x256xf32>
    %321 = vector.extract_strided_slice %320 {offsets = [0, 0], sizes = [8, 192], strides = [1, 1]} : vector<8x256xf32> to vector<8x192xf32>
    %322 = arith.negf %321 : vector<8x192xf32>
    %323 = math.exp %322 : vector<8x192xf32>
    %cst_98 = arith.constant 1.000000e+00 : f32
    %324 = vector.broadcast %cst_98 : f32 to vector<8x192xf32>
    %325 = arith.addf %324, %323 : vector<8x192xf32>
    %326 = arith.divf %324, %325 : vector<8x192xf32>
    %327 = vector.extract_strided_slice %320 {offsets = [0, 192], sizes = [8, 64], strides = [1, 1]} : vector<8x256xf32> to vector<8x64xf32>
    %328 = math.tanh %327 : vector<8x64xf32>
    %329 = vector.extract_strided_slice %326 {offsets = [0, 0], sizes = [8, 64], strides = [1, 1]} : vector<8x192xf32> to vector<8x64xf32>
    %330 = vector.extract_strided_slice %326 {offsets = [0, 64], sizes = [8, 64], strides = [1, 1]} : vector<8x192xf32> to vector<8x64xf32>
    %331 = vector.extract_strided_slice %326 {offsets = [0, 128], sizes = [8, 64], strides = [1, 1]} : vector<8x192xf32> to vector<8x64xf32>
    %332 = arith.mulf %330, %315 : vector<8x64xf32>
    %333 = arith.mulf %329, %328 : vector<8x64xf32>
    %334 = arith.addf %332, %333 : vector<8x64xf32>
    %335 = math.tanh %334 : vector<8x64xf32>
    %336 = arith.mulf %331, %335 : vector<8x64xf32>
    %c56_99 = arith.constant 56 : index
    %c0_100 = arith.constant 0 : index
    %337 = vector.load %arg14[%c56_99, %c0_100] : memref<64x256xf32, #tpu.memory_space<vmem>>, vector<8x256xf32>
    %cst_101 = arith.constant dense<0.000000e+00> : vector<8x256xf32>
    %338 = tpu.matmul %336, %201, %cst_101 {dimension_numbers = #tpu.dot_dimension_numbers<[1], [0], [0], [1], [0, 0, 1, 1], [], []>} : vector<8x64xf32>, vector<64x256xf32>, vector<8x256xf32> -> vector<8x256xf32>
    %339 = arith.addf %337, %338 : vector<8x256xf32>
    %340 = vector.extract_strided_slice %339 {offsets = [0, 0], sizes = [8, 192], strides = [1, 1]} : vector<8x256xf32> to vector<8x192xf32>
    %341 = arith.negf %340 : vector<8x192xf32>
    %342 = math.exp %341 : vector<8x192xf32>
    %cst_102 = arith.constant 1.000000e+00 : f32
    %343 = vector.broadcast %cst_102 : f32 to vector<8x192xf32>
    %344 = arith.addf %343, %342 : vector<8x192xf32>
    %345 = arith.divf %343, %344 : vector<8x192xf32>
    %346 = vector.extract_strided_slice %339 {offsets = [0, 192], sizes = [8, 64], strides = [1, 1]} : vector<8x256xf32> to vector<8x64xf32>
    %347 = math.tanh %346 : vector<8x64xf32>
    %348 = vector.extract_strided_slice %345 {offsets = [0, 0], sizes = [8, 64], strides = [1, 1]} : vector<8x192xf32> to vector<8x64xf32>
    %349 = vector.extract_strided_slice %345 {offsets = [0, 64], sizes = [8, 64], strides = [1, 1]} : vector<8x192xf32> to vector<8x64xf32>
    %350 = vector.extract_strided_slice %345 {offsets = [0, 128], sizes = [8, 64], strides = [1, 1]} : vector<8x192xf32> to vector<8x64xf32>
    %351 = arith.mulf %349, %334 : vector<8x64xf32>
    %352 = arith.mulf %348, %347 : vector<8x64xf32>
    %353 = arith.addf %351, %352 : vector<8x64xf32>
    %354 = math.tanh %353 : vector<8x64xf32>
    %355 = arith.mulf %350, %354 : vector<8x64xf32>
    %c0_103 = arith.constant 0 : index
    %c0_104 = arith.constant 0 : index
    %356 = vector.load %arg9[%c0_103, %c0_104] : memref<64x32xf32, #tpu.memory_space<vmem>>, vector<64x32xf32>
    %cst_105 = arith.constant dense<0.000000e+00> : vector<8x32xf32>
    %357 = tpu.matmul %355, %356, %cst_105 {dimension_numbers = #tpu.dot_dimension_numbers<[1], [0], [0], [1], [0, 0, 1, 1], [], []>} : vector<8x64xf32>, vector<64x32xf32>, vector<8x32xf32> -> vector<8x32xf32>
    %c0_106 = arith.constant 0 : index
    %c0_107 = arith.constant 0 : index
    %358 = vector.load %arg10[%c0_106, %c0_107] : memref<1x32xf32, #tpu.memory_space<vmem>>, vector<1x32xf32>
    %359 = vector.broadcast %358 : vector<1x32xf32> to vector<8x32xf32>
    %360 = arith.addf %357, %359 : vector<8x32xf32>
    %cst_108 = arith.constant 0.000000e+00 : f32
    %361 = vector.broadcast %cst_108 : f32 to vector<8x32xf32>
    %362 = arith.maximumf %360, %361 : vector<8x32xf32>
    %c0_109 = arith.constant 0 : index
    %c0_110 = arith.constant 0 : index
    %363 = vector.load %arg11[%c0_109, %c0_110] : memref<32x1xf32, #tpu.memory_space<vmem>>, vector<32x1xf32>
    %cst_111 = arith.constant dense<0.000000e+00> : vector<8x1xf32>
    %364 = tpu.matmul %362, %363, %cst_111 {dimension_numbers = #tpu.dot_dimension_numbers<[1], [0], [0], [1], [0, 0, 1, 1], [], []>} : vector<8x32xf32>, vector<32x1xf32>, vector<8x1xf32> -> vector<8x1xf32>
    %c0_112 = arith.constant 0 : index
    %c0_113 = arith.constant 0 : index
    %365 = vector.load %arg12[%c0_112, %c0_113] : memref<1x1xf32, #tpu.memory_space<vmem>>, vector<1x1xf32>
    %366 = vector.broadcast %365 : vector<1x1xf32> to vector<8x1xf32>
    %367 = arith.addf %364, %366 : vector<8x1xf32>
    %c0_114 = arith.constant 0 : index
    %c0_115 = arith.constant 0 : index
    %368 = vector.load %arg13[%c0_114, %c0_115] : memref<8x1xf32, #tpu.memory_space<vmem>>, vector<8x1xf32>
    tpu.vector_store %arg13[%c0_114, %c0_115], %367 {strides = array<i32>} : memref<8x1xf32, #tpu.memory_space<vmem>>, vector<8x1xf32>,
    return
  }
}

</mosaic_0001>

<llo_original>
// kernel: lstm_baseline_forward.1
$region0: #{lstm_baseline_forward.1}
  #allocation0 [shape = 'u32[]', space=smem, size = 0x4, offset = 0x4, fixed_abs, tag = 'smem constant byte address 0x4 - core index']
  #allocation1 [shape = 'u32[144,128]{1,0:T(1,128)}', space=vmem, size = 0x12000, scoped, tag = 'internal scratch']
  #allocation2 [shape = 'f32[64,256]{1,0:T(8,128)}', space=vmem, size = 0x10000, scoped, tag = 'scratch operand']
  #allocation3 [shape = 'f32[64,64]{1,0:T(8,128)}', space=vmem, size = 0x8000, scoped, tag = 'scratch operand']
  #allocation4 [shape = 'f32[1,1]{1,0:T(1,128)S(1)}', space=vmem, size = 0x200, scoped, tag = 'scoped memory for lstm_baseline_forward.1']
  %s0 = inlined_call_operand.vmem [shape: f32[64,16], index: 0, kind: input, shape index: {}]
  %s1 = inlined_call_operand.hbm [shape: f32[16,256], index: 1, kind: input, shape index: {}]
  %s2 = inlined_call_operand.vmem [shape: f32[16,256], index: 2, kind: input, shape index: {}]
  %s3 = inlined_call_operand.vmem [shape: f32[1,256], index: 3, kind: input, shape index: {}]
  %s4 = inlined_call_operand.vmem [shape: f32[64,256], index: 4, kind: input, shape index: {}]
  %s5 = inlined_call_operand.hbm [shape: f32[64,256], index: 5, kind: input, shape index: {}]
  %s6 = inlined_call_operand.hbm [shape: f32[64,256], index: 6, kind: input, shape index: {}]
  %s7 = inlined_call_operand.hbm [shape: f32[1,256], index: 7, kind: input, shape index: {}]
  %s8 = inlined_call_operand.hbm [shape: f32[64,256], index: 8, kind: input, shape index: {}]
  %s9 = inlined_call_operand.vmem [shape: f32[64,32], index: 9, kind: input, shape index: {}]
  %s10 = inlined_call_operand.hbm [shape: f32[1,32], index: 10, kind: input, shape index: {}]
  %s11 = inlined_call_operand.hbm [shape: f32[32,1], index: 11, kind: input, shape index: {}]
  %s12 = inlined_call_operand.<no memory space> [shape: f32[1,1], index: 12, kind: input, shape index: {}]
  %s13 = inlined_call_operand.vmem [shape: f32[8,1], index: 13, kind: output, shape index: {}]
  %s14 = sld [smem:[#allocation0]]
  $region90: #{lstm_baseline_forward.1} parent=0
    _
  %s16 = ssub.s32 1, %s14
  %s17 = scalar_select 0, %s16, %s14
  %v18 = vstv %s12
  %19 = vst [vmem:[#allocation4] sm:$0x1] %v18
  $region1: #{lstm_baseline_forward.1} parent=0
    #allocation5 [shape = 'u8[16384]{0}', space=vmem, size = 0x4000, scoped, tag = 'input window, operand 1, single buffered']
    #allocation6 [shape = 's32[1]{0}', space=sflag, size = 0x4, scoped, tag = 'scoped memory for lstm_baseline_forward.1']
    #allocation7 [shape = 'u8[65536]{0}', space=vmem, size = 0x10000, scoped, tag = 'input window, operand 5, single buffered']
    #allocation8 [shape = 's32[1]{0}', space=sflag, size = 0x4, scoped, tag = 'scoped memory for lstm_baseline_forward.1']
    #allocation9 [shape = 'u8[65536]{0}', space=vmem, size = 0x10000, scoped, tag = 'input window, operand 6, single buffered']
    #allocation10 [shape = 'u8[1024]{0}', space=vmem, size = 0x400, scoped, tag = 'input window, operand 7, single buffered']
    #allocation11 [shape = 's32[1]{0}', space=sflag, size = 0x4, scoped, tag = 'scoped memory for lstm_baseline_forward.1']
    #allocation12 [shape = 'u8[65536]{0}', space=vmem, size = 0x10000, scoped, tag = 'input window, operand 8, single buffered']
    #allocation13 [shape = 'u8[512]{0}', space=vmem, size = 0x400, scoped, tag = 'input window, operand 10, single buffered']
    #allocation14 [shape = 's32[1]{0}', space=sflag, size = 0x4, scoped, tag = 'scoped memory for lstm_baseline_forward.1']
    #allocation15 [shape = 'u8[16384]{0}', space=vmem, size = 0x4000, scoped, tag = 'input window, operand 11, single buffered']
    %20 = vsyncpa [#allocation6], 0
    %21 = vsyncpa [#allocation8], 0
    %22 = vsyncpa [#allocation11], 0
    %23 = vsyncpa [#allocation14], 0
    // Predicated region
    $region2: #{lstm_baseline_forward.1} parent=1 // pred_check
      _
    $region3: #{lstm_baseline_forward.1} parent=1 // pred_check_branch
      %25 = sbr.rel (0) target = $region5
    $region4: #{lstm_baseline_forward.1} parent=1 // pred_region
      _
    $region5: #{lstm_baseline_forward.1} parent=1 // pred_fallthru
      _
    // Predicated region
    $region6: #{lstm_baseline_forward.1} parent=1 // pred_check
      _
    $region7: #{lstm_baseline_forward.1} parent=1 // pred_check_branch
      %27 = sbr.rel (0) target = $region9
    $region8: #{lstm_baseline_forward.1} parent=1 // pred_region
      %s29 = ssub.s32 512, 512
      %30 = vsyncadd [#allocation6], %s29
      %s31 = sshll.u32 [#allocation5], 4
      %s32 = int_to_ptr.vmem [resolvable:$true] %s31
      %37 = dma.hbm_to_vmem [thread:$0]  %s1, 512, %s32, [#allocation6], 256, 256, 16
    $region9: #{lstm_baseline_forward.1} parent=1 // pred_fallthru
      _
    // Predicated region
    $region10: #{lstm_baseline_forward.1} parent=1 // pred_check
      _
    $region11: #{lstm_baseline_forward.1} parent=1 // pred_check_branch
      %39 = sbr.rel (0) target = $region13
    $region12: #{lstm_baseline_forward.1} parent=1 // pred_region
      _
    $region13: #{lstm_baseline_forward.1} parent=1 // pred_fallthru
      _
    // Predicated region
    $region14: #{lstm_baseline_forward.1} parent=1 // pred_check
      _
    $region15: #{lstm_baseline_forward.1} parent=1 // pred_check_branch
      %41 = sbr.rel (0) target = $region17
    $region16: #{lstm_baseline_forward.1} parent=1 // pred_region
      _
    $region17: #{lstm_baseline_forward.1} parent=1 // pred_fallthru
      _
    // Predicated region
    $region18: #{lstm_baseline_forward.1} parent=1 // pred_check
      _
    $region19: #{lstm_baseline_forward.1} parent=1 // pred_check_branch
      %43 = sbr.rel (0) target = $region21
    $region20: #{lstm_baseline_forward.1} parent=1 // pred_region
      _
    $region21: #{lstm_baseline_forward.1} parent=1 // pred_fallthru
      _
    // Predicated region
    $region22: #{lstm_baseline_forward.1} parent=1 // pred_check
      _
    $region23: #{lstm_baseline_forward.1} parent=1 // pred_check_branch
      %45 = sbr.rel (0) target = $region25
    $region24: #{lstm_baseline_forward.1} parent=1 // pred_region
      %s47 = ssub.s32 2048, 2048
      %48 = vsyncadd [#allocation8], %s47
      %s49 = sshll.u32 [#allocation7], 4
      %s50 = int_to_ptr.vmem [resolvable:$true] %s49
      %55 = dma.hbm_to_vmem [thread:$0]  %s5, 2048, %s50, [#allocation8], 256, 256, 16
    $region25: #{lstm_baseline_forward.1} parent=1 // pred_fallthru
      _
    // Predicated region
    $region26: #{lstm_baseline_forward.1} parent=1 // pred_check
      _
    $region27: #{lstm_baseline_forward.1} parent=1 // pred_check_branch
      %57 = sbr.rel (0) target = $region29
    $region28: #{lstm_baseline_forward.1} parent=1 // pred_region
      %s59 = ssub.s32 2048, 2048
      %60 = vsyncadd [#allocation8], %s59
      %s61 = sshll.u32 [#allocation9], 4
      %s62 = int_to_ptr.vmem [resolvable:$true] %s61
      %67 = dma.hbm_to_vmem [thread:$0]  %s6, 2048, %s62, [#allocation8], 256, 256, 16
    $region29: #{lstm_baseline_forward.1} parent=1 // pred_fallthru
      _
    // Predicated region
    $region30: #{lstm_baseline_forward.1} parent=1 // pred_check
      _
    $region31: #{lstm_baseline_forward.1} parent=1 // pred_check_branch
      %69 = sbr.rel (0) target = $region33
    $region32: #{lstm_baseline_forward.1} parent=1 // pred_region
      %s71 = ssub.s32 32, 32
      %72 = vsyncadd [#allocation11], %s71
      %s74 = sshll.u32 [#allocation10], 4
      %s75 = int_to_ptr.vmem [resolvable:$true] %s74
      %77 = dma.hbm_to_vmem [thread:$0]  %s7, 32, %s75, [#allocation11]
    $region33: #{lstm_baseline_forward.1} parent=1 // pred_fallthru
      _
    // Predicated region
    $region34: #{lstm_baseline_forward.1} parent=1 // pred_check
      _
    $region35: #{lstm_baseline_forward.1} parent=1 // pred_check_branch
      %79 = sbr.rel (0) target = $region37
    $region36: #{lstm_baseline_forward.1} parent=1 // pred_region
      %s81 = ssub.s32 2048, 2048
      %82 = vsyncadd [#allocation11], %s81
      %s83 = sshll.u32 [#allocation12], 4
      %s84 = int_to_ptr.vmem [resolvable:$true] %s83
      %89 = dma.hbm_to_vmem [thread:$0]  %s8, 2048, %s84, [#allocation11], 256, 256, 16
    $region37: #{lstm_baseline_forward.1} parent=1 // pred_fallthru
      _
    // Predicated region
    $region38: #{lstm_baseline_forward.1} parent=1 // pred_check
      _
    $region39: #{lstm_baseline_forward.1} parent=1 // pred_check_branch
      %91 = sbr.rel (0) target = $region41
    $region40: #{lstm_baseline_forward.1} parent=1 // pred_region
      _
    $region41: #{lstm_baseline_forward.1} parent=1 // pred_fallthru
      _
    // Predicated region
    $region42: #{lstm_baseline_forward.1} parent=1 // pred_check
      _
    $region43: #{lstm_baseline_forward.1} parent=1 // pred_check_branch
      %93 = sbr.rel (0) target = $region45
    $region44: #{lstm_baseline_forward.1} parent=1 // pred_region
      %s95 = ssub.s32 16, 16
      %96 = vsyncadd [#allocation14], %s95
      %s98 = sshll.u32 [#allocation13], 4
      %s99 = int_to_ptr.vmem [resolvable:$true] %s98
      %101 = dma.hbm_to_vmem [thread:$0]  %s10, 16, %s99, [#allocation14]
    $region45: #{lstm_baseline_forward.1} parent=1 // pred_fallthru
      _
    // Predicated region
    $region46: #{lstm_baseline_forward.1} parent=1 // pred_check
      _
    $region47: #{lstm_baseline_forward.1} parent=1 // pred_check_branch
      %103 = sbr.rel (0) target = $region49
    $region48: #{lstm_baseline_forward.1} parent=1 // pred_region
      %s105 = ssub.s32 512, 512
      %106 = vsyncadd [#allocation14], %s105
      %s107 = sshll.u32 [#allocation15], 4
      %s108 = int_to_ptr.vmem [resolvable:$true] %s107
      %113 = dma.hbm_to_vmem [thread:$0]  %s11, 512, %s108, [#allocation14], 128, 128, 8
    $region49: #{lstm_baseline_forward.1} parent=1 // pred_fallthru
      _
    // Predicated region
    $region50: #{lstm_baseline_forward.1} parent=1 // pred_check
      _
    $region51: #{lstm_baseline_forward.1} parent=1 // pred_check_branch
      %115 = sbr.rel (0) target = $region53
    $region52: #{lstm_baseline_forward.1} parent=1 // pred_region
      _
    $region53: #{lstm_baseline_forward.1} parent=1 // pred_fallthru
      _
    // Predicated region
    $region54: #{lstm_baseline_forward.1} parent=1 // pred_check
      _
    $region55: #{lstm_baseline_forward.1} parent=1 // pred_check_branch
      %117 = sbr.rel (0) target = $region57
    $region56: #{lstm_baseline_forward.1} parent=1 // pred_region
      %118 = dma.done [#allocation6], 512
    $region57: #{lstm_baseline_forward.1} parent=1 // pred_fallthru
      _
    // Predicated region
    $region58: #{lstm_baseline_forward.1} parent=1 // pred_check
      _
    $region59: #{lstm_baseline_forward.1} parent=1 // pred_check_branch
      %120 = sbr.rel (0) target = $region61
    $region60: #{lstm_baseline_forward.1} parent=1 // pred_region
      %121 = dma.done [#allocation8], 2048
    $region61: #{lstm_baseline_forward.1} parent=1 // pred_fallthru
      _
    // Predicated region
    $region62: #{lstm_baseline_forward.1} parent=1 // pred_check
      _
    $region63: #{lstm_baseline_forward.1} parent=1 // pred_check_branch
      %123 = sbr.rel (0) target = $region65
    $region64: #{lstm_baseline_forward.1} parent=1 // pred_region
      %124 = dma.done [#allocation8], 2048
    $region65: #{lstm_baseline_forward.1} parent=1 // pred_fallthru
      _
    // Predicated region
    $region66: #{lstm_baseline_forward.1} parent=1 // pred_check
      _
    $region67: #{lstm_baseline_forward.1} parent=1 // pred_check_branch
      %126 = sbr.rel (0) target = $region69
    $region68: #{lstm_baseline_forward.1} parent=1 // pred_region
      %127 = dma.done [#allocation11], 32
    $region69: #{lstm_baseline_forward.1} parent=1 // pred_fallthru
      _
    // Predicated region
    $region70: #{lstm_baseline_forward.1} parent=1 // pred_check
      _
    $region71: #{lstm_baseline_forward.1} parent=1 // pred_check_branch
      %129 = sbr.rel (0) target = $region73
    $region72: #{lstm_baseline_forward.1} parent=1 // pred_region
      %130 = dma.done [#allocation11], 2048
    $region73: #{lstm_baseline_forward.1} parent=1 // pred_fallthru
      _
    // Predicated region
    $region74: #{lstm_baseline_forward.1} parent=1 // pred_check
      _
    $region75: #{lstm_baseline_forward.1} parent=1 // pred_check_branch
      %132 = sbr.rel (0) target = $region77
    $region76: #{lstm_baseline_forward.1} parent=1 // pred_region
      %133 = dma.done [#allocation14], 16
    $region77: #{lstm_baseline_forward.1} parent=1 // pred_fallthru
      _
    // Predicated region
    $region78: #{lstm_baseline_forward.1} parent=1 // pred_check
      _
    $region79: #{lstm_baseline_forward.1} parent=1 // pred_check_branch
      %135 = sbr.rel (0) target = $region81
    $region80: #{lstm_baseline_forward.1} parent=1 // pred_region
      %136 = dma.done [#allocation14], 512
    $region81: #{lstm_baseline_forward.1} parent=1 // pred_fallthru
      _
    %v137 = vld [vmem:[%s0] sm:$0xff]
    %v138 = vld [vmem:[%s0 + $0x8] sm:$0xff]
    %v139 = vld [vmem:[%s0 + $0x10] sm:$0xff]
    %v140 = vld [vmem:[%s0 + $0x18] sm:$0xff]
    %v141 = vld [vmem:[%s0 + $0x20] sm:$0xff]
    %v142 = vld [vmem:[%s0 + $0x28] sm:$0xff]
    %v143 = vld [vmem:[%s0 + $0x30] sm:$0xff]
    %v144 = vld [vmem:[%s0 + $0x38] sm:$0xff]
    %v145 = vld [vmem:[#allocation5] sm:$0xff]
    %v146 = vld [vmem:[#allocation5 + $0x8] sm:$0xff]
    %v147 = vld [vmem:[#allocation5 + $0x10] sm:$0xff]
    %v148 = vld [vmem:[#allocation5 + $0x18] sm:$0xff]
    %v149 = vld [vmem:[%s2] sm:$0xff]
    %v150 = vld [vmem:[%s2 + $0x8] sm:$0xff]
    %v151 = vld [vmem:[%s2 + $0x10] sm:$0xff]
    %v152 = vld [vmem:[%s2 + $0x18] sm:$0xff]
    %vm153 = vcmask 130048
    %v155 = vsel %vm153, %v144, 0
    %v158 = vsel %vm153, %v143, 0
    %v161 = vsel %vm153, %v142, 0
    %v164 = vsel %vm153, %v141, 0
    %v167 = vsel %vm153, %v140, 0
    %v170 = vsel %vm153, %v139, 0
    %v173 = vsel %vm153, %v138, 0
    %v176 = vsel %vm153, %v137, 0
    %178 = vmatprep.subr.mxu0 0.0
    %179 = vmatpush1.msra.mxu0 0.0
    %180 = vmatprep.subr.mxu0 0.0
    %181 = vmatpush1.msra.mxu0 0.0
    %182 = vmatprep.subr.mxu0 0.0
    %183 = vmatpush1.msra.mxu0 0.0
    %184 = vmatprep.subr.mxu0 0.0
    %185 = vmatpush1.msra.mxu0 0.0
    %186 = vmatprep.subr.mxu0 0.0
    %187 = vmatpush1.msra.mxu0 0.0
    %188 = vmatprep.subr.mxu0 0.0
    %189 = vmatpush1.msra.mxu0 0.0
    %190 = vmatprep.subr.mxu0 0.0
    %191 = vmatpush1.msra.mxu0 0.0
    %192 = vmatprep.subr.mxu0 0.0
    %193 = vmatpush1.msra.mxu0 0.0
    %194 = vmatprep.subr.mxu0 0.0
    %195 = vmatpush1.msra.mxu0 0.0
    %196 = vmatprep.subr.mxu0 0.0
    %197 = vmatpush1.msra.mxu0 0.0
    %198 = vmatprep.subr.mxu0 0.0
    %199 = vmatpush1.msra.mxu0 0.0
    %200 = vmatprep.subr.mxu0 0.0
    %201 = vmatpush1.msra.mxu0 0.0
    %202 = vmatprep.subr.mxu0 0.0
    %203 = vmatpush1.msra.mxu0 0.0
    %204 = vmatprep.subr.mxu0 0.0
    %205 = vmatpush1.msra.mxu0 0.0
    %206 = vmatprep.subr.mxu0 %v152
    %207 = vmatpush1.msra.mxu0 %v151
    %208 = vmatprep.subr.mxu0 %v150
    %209 = vmatpush1.msra.mxu0 %v149
    %210 = vmatprep.subr.mxu0 0.0
    %211 = vmatpush2.msra.mxu0 0.0
    %212 = vmatprep.subr.mxu0 0.0
    %213 = vmatpush2.msra.mxu0 0.0
    %214 = vmatprep.subr.mxu0 0.0
    %215 = vmatpush2.msra.mxu0 0.0
    %216 = vmatprep.subr.mxu0 0.0
    %217 = vmatpush2.msra.mxu0 0.0
    %218 = vmatprep.subr.mxu0 0.0
    %219 = vmatpush2.msra.mxu0 0.0
    %220 = vmatprep.subr.mxu0 0.0
    %221 = vmatpush2.msra.mxu0 0.0
    %222 = vmatprep.subr.mxu0 0.0
    %223 = vmatpush2.msra.mxu0 0.0
    %224 = vmatprep.subr.mxu0 0.0
    %225 = vmatpush2.msra.mxu0 0.0
    %226 = vmatprep.subr.mxu0 0.0
    %227 = vmatpush2.msra.mxu0 0.0
    %228 = vmatprep.subr.mxu0 0.0
    %229 = vmatpush2.msra.mxu0 0.0
    %230 = vmatprep.subr.mxu0 0.0
    %231 = vmatpush2.msra.mxu0 0.0
    %232 = vmatprep.subr.mxu0 0.0
    %233 = vmatpush2.msra.mxu0 0.0
    %234 = vmatprep.subr.mxu0 0.0
    %235 = vmatpush2.msra.mxu0 0.0
    %236 = vmatprep.subr.mxu0 0.0
    %237 = vmatpush2.msra.mxu0 0.0
    %238 = vmatprep.subr.mxu0 0.0
    %239 = vmatpush2.msra.mxu0 0.0
    %240 = vmatprep.subr.mxu0 0.0
    %241 = vmatpush2.msra.mxu0 0.0
    %242 = vmatprep.mubr.f32.mxu0 0.0
    %243 = vmatmul.mubr.f32.gmra.mxu0 %v155
    %v244 = vpop.f32.mrf.mxu0
    %v245 = vadd.f32 0.0, %v244
    %v246 = vpop.f32.mrf.mxu0
    %v247 = vadd.f32 0.0, %v246
    %248 = vmatprep.mubr.f32.mxu0 0.0
    %249 = vmatmul.mubr.f32.gmra.mxu0 %v158
    %v250 = vpop.f32.mrf.mxu0
    %v251 = vadd.f32 0.0, %v250
    %v252 = vpop.f32.mrf.mxu0
    %v253 = vadd.f32 0.0, %v252
    %254 = vmatprep.mubr.f32.mxu0 0.0
    %255 = vmatmul.mubr.f32.gmra.mxu0 %v161
    %v256 = vpop.f32.mrf.mxu0
    %v257 = vadd.f32 0.0, %v256
    %v258 = vpop.f32.mrf.mxu0
    %v259 = vadd.f32 0.0, %v258
    %260 = vmatprep.mubr.f32.mxu0 0.0
    %261 = vmatmul.mubr.f32.gmra.mxu0 %v164
    %v262 = vpop.f32.mrf.mxu0
    %v263 = vadd.f32 0.0, %v262
    %v264 = vpop.f32.mrf.mxu0
    %v265 = vadd.f32 0.0, %v264
    %266 = vmatprep.mubr.f32.mxu0 0.0
    %267 = vmatmul.mubr.f32.gmra.mxu0 %v167
    %v268 = vpop.f32.mrf.mxu0
    %v269 = vadd.f32 0.0, %v268
    %v270 = vpop.f32.mrf.mxu0
    %v271 = vadd.f32 0.0, %v270
    %272 = vmatprep.mubr.f32.mxu0 0.0
    %273 = vmatmul.mubr.f32.gmra.mxu0 %v170
    %v274 = vpop.f32.mrf.mxu0
    %v275 = vadd.f32 0.0, %v274
    %v276 = vpop.f32.mrf.mxu0
    %v277 = vadd.f32 0.0, %v276
    %278 = vmatprep.mubr.f32.mxu0 0.0
    %279 = vmatmul.mubr.f32.gmra.mxu0 %v173
    %v280 = vpop.f32.mrf.mxu0
    %v281 = vadd.f32 0.0, %v280
    %v282 = vpop.f32.mrf.mxu0
    %v283 = vadd.f32 0.0, %v282
    %284 = vmatprep.mubr.f32.mxu0 0.0
    %285 = vmatmul.mubr.f32.gmra.mxu0 %v176
    %v286 = vpop.f32.mrf.mxu0
    %v287 = vadd.f32 0.0, %v286
    %v288 = vpop.f32.mrf.mxu0
    %v289 = vadd.f32 0.0, %v288
    %290 = vdwg.mxu0
    %291 = vmatprep.subr.mxu0 0.0
    %292 = vmatpush1.msra.mxu0 0.0
    %293 = vmatprep.subr.mxu0 0.0
    %294 = vmatpush1.msra.mxu0 0.0
    %295 = vmatprep.subr.mxu0 0.0
    %296 = vmatpush1.msra.mxu0 0.0
    %297 = vmatprep.subr.mxu0 0.0
    %298 = vmatpush1.msra.mxu0 0.0
    %299 = vmatprep.subr.mxu0 0.0
    %300 = vmatpush1.msra.mxu0 0.0
    %301 = vmatprep.subr.mxu0 0.0
    %302 = vmatpush1.msra.mxu0 0.0
    %303 = vmatprep.subr.mxu0 0.0
    %304 = vmatpush1.msra.mxu0 0.0
    %305 = vmatprep.subr.mxu0 0.0
    %306 = vmatpush1.msra.mxu0 0.0
    %307 = vmatprep.subr.mxu0 0.0
    %308 = vmatpush1.msra.mxu0 0.0
    %309 = vmatprep.subr.mxu0 0.0
    %310 = vmatpush1.msra.mxu0 0.0
    %311 = vmatprep.subr.mxu0 0.0
    %312 = vmatpush1.msra.mxu0 0.0
    %313 = vmatprep.subr.mxu0 0.0
    %314 = vmatpush1.msra.mxu0 0.0
    %315 = vmatprep.subr.mxu0 0.0
    %316 = vmatpush1.msra.mxu0 0.0
    %317 = vmatprep.subr.mxu0 0.0
    %318 = vmatpush1.msra.mxu0 0.0
    %319 = vmatprep.subr.mxu0 %v148
    %320 = vmatpush1.msra.mxu0 %v147
    %321 = vmatprep.subr.mxu0 %v146
    %322 = vmatpush1.msra.mxu0 %v145
    %323 = vmatprep.subr.mxu0 0.0
    %324 = vmatpush2.msra.mxu0 0.0
    %325 = vmatprep.subr.mxu0 0.0
    %326 = vmatpush2.msra.mxu0 0.0
    %327 = vmatprep.subr.mxu0 0.0
    %328 = vmatpush2.msra.mxu0 0.0
    %329 = vmatprep.subr.mxu0 0.0
    %330 = vmatpush2.msra.mxu0 0.0
    %331 = vmatprep.subr.mxu0 0.0
    %332 = vmatpush2.msra.mxu0 0.0
    %333 = vmatprep.subr.mxu0 0.0
    %334 = vmatpush2.msra.mxu0 0.0
    %335 = vmatprep.subr.mxu0 0.0
    %336 = vmatpush2.msra.mxu0 0.0
    %337 = vmatprep.subr.mxu0 0.0
    %338 = vmatpush2.msra.mxu0 0.0
    %339 = vmatprep.subr.mxu0 0.0
    %340 = vmatpush2.msra.mxu0 0.0
    %341 = vmatprep.subr.mxu0 0.0
    %342 = vmatpush2.msra.mxu0 0.0
    %343 = vmatprep.subr.mxu0 0.0
    %344 = vmatpush2.msra.mxu0 0.0
    %345 = vmatprep.subr.mxu0 0.0
    %346 = vmatpush2.msra.mxu0 0.0
    %347 = vmatprep.subr.mxu0 0.0
    %348 = vmatpush2.msra.mxu0 0.0
    %349 = vmatprep.subr.mxu0 0.0
    %350 = vmatpush2.msra.mxu0 0.0
    %351 = vmatprep.subr.mxu0 0.0
    %352 = vmatpush2.msra.mxu0 0.0
    %353 = vmatprep.subr.mxu0 0.0
    %354 = vmatpush2.msra.mxu0 0.0
    %355 = vmatprep.mubr.f32.mxu0 0.0
    %356 = vmatmul.mubr.f32.gmra.mxu0 %v176
    %v357 = vpop.f32.mrf.mxu0
    %v358 = vadd.f32 %v245, %v357
    %v359 = vpop.f32.mrf.mxu0
    %v360 = vadd.f32 %v247, %v359
    %361 = vmatprep.mubr.f32.mxu0 0.0
    %362 = vmatmul.mubr.f32.gmra.mxu0 %v173
    %v363 = vpop.f32.mrf.mxu0
    %v364 = vadd.f32 %v251, %v363
    %v365 = vpop.f32.mrf.mxu0
    %v366 = vadd.f32 %v253, %v365
    %367 = vmatprep.mubr.f32.mxu0 0.0
    %368 = vmatmul.mubr.f32.gmra.mxu0 %v170
    %v369 = vpop.f32.mrf.mxu0
    %v370 = vadd.f32 %v257, %v369
    %v371 = vpop.f32.mrf.mxu0
    %v372 = vadd.f32 %v259, %v371
    %373 = vmatprep.mubr.f32.mxu0 0.0
    %374 = vmatmul.mubr.f32.gmra.mxu0 %v167
    %v375 = vpop.f32.mrf.mxu0
    %v376 = vadd.f32 %v263, %v375
    %v377 = vpop.f32.mrf.mxu0
    %v378 = vadd.f32 %v265, %v377
    %379 = vmatprep.mubr.f32.mxu0 0.0
    %380 = vmatmul.mubr.f32.gmra.mxu0 %v164
    %v381 = vpop.f32.mrf.mxu0
    %v382 = vadd.f32 %v269, %v381
    %v383 = vpop.f32.mrf.mxu0
    %v384 = vadd.f32 %v271, %v383
    %385 = vmatprep.mubr.f32.mxu0 0.0
    %386 = vmatmul.mubr.f32.gmra.mxu0 %v161
    %v387 = vpop.f32.mrf.mxu0
    %v388 = vadd.f32 %v275, %v387
    %v389 = vpop.f32.mrf.mxu0
    %v390 = vadd.f32 %v277, %v389
    %391 = vmatprep.mubr.f32.mxu0 0.0
    %392 = vmatmul.mubr.f32.gmra.mxu0 %v158
    %v393 = vpop.f32.mrf.mxu0
    %v394 = vadd.f32 %v281, %v393
    %v395 = vpop.f32.mrf.mxu0
    %v396 = vadd.f32 %v283, %v395
    %397 = vmatprep.mubr.f32.mxu0 0.0
    %398 = vmatmul.mubr.f32.gmra.mxu0 %v155
    %v399 = vpop.f32.mrf.mxu0
    %v400 = vadd.f32 %v287, %v399
    %v401 = vpop.f32.mrf.mxu0
    %v402 = vadd.f32 %v289, %v401
    %403 = vdwg.mxu0
    %v404 = vld [vmem:[%s3] sm:$0x3]
    %v406 = vlaneseq
    %v407 = vshrl.u32 %v406, 7
    %v408 = vsub.s32 0, %v407
    %v409 = vrot.slane %v404, %v408
    %v410 = vlaneseq
    %v411 = vshrl.u32 %v410, 7
    %v412 = vsub.s32 1, %v411
    %v413 = vrot.slane %v404, %v412
    %v416 = vadd.f32 %v358, %v409
    %v417 = vadd.f32 %v360, %v413
    %v418 = vadd.f32 %v364, %v409
    %v419 = vadd.f32 %v366, %v413
    %v420 = vadd.f32 %v370, %v409
    %v421 = vadd.f32 %v372, %v413
    %v422 = vadd.f32 %v376, %v409
    %v423 = vadd.f32 %v378, %v413
    %v424 = vadd.f32 %v382, %v409
    %v425 = vadd.f32 %v384, %v413
    %v426 = vadd.f32 %v388, %v409
    %v427 = vadd.f32 %v390, %v413
    %v428 = vadd.f32 %v394, %v409
    %v429 = vadd.f32 %v396, %v413
    %v430 = vadd.f32 %v400, %v409
    %v431 = vadd.f32 %v402, %v413
    %432 = vst [vmem:[#allocation2] sm:$0xff] %v416
    %433 = vst [vmem:[#allocation2 + $0x8] sm:$0xff] %v417
    %434 = vst [vmem:[#allocation2 + $0x10] sm:$0xff] %v418
    %435 = vst [vmem:[#allocation2 + $0x18] sm:$0xff] %v419
    %436 = vst [vmem:[#allocation2 + $0x20] sm:$0xff] %v420
    %437 = vst [vmem:[#allocation2 + $0x28] sm:$0xff] %v421
    %438 = vst [vmem:[#allocation2 + $0x30] sm:$0xff] %v422
    %439 = vst [vmem:[#allocation2 + $0x38] sm:$0xff] %v423
    %440 = vst [vmem:[#allocation2 + $0x40] sm:$0xff] %v424
    %441 = vst [vmem:[#allocation2 + $0x48] sm:$0xff] %v425
    %442 = vst [vmem:[#allocation2 + $0x50] sm:$0xff] %v426
    %443 = vst [vmem:[#allocation2 + $0x58] sm:$0xff] %v427
    %444 = vst [vmem:[#allocation2 + $0x60] sm:$0xff] %v428
    %445 = vst [vmem:[#allocation2 + $0x68] sm:$0xff] %v429
    %446 = vst [vmem:[#allocation2 + $0x70] sm:$0xff] %v430
    %447 = vst [vmem:[#allocation2 + $0x78] sm:$0xff] %v431
    %v448 = vld [vmem:[%s4] sm:$0xff]
    %v449 = vld [vmem:[%s4 + $0x8] sm:$0xff]
    %v450 = vld [vmem:[%s4 + $0x10] sm:$0xff]
    %v451 = vld [vmem:[%s4 + $0x18] sm:$0xff]
    %v452 = vld [vmem:[%s4 + $0x20] sm:$0xff]
    %v453 = vld [vmem:[%s4 + $0x28] sm:$0xff]
    %v454 = vld [vmem:[%s4 + $0x30] sm:$0xff]
    %v455 = vld [vmem:[%s4 + $0x38] sm:$0xff]
    %v456 = vld [vmem:[%s4 + $0x40] sm:$0xff]
    %v457 = vld [vmem:[%s4 + $0x48] sm:$0xff]
    %v458 = vld [vmem:[%s4 + $0x50] sm:$0xff]
    %v459 = vld [vmem:[%s4 + $0x58] sm:$0xff]
    %v460 = vld [vmem:[%s4 + $0x60] sm:$0xff]
    %v461 = vld [vmem:[%s4 + $0x68] sm:$0xff]
    %v462 = vld [vmem:[%s4 + $0x70] sm:$0xff]
    %v463 = vld [vmem:[%s4 + $0x78] sm:$0xff]
    %v464 = vld [vmem:[#allocation2] sm:$0xff]
    %v465 = vld [vmem:[#allocation2 + $0x8] sm:$0xff]
    %vm466 = vcmask 523264
    %v468 = vsel %vm466, 0.0, 0
    %470 = vmatprep.subr.mxu0 0.0
    %471 = vmatpush1.msra.mxu0 0.0
    %472 = vmatprep.subr.mxu0 0.0
    %473 = vmatpush1.msra.mxu0 0.0
    %474 = vmatprep.subr.mxu0 0.0
    %475 = vmatpush1.msra.mxu0 0.0
    %476 = vmatprep.subr.mxu0 0.0
    %477 = vmatpush1.msra.mxu0 0.0
    %478 = vmatprep.subr.mxu0 0.0
    %479 = vmatpush1.msra.mxu0 0.0
    %480 = vmatprep.subr.mxu0 0.0
    %481 = vmatpush1.msra.mxu0 0.0
    %482 = vmatprep.subr.mxu0 0.0
    %483 = vmatpush1.msra.mxu0 0.0
    %484 = vmatprep.subr.mxu0 0.0
    %485 = vmatpush1.msra.mxu0 0.0
    %486 = vmatprep.subr.mxu0 %v463
    %487 = vmatpush1.msra.mxu0 %v462
    %488 = vmatprep.subr.mxu0 %v461
    %489 = vmatpush1.msra.mxu0 %v460
    %490 = vmatprep.subr.mxu0 %v459
    %491 = vmatpush1.msra.mxu0 %v458
    %492 = vmatprep.subr.mxu0 %v457
    %493 = vmatpush1.msra.mxu0 %v456
    %494 = vmatprep.subr.mxu0 %v455
    %495 = vmatpush1.msra.mxu0 %v454
    %496 = vmatprep.subr.mxu0 %v453
    %497 = vmatpush1.msra.mxu0 %v452
    %498 = vmatprep.subr.mxu0 %v451
    %499 = vmatpush1.msra.mxu0 %v450
    %500 = vmatprep.subr.mxu0 %v449
    %501 = vmatpush1.msra.mxu0 %v448
    %502 = vmatprep.subr.mxu0 0.0
    %503 = vmatpush2.msra.mxu0 0.0
    %504 = vmatprep.subr.mxu0 0.0
    %505 = vmatpush2.msra.mxu0 0.0
    %506 = vmatprep.subr.mxu0 0.0
    %507 = vmatpush2.msra.mxu0 0.0
    %508 = vmatprep.subr.mxu0 0.0
    %509 = vmatpush2.msra.mxu0 0.0
    %510 = vmatprep.subr.mxu0 0.0
    %511 = vmatpush2.msra.mxu0 0.0
    %512 = vmatprep.subr.mxu0 0.0
    %513 = vmatpush2.msra.mxu0 0.0
    %514 = vmatprep.subr.mxu0 0.0
    %515 = vmatpush2.msra.mxu0 0.0
    %516 = vmatprep.subr.mxu0 0.0
    %517 = vmatpush2.msra.mxu0 0.0
    %518 = vmatprep.subr.mxu0 0.0
    %519 = vmatpush2.msra.mxu0 0.0
    %520 = vmatprep.subr.mxu0 0.0
    %521 = vmatpush2.msra.mxu0 0.0
    %522 = vmatprep.subr.mxu0 0.0
    %523 = vmatpush2.msra.mxu0 0.0
    %524 = vmatprep.subr.mxu0 0.0
    %525 = vmatpush2.msra.mxu0 0.0
    %526 = vmatprep.subr.mxu0 0.0
    %527 = vmatpush2.msra.mxu0 0.0
    %528 = vmatprep.subr.mxu0 0.0
    %529 = vmatpush2.msra.mxu0 0.0
    %530 = vmatprep.subr.mxu0 0.0
    %531 = vmatpush2.msra.mxu0 0.0
    %532 = vmatprep.subr.mxu0 0.0
    %533 = vmatpush2.msra.mxu0 0.0
    %534 = vmatprep.mubr.f32.mxu0 0.0
    %535 = vmatmul.mubr.f32.gmra.mxu0 %v468
    %v536 = vpop.f32.mrf.mxu0
    %v537 = vadd.f32 0.0, %v536
    %v538 = vpop.f32.mrf.mxu0
    %v539 = vadd.f32 0.0, %v538
    %540 = vdwg.mxu0
    %v541 = vadd.f32 %v464, %v537
    %v542 = vadd.f32 %v465, %v539
    %v543 = vxor.u32 %v541, 2147483648
    %v544 = vxor.u32 %v542, 2147483648
    %v545 = vmul.f32 %v543, 1.442695
    %v546 = vpow.pop %v545
    %v547 = vmul.f32 %v544, 1.442695
    %v548 = vpow.pop %v547
    %v549 = vadd.f32 %v546, 1.0
    %v550 = vadd.f32 %v548, 1.0
    %v551 = vrcp.pop %v549
    %v552 = vmul.f32 1.0, %v551
    %v553 = vrcp.pop %v550
    %v554 = vmul.f32 1.0, %v553
    %v555 = vtanh.pop %v542
    %v556 = vmul.f32 %v552, 0.0
    %558 = vrot.lane.b32.xlu0 %v555, 64
    %v559 = vpop.permute.xlu0 %558
    %v561 = vmul.f32 %v552, %v559
    %563 = vrot.lane.b32.xlu0 %v561, 64
    %v564 = vpop.permute.xlu0 %563
    %v566 = vadd.f32 %v556, %v564
    %v567 = vtanh.pop %v566
    %569 = vrot.lane.b32.xlu0 %v567, 64
    %v570 = vpop.permute.xlu0 %569
    %v572 = vmul.f32 %v554, %v570
    %573 = vst.msk [vmem:[#allocation3] sm:$0xff] %vm466, %v572
    %v574 = vld [vmem:[#allocation2 + $0x10] sm:$0xff]
    %v575 = vld [vmem:[#allocation2 + $0x18] sm:$0xff]
    %v577 = vsel %vm466, %v572, 0
    %579 = vmatprep.subr.mxu0 0.0
    %580 = vmatpush1.msra.mxu0 0.0
    %581 = vmatprep.subr.mxu0 0.0
    %582 = vmatpush1.msra.mxu0 0.0
    %583 = vmatprep.subr.mxu0 0.0
    %584 = vmatpush1.msra.mxu0 0.0
    %585 = vmatprep.subr.mxu0 0.0
    %586 = vmatpush1.msra.mxu0 0.0
    %587 = vmatprep.subr.mxu0 0.0
    %588 = vmatpush1.msra.mxu0 0.0
    %589 = vmatprep.subr.mxu0 0.0
    %590 = vmatpush1.msra.mxu0 0.0
    %591 = vmatprep.subr.mxu0 0.0
    %592 = vmatpush1.msra.mxu0 0.0
    %593 = vmatprep.subr.mxu0 0.0
    %594 = vmatpush1.msra.mxu0 0.0
    %595 = vmatprep.subr.mxu0 %v463
    %596 = vmatpush1.msra.mxu0 %v462
    %597 = vmatprep.subr.mxu0 %v461
    %598 = vmatpush1.msra.mxu0 %v460
    %599 = vmatprep.subr.mxu0 %v459
    %600 = vmatpush1.msra.mxu0 %v458
    %601 = vmatprep.subr.mxu0 %v457
    %602 = vmatpush1.msra.mxu0 %v456
    %603 = vmatprep.subr.mxu0 %v455
    %604 = vmatpush1.msra.mxu0 %v454
    %605 = vmatprep.subr.mxu0 %v453
    %606 = vmatpush1.msra.mxu0 %v452
    %607 = vmatprep.subr.mxu0 %v451
    %608 = vmatpush1.msra.mxu0 %v450
    %609 = vmatprep.subr.mxu0 %v449
    %610 = vmatpush1.msra.mxu0 %v448
    %611 = vmatprep.subr.mxu0 0.0
    %612 = vmatpush2.msra.mxu0 0.0
    %613 = vmatprep.subr.mxu0 0.0
    %614 = vmatpush2.msra.mxu0 0.0
    %615 = vmatprep.subr.mxu0 0.0
    %616 = vmatpush2.msra.mxu0 0.0
    %617 = vmatprep.subr.mxu0 0.0
    %618 = vmatpush2.msra.mxu0 0.0
    %619 = vmatprep.subr.mxu0 0.0
    %620 = vmatpush2.msra.mxu0 0.0
    %621 = vmatprep.subr.mxu0 0.0
    %622 = vmatpush2.msra.mxu0 0.0
    %623 = vmatprep.subr.mxu0 0.0
    %624 = vmatpush2.msra.mxu0 0.0
    %625 = vmatprep.subr.mxu0 0.0
    %626 = vmatpush2.msra.mxu0 0.0
    %627 = vmatprep.subr.mxu0 0.0
    %628 = vmatpush2.msra.mxu0 0.0
    %629 = vmatprep.subr.mxu0 0.0
    %630 = vmatpush2.msra.mxu0 0.0
    %631 = vmatprep.subr.mxu0 0.0
    %632 = vmatpush2.msra.mxu0 0.0
    %633 = vmatprep.subr.mxu0 0.0
    %634 = vmatpush2.msra.mxu0 0.0
    %635 = vmatprep.subr.mxu0 0.0
    %636 = vmatpush2.msra.mxu0 0.0
    %637 = vmatprep.subr.mxu0 0.0
    %638 = vmatpush2.msra.mxu0 0.0
    %639 = vmatprep.subr.mxu0 0.0
    %640 = vmatpush2.msra.mxu0 0.0
    %641 = vmatprep.subr.mxu0 0.0
    %642 = vmatpush2.msra.mxu0 0.0
    %643 = vmatprep.mubr.f32.mxu0 0.0
    %644 = vmatmul.mubr.f32.gmra.mxu0 %v577
    %v645 = vpop.f32.mrf.mxu0
    %v646 = vadd.f32 0.0, %v645
    %v647 = vpop.f32.mrf.mxu0
    %v648 = vadd.f32 0.0, %v647
    %649 = vdwg.mxu0
    %v650 = vadd.f32 %v574, %v646
    %v651 = vadd.f32 %v575, %v648
    %v652 = vxor.u32 %v650, 2147483648
    %v653 = vxor.u32 %v651, 2147483648
    %v654 = vmul.f32 %v652, 1.442695
    %v655 = vpow.pop %v654
    %v656 = vmul.f32 %v653, 1.442695
    %v657 = vpow.pop %v656
    %v658 = vadd.f32 %v655, 1.0
    %v659 = vadd.f32 %v657, 1.0
    %v660 = vrcp.pop %v658
    %v661 = vmul.f32 1.0, %v660
    %v662 = vrcp.pop %v659
    %v663 = vmul.f32 1.0, %v662
    %v664 = vtanh.pop %v651
    %v665 = vmul.f32 %v661, %v566
    %667 = vrot.lane.b32.xlu0 %v664, 64
    %v668 = vpop.permute.xlu0 %667
    %v670 = vmul.f32 %v661, %v668
    %672 = vrot.lane.b32.xlu0 %v670, 64
    %v673 = vpop.permute.xlu0 %672
    %v675 = vadd.f32 %v665, %v673
    %v676 = vtanh.pop %v675
    %678 = vrot.lane.b32.xlu0 %v676, 64
    %v679 = vpop.permute.xlu0 %678
    %v681 = vmul.f32 %v663, %v679
    %682 = vst.msk [vmem:[#allocation3 + $0x8] sm:$0xff] %vm466, %v681
    %v683 = vld [vmem:[#allocation2 + $0x20] sm:$0xff]
    %v684 = vld [vmem:[#allocation2 + $0x28] sm:$0xff]
    %v686 = vsel %vm466, %v681, 0
    %688 = vmatprep.subr.mxu0 0.0
    %689 = vmatpush1.msra.mxu0 0.0
    %690 = vmatprep.subr.mxu0 0.0
    %691 = vmatpush1.msra.mxu0 0.0
    %692 = vmatprep.subr.mxu0 0.0
    %693 = vmatpush1.msra.mxu0 0.0
    %694 = vmatprep.subr.mxu0 0.0
    %695 = vmatpush1.msra.mxu0 0.0
    %696 = vmatprep.subr.mxu0 0.0
    %697 = vmatpush1.msra.mxu0 0.0
    %698 = vmatprep.subr.mxu0 0.0
    %699 = vmatpush1.msra.mxu0 0.0
    %700 = vmatprep.subr.mxu0 0.0
    %701 = vmatpush1.msra.mxu0 0.0
    %702 = vmatprep.subr.mxu0 0.0
    %703 = vmatpush1.msra.mxu0 0.0
    %704 = vmatprep.subr.mxu0 %v463
    %705 = vmatpush1.msra.mxu0 %v462
    %706 = vmatprep.subr.mxu0 %v461
    %707 = vmatpush1.msra.mxu0 %v460
    %708 = vmatprep.subr.mxu0 %v459
    %709 = vmatpush1.msra.mxu0 %v458
    %710 = vmatprep.subr.mxu0 %v457
    %711 = vmatpush1.msra.mxu0 %v456
    %712 = vmatprep.subr.mxu0 %v455
    %713 = vmatpush1.msra.mxu0 %v454
    %714 = vmatprep.subr.mxu0 %v453
    %715 = vmatpush1.msra.mxu0 %v452
    %716 = vmatprep.subr.mxu0 %v451
    %717 = vmatpush1.msra.mxu0 %v450
    %718 = vmatprep.subr.mxu0 %v449
    %719 = vmatpush1.msra.mxu0 %v448
    %720 = vmatprep.subr.mxu0 0.0
    %721 = vmatpush2.msra.mxu0 0.0
    %722 = vmatprep.subr.mxu0 0.0
    %723 = vmatpush2.msra.mxu0 0.0
    %724 = vmatprep.subr.mxu0 0.0
    %725 = vmatpush2.msra.mxu0 0.0
    %726 = vmatprep.subr.mxu0 0.0
    %727 = vmatpush2.msra.mxu0 0.0
    %728 = vmatprep.subr.mxu0 0.0
    %729 = vmatpush2.msra.mxu0 0.0
    %730 = vmatprep.subr.mxu0 0.0
    %731 = vmatpush2.msra.mxu0 0.0
    %732 = vmatprep.subr.mxu0 0.0
    %733 = vmatpush2.msra.mxu0 0.0
    %734 = vmatprep.subr.mxu0 0.0
    %735 = vmatpush2.msra.mxu0 0.0
    %736 = vmatprep.subr.mxu0 0.0
    %737 = vmatpush2.msra.mxu0 0.0
    %738 = vmatprep.subr.mxu0 0.0
    %739 = vmatpush2.msra.mxu0 0.0
    %740 = vmatprep.subr.mxu0 0.0
    %741 = vmatpush2.msra.mxu0 0.0
    %742 = vmatprep.subr.mxu0 0.0
    %743 = vmatpush2.msra.mxu0 0.0
    %744 = vmatprep.subr.mxu0 0.0
    %745 = vmatpush2.msra.mxu0 0.0
    %746 = vmatprep.subr.mxu0 0.0
    %747 = vmatpush2.msra.mxu0 0.0
    %748 = vmatprep.subr.mxu0 0.0
    %749 = vmatpush2.msra.mxu0 0.0
    %750 = vmatprep.subr.mxu0 0.0
    %751 = vmatpush2.msra.mxu0 0.0
    %752 = vmatprep.mubr.f32.mxu0 0.0
    %753 = vmatmul.mubr.f32.gmra.mxu0 %v686
    %v754 = vpop.f32.mrf.mxu0
    %v755 = vadd.f32 0.0, %v754
    %v756 = vpop.f32.mrf.mxu0
    %v757 = vadd.f32 0.0, %v756
    %758 = vdwg.mxu0
    %v759 = vadd.f32 %v683, %v755
    %v760 = vadd.f32 %v684, %v757
    %v761 = vxor.u32 %v759, 2147483648
    %v762 = vxor.u32 %v760, 2147483648
    %v763 = vmul.f32 %v761, 1.442695
    %v764 = vpow.pop %v763
    %v765 = vmul.f32 %v762, 1.442695
    %v766 = vpow.pop %v765
    %v767 = vadd.f32 %v764, 1.0
    %v768 = vadd.f32 %v766, 1.0
    %v769 = vrcp.pop %v767
    %v770 = vmul.f32 1.0, %v769
    %v771 = vrcp.pop %v768
    %v772 = vmul.f32 1.0, %v771
    %v773 = vtanh.pop %v760
    %v774 = vmul.f32 %v770, %v675
    %776 = vrot.lane.b32.xlu0 %v773, 64
    %v777 = vpop.permute.xlu0 %776
    %v779 = vmul.f32 %v770, %v777
    %781 = vrot.lane.b32.xlu0 %v779, 64
    %v782 = vpop.permute.xlu0 %781
    %v784 = vadd.f32 %v774, %v782
    %v785 = vtanh.pop %v784
    %787 = vrot.lane.b32.xlu0 %v785, 64
    %v788 = vpop.permute.xlu0 %787
    %v790 = vmul.f32 %v772, %v788
    %791 = vst.msk [vmem:[#allocation3 + $0x10] sm:$0xff] %vm466, %v790
    %v792 = vld [vmem:[#allocation2 + $0x30] sm:$0xff]
    %v793 = vld [vmem:[#allocation2 + $0x38] sm:$0xff]
    %v795 = vsel %vm466, %v790, 0
    %797 = vmatprep.subr.mxu0 0.0
    %798 = vmatpush1.msra.mxu0 0.0
    %799 = vmatprep.subr.mxu0 0.0
    %800 = vmatpush1.msra.mxu0 0.0
    %801 = vmatprep.subr.mxu0 0.0
    %802 = vmatpush1.msra.mxu0 0.0
    %803 = vmatprep.subr.mxu0 0.0
    %804 = vmatpush1.msra.mxu0 0.0
    %805 = vmatprep.subr.mxu0 0.0
    %806 = vmatpush1.msra.mxu0 0.0
    %807 = vmatprep.subr.mxu0 0.0
    %808 = vmatpush1.msra.mxu0 0.0
    %809 = vmatprep.subr.mxu0 0.0
    %810 = vmatpush1.msra.mxu0 0.0
    %811 = vmatprep.subr.mxu0 0.0
    %812 = vmatpush1.msra.mxu0 0.0
    %813 = vmatprep.subr.mxu0 %v463
    %814 = vmatpush1.msra.mxu0 %v462
    %815 = vmatprep.subr.mxu0 %v461
    %816 = vmatpush1.msra.mxu0 %v460
    %817 = vmatprep.subr.mxu0 %v459
    %818 = vmatpush1.msra.mxu0 %v458
    %819 = vmatprep.subr.mxu0 %v457
    %820 = vmatpush1.msra.mxu0 %v456
    %821 = vmatprep.subr.mxu0 %v455
    %822 = vmatpush1.msra.mxu0 %v454
    %823 = vmatprep.subr.mxu0 %v453
    %824 = vmatpush1.msra.mxu0 %v452
    %825 = vmatprep.subr.mxu0 %v451
    %826 = vmatpush1.msra.mxu0 %v450
    %827 = vmatprep.subr.mxu0 %v449
    %828 = vmatpush1.msra.mxu0 %v448
    %829 = vmatprep.subr.mxu0 0.0
    %830 = vmatpush2.msra.mxu0 0.0
    %831 = vmatprep.subr.mxu0 0.0
    %832 = vmatpush2.msra.mxu0 0.0
    %833 = vmatprep.subr.mxu0 0.0
    %834 = vmatpush2.msra.mxu0 0.0
    %835 = vmatprep.subr.mxu0 0.0
    %836 = vmatpush2.msra.mxu0 0.0
    %837 = vmatprep.subr.mxu0 0.0
    %838 = vmatpush2.msra.mxu0 0.0
    %839 = vmatprep.subr.mxu0 0.0
    %840 = vmatpush2.msra.mxu0 0.0
    %841 = vmatprep.subr.mxu0 0.0
    %842 = vmatpush2.msra.mxu0 0.0
    %843 = vmatprep.subr.mxu0 0.0
    %844 = vmatpush2.msra.mxu0 0.0
    %845 = vmatprep.subr.mxu0 0.0
    %846 = vmatpush2.msra.mxu0 0.0
    %847 = vmatprep.subr.mxu0 0.0
    %848 = vmatpush2.msra.mxu0 0.0
    %849 = vmatprep.subr.mxu0 0.0
    %850 = vmatpush2.msra.mxu0 0.0
    %851 = vmatprep.subr.mxu0 0.0
    %852 = vmatpush2.msra.mxu0 0.0
    %853 = vmatprep.subr.mxu0 0.0
    %854 = vmatpush2.msra.mxu0 0.0
    %855 = vmatprep.subr.mxu0 0.0
    %856 = vmatpush2.msra.mxu0 0.0
    %857 = vmatprep.subr.mxu0 0.0
    %858 = vmatpush2.msra.mxu0 0.0
    %859 = vmatprep.subr.mxu0 0.0
    %860 = vmatpush2.msra.mxu0 0.0
    %861 = vmatprep.mubr.f32.mxu0 0.0
    %862 = vmatmul.mubr.f32.gmra.mxu0 %v795
    %v863 = vpop.f32.mrf.mxu0
    %v864 = vadd.f32 0.0, %v863
    %v865 = vpop.f32.mrf.mxu0
    %v866 = vadd.f32 0.0, %v865
    %867 = vdwg.mxu0
    %v868 = vadd.f32 %v792, %v864
    %v869 = vadd.f32 %v793, %v866
    %v870 = vxor.u32 %v868, 2147483648
    %v871 = vxor.u32 %v869, 2147483648
    %v872 = vmul.f32 %v870, 1.442695
    %v873 = vpow.pop %v872
    %v874 = vmul.f32 %v871, 1.442695
    %v875 = vpow.pop %v874
    %v876 = vadd.f32 %v873, 1.0
    %v877 = vadd.f32 %v875, 1.0
    %v878 = vrcp.pop %v876
    %v879 = vmul.f32 1.0, %v878
    %v880 = vrcp.pop %v877
    %v881 = vmul.f32 1.0, %v880
    %v882 = vtanh.pop %v869
    %v883 = vmul.f32 %v879, %v784
    %885 = vrot.lane.b32.xlu0 %v882, 64
    %v886 = vpop.permute.xlu0 %885
    %v888 = vmul.f32 %v879, %v886
    %890 = vrot.lane.b32.xlu0 %v888, 64
    %v891 = vpop.permute.xlu0 %890
    %v893 = vadd.f32 %v883, %v891
    %v894 = vtanh.pop %v893
    %896 = vrot.lane.b32.xlu0 %v894, 64
    %v897 = vpop.permute.xlu0 %896
    %v899 = vmul.f32 %v881, %v897
    %900 = vst.msk [vmem:[#allocation3 + $0x18] sm:$0xff] %vm466, %v899
    %v901 = vld [vmem:[#allocation2 + $0x40] sm:$0xff]
    %v902 = vld [vmem:[#allocation2 + $0x48] sm:$0xff]
    %v904 = vsel %vm466, %v899, 0
    %906 = vmatprep.subr.mxu0 0.0
    %907 = vmatpush1.msra.mxu0 0.0
    %908 = vmatprep.subr.mxu0 0.0
    %909 = vmatpush1.msra.mxu0 0.0
    %910 = vmatprep.subr.mxu0 0.0
    %911 = vmatpush1.msra.mxu0 0.0
    %912 = vmatprep.subr.mxu0 0.0
    %913 = vmatpush1.msra.mxu0 0.0
    %914 = vmatprep.subr.mxu0 0.0
    %915 = vmatpush1.msra.mxu0 0.0
    %916 = vmatprep.subr.mxu0 0.0
    %917 = vmatpush1.msra.mxu0 0.0
    %918 = vmatprep.subr.mxu0 0.0
    %919 = vmatpush1.msra.mxu0 0.0
    %920 = vmatprep.subr.mxu0 0.0
    %921 = vmatpush1.msra.mxu0 0.0
    %922 = vmatprep.subr.mxu0 %v463
    %923 = vmatpush1.msra.mxu0 %v462
    %924 = vmatprep.subr.mxu0 %v461
    %925 = vmatpush1.msra.mxu0 %v460
    %926 = vmatprep.subr.mxu0 %v459
    %927 = vmatpush1.msra.mxu0 %v458
    %928 = vmatprep.subr.mxu0 %v457
    %929 = vmatpush1.msra.mxu0 %v456
    %930 = vmatprep.subr.mxu0 %v455
    %931 = vmatpush1.msra.mxu0 %v454
    %932 = vmatprep.subr.mxu0 %v453
    %933 = vmatpush1.msra.mxu0 %v452
    %934 = vmatprep.subr.mxu0 %v451
    %935 = vmatpush1.msra.mxu0 %v450
    %936 = vmatprep.subr.mxu0 %v449
    %937 = vmatpush1.msra.mxu0 %v448
    %938 = vmatprep.subr.mxu0 0.0
    %939 = vmatpush2.msra.mxu0 0.0
    %940 = vmatprep.subr.mxu0 0.0
    %941 = vmatpush2.msra.mxu0 0.0
    %942 = vmatprep.subr.mxu0 0.0
    %943 = vmatpush2.msra.mxu0 0.0
    %944 = vmatprep.subr.mxu0 0.0
    %945 = vmatpush2.msra.mxu0 0.0
    %946 = vmatprep.subr.mxu0 0.0
    %947 = vmatpush2.msra.mxu0 0.0
    %948 = vmatprep.subr.mxu0 0.0
    %949 = vmatpush2.msra.mxu0 0.0
    %950 = vmatprep.subr.mxu0 0.0
    %951 = vmatpush2.msra.mxu0 0.0
    %952 = vmatprep.subr.mxu0 0.0
    %953 = vmatpush2.msra.mxu0 0.0
    %954 = vmatprep.subr.mxu0 0.0
    %955 = vmatpush2.msra.mxu0 0.0
    %956 = vmatprep.subr.mxu0 0.0
    %957 = vmatpush2.msra.mxu0 0.0
    %958 = vmatprep.subr.mxu0 0.0
    %959 = vmatpush2.msra.mxu0 0.0
    %960 = vmatprep.subr.mxu0 0.0
    %961 = vmatpush2.msra.mxu0 0.0
    %962 = vmatprep.subr.mxu0 0.0
    %963 = vmatpush2.msra.mxu0 0.0
    %964 = vmatprep.subr.mxu0 0.0
    %965 = vmatpush2.msra.mxu0 0.0
    %966 = vmatprep.subr.mxu0 0.0
    %967 = vmatpush2.msra.mxu0 0.0
    %968 = vmatprep.subr.mxu0 0.0
    %969 = vmatpush2.msra.mxu0 0.0
    %970 = vmatprep.mubr.f32.mxu0 0.0
    %971 = vmatmul.mubr.f32.gmra.mxu0 %v904
    %v972 = vpop.f32.mrf.mxu0
    %v973 = vadd.f32 0.0, %v972
    %v974 = vpop.f32.mrf.mxu0
    %v975 = vadd.f32 0.0, %v974
    %976 = vdwg.mxu0
    %v977 = vadd.f32 %v901, %v973
    %v978 = vadd.f32 %v902, %v975
    %v979 = vxor.u32 %v977, 2147483648
    %v980 = vxor.u32 %v978, 2147483648
    %v981 = vmul.f32 %v979, 1.442695
    %v982 = vpow.pop %v981
    %v983 = vmul.f32 %v980, 1.442695
    %v984 = vpow.pop %v983
    %v985 = vadd.f32 %v982, 1.0
    %v986 = vadd.f32 %v984, 1.0
    %v987 = vrcp.pop %v985
    %v988 = vmul.f32 1.0, %v987
    %v989 = vrcp.pop %v986
    %v990 = vmul.f32 1.0, %v989
    %v991 = vtanh.pop %v978
    %v992 = vmul.f32 %v988, %v893
    %994 = vrot.lane.b32.xlu0 %v991, 64
    %v995 = vpop.permute.xlu0 %994
    %v997 = vmul.f32 %v988, %v995
    %999 = vrot.lane.b32.xlu0 %v997, 64
    %v1000 = vpop.permute.xlu0 %999
    %v1002 = vadd.f32 %v992, %v1000
    %v1003 = vtanh.pop %v1002
    %1005 = vrot.lane.b32.xlu0 %v1003, 64
    %v1006 = vpop.permute.xlu0 %1005
    %v1008 = vmul.f32 %v990, %v1006
    %1009 = vst.msk [vmem:[#allocation3 + $0x20] sm:$0xff] %vm466, %v1008
    %v1010 = vld [vmem:[#allocation2 + $0x50] sm:$0xff]
    %v1011 = vld [vmem:[#allocation2 + $0x58] sm:$0xff]
    %v1013 = vsel %vm466, %v1008, 0
    %1015 = vmatprep.subr.mxu0 0.0
    %1016 = vmatpush1.msra.mxu0 0.0
    %1017 = vmatprep.subr.mxu0 0.0
    %1018 = vmatpush1.msra.mxu0 0.0
    %1019 = vmatprep.subr.mxu0 0.0
    %1020 = vmatpush1.msra.mxu0 0.0
    %1021 = vmatprep.subr.mxu0 0.0
    %1022 = vmatpush1.msra.mxu0 0.0
    %1023 = vmatprep.subr.mxu0 0.0
    %1024 = vmatpush1.msra.mxu0 0.0
    %1025 = vmatprep.subr.mxu0 0.0
    %1026 = vmatpush1.msra.mxu0 0.0
    %1027 = vmatprep.subr.mxu0 0.0
    %1028 = vmatpush1.msra.mxu0 0.0
    %1029 = vmatprep.subr.mxu0 0.0
    %1030 = vmatpush1.msra.mxu0 0.0
    %1031 = vmatprep.subr.mxu0 %v463
    %1032 = vmatpush1.msra.mxu0 %v462
    %1033 = vmatprep.subr.mxu0 %v461
    %1034 = vmatpush1.msra.mxu0 %v460
    %1035 = vmatprep.subr.mxu0 %v459
    %1036 = vmatpush1.msra.mxu0 %v458
    %1037 = vmatprep.subr.mxu0 %v457
    %1038 = vmatpush1.msra.mxu0 %v456
    %1039 = vmatprep.subr.mxu0 %v455
    %1040 = vmatpush1.msra.mxu0 %v454
    %1041 = vmatprep.subr.mxu0 %v453
    %1042 = vmatpush1.msra.mxu0 %v452
    %1043 = vmatprep.subr.mxu0 %v451
    %1044 = vmatpush1.msra.mxu0 %v450
    %1045 = vmatprep.subr.mxu0 %v449
    %1046 = vmatpush1.msra.mxu0 %v448
    %1047 = vmatprep.subr.mxu0 0.0
    %1048 = vmatpush2.msra.mxu0 0.0
    %1049 = vmatprep.subr.mxu0 0.0
    %1050 = vmatpush2.msra.mxu0 0.0
    %1051 = vmatprep.subr.mxu0 0.0
    %1052 = vmatpush2.msra.mxu0 0.0
    %1053 = vmatprep.subr.mxu0 0.0
    %1054 = vmatpush2.msra.mxu0 0.0
    %1055 = vmatprep.subr.mxu0 0.0
    %1056 = vmatpush2.msra.mxu0 0.0
    %1057 = vmatprep.subr.mxu0 0.0
    %1058 = vmatpush2.msra.mxu0 0.0
    %1059 = vmatprep.subr.mxu0 0.0
    %1060 = vmatpush2.msra.mxu0 0.0
    %1061 = vmatprep.subr.mxu0 0.0
    %1062 = vmatpush2.msra.mxu0 0.0
    %1063 = vmatprep.subr.mxu0 0.0
    %1064 = vmatpush2.msra.mxu0 0.0
    %1065 = vmatprep.subr.mxu0 0.0
    %1066 = vmatpush2.msra.mxu0 0.0
    %1067 = vmatprep.subr.mxu0 0.0
    %1068 = vmatpush2.msra.mxu0 0.0
    %1069 = vmatprep.subr.mxu0 0.0
    %1070 = vmatpush2.msra.mxu0 0.0
    %1071 = vmatprep.subr.mxu0 0.0
    %1072 = vmatpush2.msra.mxu0 0.0
    %1073 = vmatprep.subr.mxu0 0.0
    %1074 = vmatpush2.msra.mxu0 0.0
    %1075 = vmatprep.subr.mxu0 0.0
    %1076 = vmatpush2.msra.mxu0 0.0
    %1077 = vmatprep.subr.mxu0 0.0
    %1078 = vmatpush2.msra.mxu0 0.0
    %1079 = vmatprep.mubr.f32.mxu0 0.0
    %1080 = vmatmul.mubr.f32.gmra.mxu0 %v1013
    %v1081 = vpop.f32.mrf.mxu0
    %v1082 = vadd.f32 0.0, %v1081
    %v1083 = vpop.f32.mrf.mxu0
    %v1084 = vadd.f32 0.0, %v1083
    %1085 = vdwg.mxu0
    %v1086 = vadd.f32 %v1010, %v1082
    %v1087 = vadd.f32 %v1011, %v1084
    %v1088 = vxor.u32 %v1086, 2147483648
    %v1089 = vxor.u32 %v1087, 2147483648
    %v1090 = vmul.f32 %v1088, 1.442695
    %v1091 = vpow.pop %v1090
    %v1092 = vmul.f32 %v1089, 1.442695
    %v1093 = vpow.pop %v1092
    %v1094 = vadd.f32 %v1091, 1.0
    %v1095 = vadd.f32 %v1093, 1.0
    %v1096 = vrcp.pop %v1094
    %v1097 = vmul.f32 1.0, %v1096
    %v1098 = vrcp.pop %v1095
    %v1099 = vmul.f32 1.0, %v1098
    %v1100 = vtanh.pop %v1087
    %v1101 = vmul.f32 %v1097, %v1002
    %1103 = vrot.lane.b32.xlu0 %v1100, 64
    %v1104 = vpop.permute.xlu0 %1103
    %v1106 = vmul.f32 %v1097, %v1104
    %1108 = vrot.lane.b32.xlu0 %v1106, 64
    %v1109 = vpop.permute.xlu0 %1108
    %v1111 = vadd.f32 %v1101, %v1109
    %v1112 = vtanh.pop %v1111
    %1114 = vrot.lane.b32.xlu0 %v1112, 64
    %v1115 = vpop.permute.xlu0 %1114
    %v1117 = vmul.f32 %v1099, %v1115
    %1118 = vst.msk [vmem:[#allocation3 + $0x28] sm:$0xff] %vm466, %v1117
    %v1119 = vld [vmem:[#allocation2 + $0x60] sm:$0xff]
    %v1120 = vld [vmem:[#allocation2 + $0x68] sm:$0xff]
    %v1122 = vsel %vm466, %v1117, 0
    %1124 = vmatprep.subr.mxu0 0.0
    %1125 = vmatpush1.msra.mxu0 0.0
    %1126 = vmatprep.subr.mxu0 0.0
    %1127 = vmatpush1.msra.mxu0 0.0
    %1128 = vmatprep.subr.mxu0 0.0
    %1129 = vmatpush1.msra.mxu0 0.0
    %1130 = vmatprep.subr.mxu0 0.0
    %1131 = vmatpush1.msra.mxu0 0.0
    %1132 = vmatprep.subr.mxu0 0.0
    %1133 = vmatpush1.msra.mxu0 0.0
    %1134 = vmatprep.subr.mxu0 0.0
    %1135 = vmatpush1.msra.mxu0 0.0
    %1136 = vmatprep.subr.mxu0 0.0
    %1137 = vmatpush1.msra.mxu0 0.0
    %1138 = vmatprep.subr.mxu0 0.0
    %1139 = vmatpush1.msra.mxu0 0.0
    %1140 = vmatprep.subr.mxu0 %v463
    %1141 = vmatpush1.msra.mxu0 %v462
    %1142 = vmatprep.subr.mxu0 %v461
    %1143 = vmatpush1.msra.mxu0 %v460
    %1144 = vmatprep.subr.mxu0 %v459
    %1145 = vmatpush1.msra.mxu0 %v458
    %1146 = vmatprep.subr.mxu0 %v457
    %1147 = vmatpush1.msra.mxu0 %v456
    %1148 = vmatprep.subr.mxu0 %v455
    %1149 = vmatpush1.msra.mxu0 %v454
    %1150 = vmatprep.subr.mxu0 %v453
    %1151 = vmatpush1.msra.mxu0 %v452
    %1152 = vmatprep.subr.mxu0 %v451
    %1153 = vmatpush1.msra.mxu0 %v450
    %1154 = vmatprep.subr.mxu0 %v449
    %1155 = vmatpush1.msra.mxu0 %v448
    %1156 = vmatprep.subr.mxu0 0.0
    %1157 = vmatpush2.msra.mxu0 0.0
    %1158 = vmatprep.subr.mxu0 0.0
    %1159 = vmatpush2.msra.mxu0 0.0
    %1160 = vmatprep.subr.mxu0 0.0
    %1161 = vmatpush2.msra.mxu0 0.0
    %1162 = vmatprep.subr.mxu0 0.0
    %1163 = vmatpush2.msra.mxu0 0.0
    %1164 = vmatprep.subr.mxu0 0.0
    %1165 = vmatpush2.msra.mxu0 0.0
    %1166 = vmatprep.subr.mxu0 0.0
    %1167 = vmatpush2.msra.mxu0 0.0
    %1168 = vmatprep.subr.mxu0 0.0
    %1169 = vmatpush2.msra.mxu0 0.0
    %1170 = vmatprep.subr.mxu0 0.0
    %1171 = vmatpush2.msra.mxu0 0.0
    %1172 = vmatprep.subr.mxu0 0.0
    %1173 = vmatpush2.msra.mxu0 0.0
    %1174 = vmatprep.subr.mxu0 0.0
    %1175 = vmatpush2.msra.mxu0 0.0
    %1176 = vmatprep.subr.mxu0 0.0
    %1177 = vmatpush2.msra.mxu0 0.0
    %1178 = vmatprep.subr.mxu0 0.0
    %1179 = vmatpush2.msra.mxu0 0.0
    %1180 = vmatprep.subr.mxu0 0.0
    %1181 = vmatpush2.msra.mxu0 0.0
    %1182 = vmatprep.subr.mxu0 0.0
    %1183 = vmatpush2.msra.mxu0 0.0
    %1184 = vmatprep.subr.mxu0 0.0
    %1185 = vmatpush2.msra.mxu0 0.0
    %1186 = vmatprep.subr.mxu0 0.0
    %1187 = vmatpush2.msra.mxu0 0.0
    %1188 = vmatprep.mubr.f32.mxu0 0.0
    %1189 = vmatmul.mubr.f32.gmra.mxu0 %v1122
    %v1190 = vpop.f32.mrf.mxu0
    %v1191 = vadd.f32 0.0, %v1190
    %v1192 = vpop.f32.mrf.mxu0
    %v1193 = vadd.f32 0.0, %v1192
    %1194 = vdwg.mxu0
    %v1195 = vadd.f32 %v1119, %v1191
    %v1196 = vadd.f32 %v1120, %v1193
    %v1197 = vxor.u32 %v1195, 2147483648
    %v1198 = vxor.u32 %v1196, 2147483648
    %v1199 = vmul.f32 %v1197, 1.442695
    %v1200 = vpow.pop %v1199
    %v1201 = vmul.f32 %v1198, 1.442695
    %v1202 = vpow.pop %v1201
    %v1203 = vadd.f32 %v1200, 1.0
    %v1204 = vadd.f32 %v1202, 1.0
    %v1205 = vrcp.pop %v1203
    %v1206 = vmul.f32 1.0, %v1205
    %v1207 = vrcp.pop %v1204
    %v1208 = vmul.f32 1.0, %v1207
    %v1209 = vtanh.pop %v1196
    %v1210 = vmul.f32 %v1206, %v1111
    %1212 = vrot.lane.b32.xlu0 %v1209, 64
    %v1213 = vpop.permute.xlu0 %1212
    %v1215 = vmul.f32 %v1206, %v1213
    %1217 = vrot.lane.b32.xlu0 %v1215, 64
    %v1218 = vpop.permute.xlu0 %1217
    %v1220 = vadd.f32 %v1210, %v1218
    %v1221 = vtanh.pop %v1220
    %1223 = vrot.lane.b32.xlu0 %v1221, 64
    %v1224 = vpop.permute.xlu0 %1223
    %v1226 = vmul.f32 %v1208, %v1224
    %1227 = vst.msk [vmem:[#allocation3 + $0x30] sm:$0xff] %vm466, %v1226
    %v1228 = vld [vmem:[#allocation2 + $0x70] sm:$0xff]
    %v1229 = vld [vmem:[#allocation2 + $0x78] sm:$0xff]
    %v1231 = vsel %vm466, %v1226, 0
    %1233 = vmatprep.subr.mxu0 0.0
    %1234 = vmatpush1.msra.mxu0 0.0
    %1235 = vmatprep.subr.mxu0 0.0
    %1236 = vmatpush1.msra.mxu0 0.0
    %1237 = vmatprep.subr.mxu0 0.0
    %1238 = vmatpush1.msra.mxu0 0.0
    %1239 = vmatprep.subr.mxu0 0.0
    %1240 = vmatpush1.msra.mxu0 0.0
    %1241 = vmatprep.subr.mxu0 0.0
    %1242 = vmatpush1.msra.mxu0 0.0
    %1243 = vmatprep.subr.mxu0 0.0
    %1244 = vmatpush1.msra.mxu0 0.0
    %1245 = vmatprep.subr.mxu0 0.0
    %1246 = vmatpush1.msra.mxu0 0.0
    %1247 = vmatprep.subr.mxu0 0.0
    %1248 = vmatpush1.msra.mxu0 0.0
    %1249 = vmatprep.subr.mxu0 %v463
    %1250 = vmatpush1.msra.mxu0 %v462
    %1251 = vmatprep.subr.mxu0 %v461
    %1252 = vmatpush1.msra.mxu0 %v460
    %1253 = vmatprep.subr.mxu0 %v459
    %1254 = vmatpush1.msra.mxu0 %v458
    %1255 = vmatprep.subr.mxu0 %v457
    %1256 = vmatpush1.msra.mxu0 %v456
    %1257 = vmatprep.subr.mxu0 %v455
    %1258 = vmatpush1.msra.mxu0 %v454
    %1259 = vmatprep.subr.mxu0 %v453
    %1260 = vmatpush1.msra.mxu0 %v452
    %1261 = vmatprep.subr.mxu0 %v451
    %1262 = vmatpush1.msra.mxu0 %v450
    %1263 = vmatprep.subr.mxu0 %v449
    %1264 = vmatpush1.msra.mxu0 %v448
    %1265 = vmatprep.subr.mxu0 0.0
    %1266 = vmatpush2.msra.mxu0 0.0
    %1267 = vmatprep.subr.mxu0 0.0
    %1268 = vmatpush2.msra.mxu0 0.0
    %1269 = vmatprep.subr.mxu0 0.0
    %1270 = vmatpush2.msra.mxu0 0.0
    %1271 = vmatprep.subr.mxu0 0.0
    %1272 = vmatpush2.msra.mxu0 0.0
    %1273 = vmatprep.subr.mxu0 0.0
    %1274 = vmatpush2.msra.mxu0 0.0
    %1275 = vmatprep.subr.mxu0 0.0
    %1276 = vmatpush2.msra.mxu0 0.0
    %1277 = vmatprep.subr.mxu0 0.0
    %1278 = vmatpush2.msra.mxu0 0.0
    %1279 = vmatprep.subr.mxu0 0.0
    %1280 = vmatpush2.msra.mxu0 0.0
    %1281 = vmatprep.subr.mxu0 0.0
    %1282 = vmatpush2.msra.mxu0 0.0
    %1283 = vmatprep.subr.mxu0 0.0
    %1284 = vmatpush2.msra.mxu0 0.0
    %1285 = vmatprep.subr.mxu0 0.0
    %1286 = vmatpush2.msra.mxu0 0.0
    %1287 = vmatprep.subr.mxu0 0.0
    %1288 = vmatpush2.msra.mxu0 0.0
    %1289 = vmatprep.subr.mxu0 0.0
    %1290 = vmatpush2.msra.mxu0 0.0
    %1291 = vmatprep.subr.mxu0 0.0
    %1292 = vmatpush2.msra.mxu0 0.0
    %1293 = vmatprep.subr.mxu0 0.0
    %1294 = vmatpush2.msra.mxu0 0.0
    %1295 = vmatprep.subr.mxu0 0.0
    %1296 = vmatpush2.msra.mxu0 0.0
    %1297 = vmatprep.mubr.f32.mxu0 0.0
    %1298 = vmatmul.mubr.f32.gmra.mxu0 %v1231
    %v1299 = vpop.f32.mrf.mxu0
    %v1300 = vadd.f32 0.0, %v1299
    %v1301 = vpop.f32.mrf.mxu0
    %v1302 = vadd.f32 0.0, %v1301
    %1303 = vdwg.mxu0
    %v1304 = vadd.f32 %v1228, %v1300
    %v1305 = vadd.f32 %v1229, %v1302
    %v1306 = vxor.u32 %v1304, 2147483648
    %v1307 = vxor.u32 %v1305, 2147483648
    %v1308 = vmul.f32 %v1306, 1.442695
    %v1309 = vpow.pop %v1308
    %v1310 = vmul.f32 %v1307, 1.442695
    %v1311 = vpow.pop %v1310
    %v1312 = vadd.f32 %v1309, 1.0
    %v1313 = vadd.f32 %v1311, 1.0
    %v1314 = vrcp.pop %v1312
    %v1315 = vmul.f32 1.0, %v1314
    %v1316 = vrcp.pop %v1313
    %v1317 = vmul.f32 1.0, %v1316
    %v1318 = vtanh.pop %v1305
    %v1319 = vmul.f32 %v1315, %v1220
    %1321 = vrot.lane.b32.xlu0 %v1318, 64
    %v1322 = vpop.permute.xlu0 %1321
    %v1324 = vmul.f32 %v1315, %v1322
    %1326 = vrot.lane.b32.xlu0 %v1324, 64
    %v1327 = vpop.permute.xlu0 %1326
    %v1329 = vadd.f32 %v1319, %v1327
    %v1330 = vtanh.pop %v1329
    %1332 = vrot.lane.b32.xlu0 %v1330, 64
    %v1333 = vpop.permute.xlu0 %1332
    %v1335 = vmul.f32 %v1317, %v1333
    %1336 = vst.msk [vmem:[#allocation3 + $0x38] sm:$0xff] %vm466, %v1335
    %v1337 = vld [vmem:[#allocation3] sm:$0xff]
    %v1338 = vld [vmem:[#allocation3 + $0x8] sm:$0xff]
    %v1339 = vld [vmem:[#allocation3 + $0x10] sm:$0xff]
    %v1340 = vld [vmem:[#allocation3 + $0x18] sm:$0xff]
    %v1341 = vld [vmem:[#allocation3 + $0x20] sm:$0xff]
    %v1342 = vld [vmem:[#allocation3 + $0x28] sm:$0xff]
    %v1343 = vld [vmem:[#allocation3 + $0x30] sm:$0xff]
    %v1344 = vld [vmem:[#allocation3 + $0x38] sm:$0xff]
    %v1345 = vld [vmem:[#allocation7] sm:$0xff]
    %v1346 = vld [vmem:[#allocation7 + $0x8] sm:$0xff]
    %v1347 = vld [vmem:[#allocation7 + $0x10] sm:$0xff]
    %v1348 = vld [vmem:[#allocation7 + $0x18] sm:$0xff]
    %v1349 = vld [vmem:[#allocation7 + $0x20] sm:$0xff]
    %v1350 = vld [vmem:[#allocation7 + $0x28] sm:$0xff]
    %v1351 = vld [vmem:[#allocation7 + $0x30] sm:$0xff]
    %v1352 = vld [vmem:[#allocation7 + $0x38] sm:$0xff]
    %v1353 = vld [vmem:[#allocation7 + $0x40] sm:$0xff]
    %v1354 = vld [vmem:[#allocation7 + $0x48] sm:$0xff]
    %v1355 = vld [vmem:[#allocation7 + $0x50] sm:$0xff]
    %v1356 = vld [vmem:[#allocation7 + $0x58] sm:$0xff]
    %v1357 = vld [vmem:[#allocation7 + $0x60] sm:$0xff]
    %v1358 = vld [vmem:[#allocation7 + $0x68] sm:$0xff]
    %v1359 = vld [vmem:[#allocation7 + $0x70] sm:$0xff]
    %v1360 = vld [vmem:[#allocation7 + $0x78] sm:$0xff]
    %v1361 = vld [vmem:[#allocation9] sm:$0xff]
    %v1362 = vld [vmem:[#allocation9 + $0x8] sm:$0xff]
    %v1363 = vld [vmem:[#allocation9 + $0x10] sm:$0xff]
    %v1364 = vld [vmem:[#allocation9 + $0x18] sm:$0xff]
    %v1365 = vld [vmem:[#allocation9 + $0x20] sm:$0xff]
    %v1366 = vld [vmem:[#allocation9 + $0x28] sm:$0xff]
    %v1367 = vld [vmem:[#allocation9 + $0x30] sm:$0xff]
    %v1368 = vld [vmem:[#allocation9 + $0x38] sm:$0xff]
    %v1369 = vld [vmem:[#allocation9 + $0x40] sm:$0xff]
    %v1370 = vld [vmem:[#allocation9 + $0x48] sm:$0xff]
    %v1371 = vld [vmem:[#allocation9 + $0x50] sm:$0xff]
    %v1372 = vld [vmem:[#allocation9 + $0x58] sm:$0xff]
    %v1373 = vld [vmem:[#allocation9 + $0x60] sm:$0xff]
    %v1374 = vld [vmem:[#allocation9 + $0x68] sm:$0xff]
    %v1375 = vld [vmem:[#allocation9 + $0x70] sm:$0xff]
    %v1376 = vld [vmem:[#allocation9 + $0x78] sm:$0xff]
    %v1378 = vsel %vm466, %v1344, 0
    %v1381 = vsel %vm466, %v1343, 0
    %v1384 = vsel %vm466, %v1342, 0
    %v1387 = vsel %vm466, %v1341, 0
    %v1390 = vsel %vm466, %v1340, 0
    %v1393 = vsel %vm466, %v1339, 0
    %v1396 = vsel %vm466, %v1338, 0
    %v1399 = vsel %vm466, %v1337, 0
    %1401 = vmatprep.subr.mxu0 0.0
    %1402 = vmatpush1.msra.mxu0 0.0
    %1403 = vmatprep.subr.mxu0 0.0
    %1404 = vmatpush1.msra.mxu0 0.0
    %1405 = vmatprep.subr.mxu0 0.0
    %1406 = vmatpush1.msra.mxu0 0.0
    %1407 = vmatprep.subr.mxu0 0.0
    %1408 = vmatpush1.msra.mxu0 0.0
    %1409 = vmatprep.subr.mxu0 0.0
    %1410 = vmatpush1.msra.mxu0 0.0
    %1411 = vmatprep.subr.mxu0 0.0
    %1412 = vmatpush1.msra.mxu0 0.0
    %1413 = vmatprep.subr.mxu0 0.0
    %1414 = vmatpush1.msra.mxu0 0.0
    %1415 = vmatprep.subr.mxu0 0.0
    %1416 = vmatpush1.msra.mxu0 0.0
    %1417 = vmatprep.subr.mxu0 %v1376
    %1418 = vmatpush1.msra.mxu0 %v1375
    %1419 = vmatprep.subr.mxu0 %v1374
    %1420 = vmatpush1.msra.mxu0 %v1373
    %1421 = vmatprep.subr.mxu0 %v1372
    %1422 = vmatpush1.msra.mxu0 %v1371
    %1423 = vmatprep.subr.mxu0 %v1370
    %1424 = vmatpush1.msra.mxu0 %v1369
    %1425 = vmatprep.subr.mxu0 %v1368
    %1426 = vmatpush1.msra.mxu0 %v1367
    %1427 = vmatprep.subr.mxu0 %v1366
    %1428 = vmatpush1.msra.mxu0 %v1365
    %1429 = vmatprep.subr.mxu0 %v1364
    %1430 = vmatpush1.msra.mxu0 %v1363
    %1431 = vmatprep.subr.mxu0 %v1362
    %1432 = vmatpush1.msra.mxu0 %v1361
    %1433 = vmatprep.subr.mxu0 0.0
    %1434 = vmatpush2.msra.mxu0 0.0
    %1435 = vmatprep.subr.mxu0 0.0
    %1436 = vmatpush2.msra.mxu0 0.0
    %1437 = vmatprep.subr.mxu0 0.0
    %1438 = vmatpush2.msra.mxu0 0.0
    %1439 = vmatprep.subr.mxu0 0.0
    %1440 = vmatpush2.msra.mxu0 0.0
    %1441 = vmatprep.subr.mxu0 0.0
    %1442 = vmatpush2.msra.mxu0 0.0
    %1443 = vmatprep.subr.mxu0 0.0
    %1444 = vmatpush2.msra.mxu0 0.0
    %1445 = vmatprep.subr.mxu0 0.0
    %1446 = vmatpush2.msra.mxu0 0.0
    %1447 = vmatprep.subr.mxu0 0.0
    %1448 = vmatpush2.msra.mxu0 0.0
    %1449 = vmatprep.subr.mxu0 0.0
    %1450 = vmatpush2.msra.mxu0 0.0
    %1451 = vmatprep.subr.mxu0 0.0
    %1452 = vmatpush2.msra.mxu0 0.0
    %1453 = vmatprep.subr.mxu0 0.0
    %1454 = vmatpush2.msra.mxu0 0.0
    %1455 = vmatprep.subr.mxu0 0.0
    %1456 = vmatpush2.msra.mxu0 0.0
    %1457 = vmatprep.subr.mxu0 0.0
    %1458 = vmatpush2.msra.mxu0 0.0
    %1459 = vmatprep.subr.mxu0 0.0
    %1460 = vmatpush2.msra.mxu0 0.0
    %1461 = vmatprep.subr.mxu0 0.0
    %1462 = vmatpush2.msra.mxu0 0.0
    %1463 = vmatprep.subr.mxu0 0.0
    %1464 = vmatpush2.msra.mxu0 0.0
    %1465 = vmatprep.mubr.f32.mxu0 0.0
    %1466 = vmatmul.mubr.f32.gmra.mxu0 %v1378
    %v1467 = vpop.f32.mrf.mxu0
    %v1468 = vadd.f32 0.0, %v1467
    %v1469 = vpop.f32.mrf.mxu0
    %v1470 = vadd.f32 0.0, %v1469
    %1471 = vmatprep.mubr.f32.mxu0 0.0
    %1472 = vmatmul.mubr.f32.gmra.mxu0 %v1381
    %v1473 = vpop.f32.mrf.mxu0
    %v1474 = vadd.f32 0.0, %v1473
    %v1475 = vpop.f32.mrf.mxu0
    %v1476 = vadd.f32 0.0, %v1475
    %1477 = vmatprep.mubr.f32.mxu0 0.0
    %1478 = vmatmul.mubr.f32.gmra.mxu0 %v1384
    %v1479 = vpop.f32.mrf.mxu0
    %v1480 = vadd.f32 0.0, %v1479
    %v1481 = vpop.f32.mrf.mxu0
    %v1482 = vadd.f32 0.0, %v1481
    %1483 = vmatprep.mubr.f32.mxu0 0.0
    %1484 = vmatmul.mubr.f32.gmra.mxu0 %v1387
    %v1485 = vpop.f32.mrf.mxu0
    %v1486 = vadd.f32 0.0, %v1485
    %v1487 = vpop.f32.mrf.mxu0
    %v1488 = vadd.f32 0.0, %v1487
    %1489 = vmatprep.mubr.f32.mxu0 0.0
    %1490 = vmatmul.mubr.f32.gmra.mxu0 %v1390
    %v1491 = vpop.f32.mrf.mxu0
    %v1492 = vadd.f32 0.0, %v1491
    %v1493 = vpop.f32.mrf.mxu0
    %v1494 = vadd.f32 0.0, %v1493
    %1495 = vmatprep.mubr.f32.mxu0 0.0
    %1496 = vmatmul.mubr.f32.gmra.mxu0 %v1393
    %v1497 = vpop.f32.mrf.mxu0
    %v1498 = vadd.f32 0.0, %v1497
    %v1499 = vpop.f32.mrf.mxu0
    %v1500 = vadd.f32 0.0, %v1499
    %1501 = vmatprep.mubr.f32.mxu0 0.0
    %1502 = vmatmul.mubr.f32.gmra.mxu0 %v1396
    %v1503 = vpop.f32.mrf.mxu0
    %v1504 = vadd.f32 0.0, %v1503
    %v1505 = vpop.f32.mrf.mxu0
    %v1506 = vadd.f32 0.0, %v1505
    %1507 = vmatprep.mubr.f32.mxu0 0.0
    %1508 = vmatmul.mubr.f32.gmra.mxu0 %v1399
    %v1509 = vpop.f32.mrf.mxu0
    %v1510 = vadd.f32 0.0, %v1509
    %v1511 = vpop.f32.mrf.mxu0
    %v1512 = vadd.f32 0.0, %v1511
    %1513 = vdwg.mxu0
    %1514 = vmatprep.subr.mxu0 0.0
    %1515 = vmatpush1.msra.mxu0 0.0
    %1516 = vmatprep.subr.mxu0 0.0
    %1517 = vmatpush1.msra.mxu0 0.0
    %1518 = vmatprep.subr.mxu0 0.0
    %1519 = vmatpush1.msra.mxu0 0.0
    %1520 = vmatprep.subr.mxu0 0.0
    %1521 = vmatpush1.msra.mxu0 0.0
    %1522 = vmatprep.subr.mxu0 0.0
    %1523 = vmatpush1.msra.mxu0 0.0
    %1524 = vmatprep.subr.mxu0 0.0
    %1525 = vmatpush1.msra.mxu0 0.0
    %1526 = vmatprep.subr.mxu0 0.0
    %1527 = vmatpush1.msra.mxu0 0.0
    %1528 = vmatprep.subr.mxu0 0.0
    %1529 = vmatpush1.msra.mxu0 0.0
    %1530 = vmatprep.subr.mxu0 %v1360
    %1531 = vmatpush1.msra.mxu0 %v1359
    %1532 = vmatprep.subr.mxu0 %v1358
    %1533 = vmatpush1.msra.mxu0 %v1357
    %1534 = vmatprep.subr.mxu0 %v1356
    %1535 = vmatpush1.msra.mxu0 %v1355
    %1536 = vmatprep.subr.mxu0 %v1354
    %1537 = vmatpush1.msra.mxu0 %v1353
    %1538 = vmatprep.subr.mxu0 %v1352
    %1539 = vmatpush1.msra.mxu0 %v1351
    %1540 = vmatprep.subr.mxu0 %v1350
    %1541 = vmatpush1.msra.mxu0 %v1349
    %1542 = vmatprep.subr.mxu0 %v1348
    %1543 = vmatpush1.msra.mxu0 %v1347
    %1544 = vmatprep.subr.mxu0 %v1346
    %1545 = vmatpush1.msra.mxu0 %v1345
    %1546 = vmatprep.subr.mxu0 0.0
    %1547 = vmatpush2.msra.mxu0 0.0
    %1548 = vmatprep.subr.mxu0 0.0
    %1549 = vmatpush2.msra.mxu0 0.0
    %1550 = vmatprep.subr.mxu0 0.0
    %1551 = vmatpush2.msra.mxu0 0.0
    %1552 = vmatprep.subr.mxu0 0.0
    %1553 = vmatpush2.msra.mxu0 0.0
    %1554 = vmatprep.subr.mxu0 0.0
    %1555 = vmatpush2.msra.mxu0 0.0
    %1556 = vmatprep.subr.mxu0 0.0
    %1557 = vmatpush2.msra.mxu0 0.0
    %1558 = vmatprep.subr.mxu0 0.0
    %1559 = vmatpush2.msra.mxu0 0.0
    %1560 = vmatprep.subr.mxu0 0.0
    %1561 = vmatpush2.msra.mxu0 0.0
    %1562 = vmatprep.subr.mxu0 0.0
    %1563 = vmatpush2.msra.mxu0 0.0
    %1564 = vmatprep.subr.mxu0 0.0
    %1565 = vmatpush2.msra.mxu0 0.0
    %1566 = vmatprep.subr.mxu0 0.0
    %1567 = vmatpush2.msra.mxu0 0.0
    %1568 = vmatprep.subr.mxu0 0.0
    %1569 = vmatpush2.msra.mxu0 0.0
    %1570 = vmatprep.subr.mxu0 0.0
    %1571 = vmatpush2.msra.mxu0 0.0
    %1572 = vmatprep.subr.mxu0 0.0
    %1573 = vmatpush2.msra.mxu0 0.0
    %1574 = vmatprep.subr.mxu0 0.0
    %1575 = vmatpush2.msra.mxu0 0.0
    %1576 = vmatprep.subr.mxu0 0.0
    %1577 = vmatpush2.msra.mxu0 0.0
    %1578 = vmatprep.mubr.f32.mxu0 0.0
    %1579 = vmatmul.mubr.f32.gmra.mxu0 %v1399
    %v1580 = vpop.f32.mrf.mxu0
    %v1581 = vadd.f32 %v1468, %v1580
    %v1582 = vpop.f32.mrf.mxu0
    %v1583 = vadd.f32 %v1470, %v1582
    %1584 = vmatprep.mubr.f32.mxu0 0.0
    %1585 = vmatmul.mubr.f32.gmra.mxu0 %v1396
    %v1586 = vpop.f32.mrf.mxu0
    %v1587 = vadd.f32 %v1474, %v1586
    %v1588 = vpop.f32.mrf.mxu0
    %v1589 = vadd.f32 %v1476, %v1588
    %1590 = vmatprep.mubr.f32.mxu0 0.0
    %1591 = vmatmul.mubr.f32.gmra.mxu0 %v1393
    %v1592 = vpop.f32.mrf.mxu0
    %v1593 = vadd.f32 %v1480, %v1592
    %v1594 = vpop.f32.mrf.mxu0
    %v1595 = vadd.f32 %v1482, %v1594
    %1596 = vmatprep.mubr.f32.mxu0 0.0
    %1597 = vmatmul.mubr.f32.gmra.mxu0 %v1390
    %v1598 = vpop.f32.mrf.mxu0
    %v1599 = vadd.f32 %v1486, %v1598
    %v1600 = vpop.f32.mrf.mxu0
    %v1601 = vadd.f32 %v1488, %v1600
    %1602 = vmatprep.mubr.f32.mxu0 0.0
    %1603 = vmatmul.mubr.f32.gmra.mxu0 %v1387
    %v1604 = vpop.f32.mrf.mxu0
    %v1605 = vadd.f32 %v1492, %v1604
    %v1606 = vpop.f32.mrf.mxu0
    %v1607 = vadd.f32 %v1494, %v1606
    %1608 = vmatprep.mubr.f32.mxu0 0.0
    %1609 = vmatmul.mubr.f32.gmra.mxu0 %v1384
    %v1610 = vpop.f32.mrf.mxu0
    %v1611 = vadd.f32 %v1498, %v1610
    %v1612 = vpop.f32.mrf.mxu0
    %v1613 = vadd.f32 %v1500, %v1612
    %1614 = vmatprep.mubr.f32.mxu0 0.0
    %1615 = vmatmul.mubr.f32.gmra.mxu0 %v1381
    %v1616 = vpop.f32.mrf.mxu0
    %v1617 = vadd.f32 %v1504, %v1616
    %v1618 = vpop.f32.mrf.mxu0
    %v1619 = vadd.f32 %v1506, %v1618
    %1620 = vmatprep.mubr.f32.mxu0 0.0
    %1621 = vmatmul.mubr.f32.gmra.mxu0 %v1378
    %v1622 = vpop.f32.mrf.mxu0
    %v1623 = vadd.f32 %v1510, %v1622
    %v1624 = vpop.f32.mrf.mxu0
    %v1625 = vadd.f32 %v1512, %v1624
    %1626 = vdwg.mxu0
    %v1627 = vld [vmem:[#allocation10] sm:$0x3]
    %v1629 = vlaneseq
    %v1630 = vshrl.u32 %v1629, 7
    %v1631 = vsub.s32 0, %v1630
    %v1632 = vrot.slane %v1627, %v1631
    %v1633 = vlaneseq
    %v1634 = vshrl.u32 %v1633, 7
    %v1635 = vsub.s32 1, %v1634
    %v1636 = vrot.slane %v1627, %v1635
    %v1639 = vadd.f32 %v1581, %v1632
    %v1640 = vadd.f32 %v1583, %v1636
    %v1641 = vadd.f32 %v1587, %v1632
    %v1642 = vadd.f32 %v1589, %v1636
    %v1643 = vadd.f32 %v1593, %v1632
    %v1644 = vadd.f32 %v1595, %v1636
    %v1645 = vadd.f32 %v1599, %v1632
    %v1646 = vadd.f32 %v1601, %v1636
    %v1647 = vadd.f32 %v1605, %v1632
    %v1648 = vadd.f32 %v1607, %v1636
    %v1649 = vadd.f32 %v1611, %v1632
    %v1650 = vadd.f32 %v1613, %v1636
    %v1651 = vadd.f32 %v1617, %v1632
    %v1652 = vadd.f32 %v1619, %v1636
    %v1653 = vadd.f32 %v1623, %v1632
    %v1654 = vadd.f32 %v1625, %v1636
    %1655 = vst [vmem:[#allocation2] sm:$0xff] %v1639
    %1656 = vst [vmem:[#allocation2 + $0x8] sm:$0xff] %v1640
    %1657 = vst [vmem:[#allocation2 + $0x10] sm:$0xff] %v1641
    %1658 = vst [vmem:[#allocation2 + $0x18] sm:$0xff] %v1642
    %1659 = vst [vmem:[#allocation2 + $0x20] sm:$0xff] %v1643
    %1660 = vst [vmem:[#allocation2 + $0x28] sm:$0xff] %v1644
    %1661 = vst [vmem:[#allocation2 + $0x30] sm:$0xff] %v1645
    %1662 = vst [vmem:[#allocation2 + $0x38] sm:$0xff] %v1646
    %1663 = vst [vmem:[#allocation2 + $0x40] sm:$0xff] %v1647
    %1664 = vst [vmem:[#allocation2 + $0x48] sm:$0xff] %v1648
    %1665 = vst [vmem:[#allocation2 + $0x50] sm:$0xff] %v1649
    %1666 = vst [vmem:[#allocation2 + $0x58] sm:$0xff] %v1650
    %1667 = vst [vmem:[#allocation2 + $0x60] sm:$0xff] %v1651
    %1668 = vst [vmem:[#allocation2 + $0x68] sm:$0xff] %v1652
    %1669 = vst [vmem:[#allocation2 + $0x70] sm:$0xff] %v1653
    %1670 = vst [vmem:[#allocation2 + $0x78] sm:$0xff] %v1654
    %v1671 = vld [vmem:[#allocation12] sm:$0xff]
    %v1672 = vld [vmem:[#allocation12 + $0x8] sm:$0xff]
    %v1673 = vld [vmem:[#allocation12 + $0x10] sm:$0xff]
    %v1674 = vld [vmem:[#allocation12 + $0x18] sm:$0xff]
    %v1675 = vld [vmem:[#allocation12 + $0x20] sm:$0xff]
    %v1676 = vld [vmem:[#allocation12 + $0x28] sm:$0xff]
    %v1677 = vld [vmem:[#allocation12 + $0x30] sm:$0xff]
    %v1678 = vld [vmem:[#allocation12 + $0x38] sm:$0xff]
    %v1679 = vld [vmem:[#allocation12 + $0x40] sm:$0xff]
    %v1680 = vld [vmem:[#allocation12 + $0x48] sm:$0xff]
    %v1681 = vld [vmem:[#allocation12 + $0x50] sm:$0xff]
    %v1682 = vld [vmem:[#allocation12 + $0x58] sm:$0xff]
    %v1683 = vld [vmem:[#allocation12 + $0x60] sm:$0xff]
    %v1684 = vld [vmem:[#allocation12 + $0x68] sm:$0xff]
    %v1685 = vld [vmem:[#allocation12 + $0x70] sm:$0xff]
    %v1686 = vld [vmem:[#allocation12 + $0x78] sm:$0xff]
    %v1687 = vld [vmem:[#allocation2] sm:$0xff]
    %v1688 = vld [vmem:[#allocation2 + $0x8] sm:$0xff]
    %1689 = vmatprep.subr.mxu0 0.0
    %1690 = vmatpush1.msra.mxu0 0.0
    %1691 = vmatprep.subr.mxu0 0.0
    %1692 = vmatpush1.msra.mxu0 0.0
    %1693 = vmatprep.subr.mxu0 0.0
    %1694 = vmatpush1.msra.mxu0 0.0
    %1695 = vmatprep.subr.mxu0 0.0
    %1696 = vmatpush1.msra.mxu0 0.0
    %1697 = vmatprep.subr.mxu0 0.0
    %1698 = vmatpush1.msra.mxu0 0.0
    %1699 = vmatprep.subr.mxu0 0.0
    %1700 = vmatpush1.msra.mxu0 0.0
    %1701 = vmatprep.subr.mxu0 0.0
    %1702 = vmatpush1.msra.mxu0 0.0
    %1703 = vmatprep.subr.mxu0 0.0
    %1704 = vmatpush1.msra.mxu0 0.0
    %1705 = vmatprep.subr.mxu0 %v1686
    %1706 = vmatpush1.msra.mxu0 %v1685
    %1707 = vmatprep.subr.mxu0 %v1684
    %1708 = vmatpush1.msra.mxu0 %v1683
    %1709 = vmatprep.subr.mxu0 %v1682
    %1710 = vmatpush1.msra.mxu0 %v1681
    %1711 = vmatprep.subr.mxu0 %v1680
    %1712 = vmatpush1.msra.mxu0 %v1679
    %1713 = vmatprep.subr.mxu0 %v1678
    %1714 = vmatpush1.msra.mxu0 %v1677
    %1715 = vmatprep.subr.mxu0 %v1676
    %1716 = vmatpush1.msra.mxu0 %v1675
    %1717 = vmatprep.subr.mxu0 %v1674
    %1718 = vmatpush1.msra.mxu0 %v1673
    %1719 = vmatprep.subr.mxu0 %v1672
    %1720 = vmatpush1.msra.mxu0 %v1671
    %1721 = vmatprep.subr.mxu0 0.0
    %1722 = vmatpush2.msra.mxu0 0.0
    %1723 = vmatprep.subr.mxu0 0.0
    %1724 = vmatpush2.msra.mxu0 0.0
    %1725 = vmatprep.subr.mxu0 0.0
    %1726 = vmatpush2.msra.mxu0 0.0
    %1727 = vmatprep.subr.mxu0 0.0
    %1728 = vmatpush2.msra.mxu0 0.0
    %1729 = vmatprep.subr.mxu0 0.0
    %1730 = vmatpush2.msra.mxu0 0.0
    %1731 = vmatprep.subr.mxu0 0.0
    %1732 = vmatpush2.msra.mxu0 0.0
    %1733 = vmatprep.subr.mxu0 0.0
    %1734 = vmatpush2.msra.mxu0 0.0
    %1735 = vmatprep.subr.mxu0 0.0
    %1736 = vmatpush2.msra.mxu0 0.0
    %1737 = vmatprep.subr.mxu0 0.0
    %1738 = vmatpush2.msra.mxu0 0.0
    %1739 = vmatprep.subr.mxu0 0.0
    %1740 = vmatpush2.msra.mxu0 0.0
    %1741 = vmatprep.subr.mxu0 0.0
    %1742 = vmatpush2.msra.mxu0 0.0
    %1743 = vmatprep.subr.mxu0 0.0
    %1744 = vmatpush2.msra.mxu0 0.0
    %1745 = vmatprep.subr.mxu0 0.0
    %1746 = vmatpush2.msra.mxu0 0.0
    %1747 = vmatprep.subr.mxu0 0.0
    %1748 = vmatpush2.msra.mxu0 0.0
    %1749 = vmatprep.subr.mxu0 0.0
    %1750 = vmatpush2.msra.mxu0 0.0
    %1751 = vmatprep.subr.mxu0 0.0
    %1752 = vmatpush2.msra.mxu0 0.0
    %1753 = vmatprep.mubr.f32.mxu0 0.0
    %1754 = vmatmul.mubr.f32.gmra.mxu0 %v468
    %v1755 = vpop.f32.mrf.mxu0
    %v1756 = vadd.f32 0.0, %v1755
    %v1757 = vpop.f32.mrf.mxu0
    %v1758 = vadd.f32 0.0, %v1757
    %1759 = vdwg.mxu0
    %v1760 = vadd.f32 %v1687, %v1756
    %v1761 = vadd.f32 %v1688, %v1758
    %v1762 = vxor.u32 %v1760, 2147483648
    %v1763 = vxor.u32 %v1761, 2147483648
    %v1764 = vmul.f32 %v1762, 1.442695
    %v1765 = vpow.pop %v1764
    %v1766 = vmul.f32 %v1763, 1.442695
    %v1767 = vpow.pop %v1766
    %v1768 = vadd.f32 %v1765, 1.0
    %v1769 = vadd.f32 %v1767, 1.0
    %v1770 = vrcp.pop %v1768
    %v1771 = vmul.f32 1.0, %v1770
    %v1772 = vrcp.pop %v1769
    %v1773 = vmul.f32 1.0, %v1772
    %v1774 = vtanh.pop %v1761
    %v1775 = vmul.f32 %v1771, 0.0
    %1777 = vrot.lane.b32.xlu0 %v1774, 64
    %v1778 = vpop.permute.xlu0 %1777
    %v1780 = vmul.f32 %v1771, %v1778
    %1782 = vrot.lane.b32.xlu0 %v1780, 64
    %v1783 = vpop.permute.xlu0 %1782
    %v1785 = vadd.f32 %v1775, %v1783
    %v1786 = vtanh.pop %v1785
    %1788 = vrot.lane.b32.xlu0 %v1786, 64
    %v1789 = vpop.permute.xlu0 %1788
    %v1791 = vmul.f32 %v1773, %v1789
    %v1792 = vld [vmem:[#allocation2 + $0x10] sm:$0xff]
    %v1793 = vld [vmem:[#allocation2 + $0x18] sm:$0xff]
    %v1795 = vsel %vm466, %v1791, 0
    %1797 = vmatprep.subr.mxu0 0.0
    %1798 = vmatpush1.msra.mxu0 0.0
    %1799 = vmatprep.subr.mxu0 0.0
    %1800 = vmatpush1.msra.mxu0 0.0
    %1801 = vmatprep.subr.mxu0 0.0
    %1802 = vmatpush1.msra.mxu0 0.0
    %1803 = vmatprep.subr.mxu0 0.0
    %1804 = vmatpush1.msra.mxu0 0.0
    %1805 = vmatprep.subr.mxu0 0.0
    %1806 = vmatpush1.msra.mxu0 0.0
    %1807 = vmatprep.subr.mxu0 0.0
    %1808 = vmatpush1.msra.mxu0 0.0
    %1809 = vmatprep.subr.mxu0 0.0
    %1810 = vmatpush1.msra.mxu0 0.0
    %1811 = vmatprep.subr.mxu0 0.0
    %1812 = vmatpush1.msra.mxu0 0.0
    %1813 = vmatprep.subr.mxu0 %v1686
    %1814 = vmatpush1.msra.mxu0 %v1685
    %1815 = vmatprep.subr.mxu0 %v1684
    %1816 = vmatpush1.msra.mxu0 %v1683
    %1817 = vmatprep.subr.mxu0 %v1682
    %1818 = vmatpush1.msra.mxu0 %v1681
    %1819 = vmatprep.subr.mxu0 %v1680
    %1820 = vmatpush1.msra.mxu0 %v1679
    %1821 = vmatprep.subr.mxu0 %v1678
    %1822 = vmatpush1.msra.mxu0 %v1677
    %1823 = vmatprep.subr.mxu0 %v1676
    %1824 = vmatpush1.msra.mxu0 %v1675
    %1825 = vmatprep.subr.mxu0 %v1674
    %1826 = vmatpush1.msra.mxu0 %v1673
    %1827 = vmatprep.subr.mxu0 %v1672
    %1828 = vmatpush1.msra.mxu0 %v1671
    %1829 = vmatprep.subr.mxu0 0.0
    %1830 = vmatpush2.msra.mxu0 0.0
    %1831 = vmatprep.subr.mxu0 0.0
    %1832 = vmatpush2.msra.mxu0 0.0
    %1833 = vmatprep.subr.mxu0 0.0
    %1834 = vmatpush2.msra.mxu0 0.0
    %1835 = vmatprep.subr.mxu0 0.0
    %1836 = vmatpush2.msra.mxu0 0.0
    %1837 = vmatprep.subr.mxu0 0.0
    %1838 = vmatpush2.msra.mxu0 0.0
    %1839 = vmatprep.subr.mxu0 0.0
    %1840 = vmatpush2.msra.mxu0 0.0
    %1841 = vmatprep.subr.mxu0 0.0
    %1842 = vmatpush2.msra.mxu0 0.0
    %1843 = vmatprep.subr.mxu0 0.0
    %1844 = vmatpush2.msra.mxu0 0.0
    %1845 = vmatprep.subr.mxu0 0.0
    %1846 = vmatpush2.msra.mxu0 0.0
    %1847 = vmatprep.subr.mxu0 0.0
    %1848 = vmatpush2.msra.mxu0 0.0
    %1849 = vmatprep.subr.mxu0 0.0
    %1850 = vmatpush2.msra.mxu0 0.0
    %1851 = vmatprep.subr.mxu0 0.0
    %1852 = vmatpush2.msra.mxu0 0.0
    %1853 = vmatprep.subr.mxu0 0.0
    %1854 = vmatpush2.msra.mxu0 0.0
    %1855 = vmatprep.subr.mxu0 0.0
    %1856 = vmatpush2.msra.mxu0 0.0
    %1857 = vmatprep.subr.mxu0 0.0
    %1858 = vmatpush2.msra.mxu0 0.0
    %1859 = vmatprep.subr.mxu0 0.0
    %1860 = vmatpush2.msra.mxu0 0.0
    %1861 = vmatprep.mubr.f32.mxu0 0.0
    %1862 = vmatmul.mubr.f32.gmra.mxu0 %v1795
    %v1863 = vpop.f32.mrf.mxu0
    %v1864 = vadd.f32 0.0, %v1863
    %v1865 = vpop.f32.mrf.mxu0
    %v1866 = vadd.f32 0.0, %v1865
    %1867 = vdwg.mxu0
    %v1868 = vadd.f32 %v1792, %v1864
    %v1869 = vadd.f32 %v1793, %v1866
    %v1870 = vxor.u32 %v1868, 2147483648
    %v1871 = vxor.u32 %v1869, 2147483648
    %v1872 = vmul.f32 %v1870, 1.442695
    %v1873 = vpow.pop %v1872
    %v1874 = vmul.f32 %v1871, 1.442695
    %v1875 = vpow.pop %v1874
    %v1876 = vadd.f32 %v1873, 1.0
    %v1877 = vadd.f32 %v1875, 1.0
    %v1878 = vrcp.pop %v1876
    %v1879 = vmul.f32 1.0, %v1878
    %v1880 = vrcp.pop %v1877
    %v1881 = vmul.f32 1.0, %v1880
    %v1882 = vtanh.pop %v1869
    %v1883 = vmul.f32 %v1879, %v1785
    %1885 = vrot.lane.b32.xlu0 %v1882, 64
    %v1886 = vpop.permute.xlu0 %1885
    %v1888 = vmul.f32 %v1879, %v1886
    %1890 = vrot.lane.b32.xlu0 %v1888, 64
    %v1891 = vpop.permute.xlu0 %1890
    %v1893 = vadd.f32 %v1883, %v1891
    %v1894 = vtanh.pop %v1893
    %1896 = vrot.lane.b32.xlu0 %v1894, 64
    %v1897 = vpop.permute.xlu0 %1896
    %v1899 = vmul.f32 %v1881, %v1897
    %v1900 = vld [vmem:[#allocation2 + $0x20] sm:$0xff]
    %v1901 = vld [vmem:[#allocation2 + $0x28] sm:$0xff]
    %v1903 = vsel %vm466, %v1899, 0
    %1905 = vmatprep.subr.mxu0 0.0
    %1906 = vmatpush1.msra.mxu0 0.0
    %1907 = vmatprep.subr.mxu0 0.0
    %1908 = vmatpush1.msra.mxu0 0.0
    %1909 = vmatprep.subr.mxu0 0.0
    %1910 = vmatpush1.msra.mxu0 0.0
    %1911 = vmatprep.subr.mxu0 0.0
    %1912 = vmatpush1.msra.mxu0 0.0
    %1913 = vmatprep.subr.mxu0 0.0
    %1914 = vmatpush1.msra.mxu0 0.0
    %1915 = vmatprep.subr.mxu0 0.0
    %1916 = vmatpush1.msra.mxu0 0.0
    %1917 = vmatprep.subr.mxu0 0.0
    %1918 = vmatpush1.msra.mxu0 0.0
    %1919 = vmatprep.subr.mxu0 0.0
    %1920 = vmatpush1.msra.mxu0 0.0
    %1921 = vmatprep.subr.mxu0 %v1686
    %1922 = vmatpush1.msra.mxu0 %v1685
    %1923 = vmatprep.subr.mxu0 %v1684
    %1924 = vmatpush1.msra.mxu0 %v1683
    %1925 = vmatprep.subr.mxu0 %v1682
    %1926 = vmatpush1.msra.mxu0 %v1681
    %1927 = vmatprep.subr.mxu0 %v1680
    %1928 = vmatpush1.msra.mxu0 %v1679
    %1929 = vmatprep.subr.mxu0 %v1678
    %1930 = vmatpush1.msra.mxu0 %v1677
    %1931 = vmatprep.subr.mxu0 %v1676
    %1932 = vmatpush1.msra.mxu0 %v1675
    %1933 = vmatprep.subr.mxu0 %v1674
    %1934 = vmatpush1.msra.mxu0 %v1673
    %1935 = vmatprep.subr.mxu0 %v1672
    %1936 = vmatpush1.msra.mxu0 %v1671
    %1937 = vmatprep.subr.mxu0 0.0
    %1938 = vmatpush2.msra.mxu0 0.0
    %1939 = vmatprep.subr.mxu0 0.0
    %1940 = vmatpush2.msra.mxu0 0.0
    %1941 = vmatprep.subr.mxu0 0.0
    %1942 = vmatpush2.msra.mxu0 0.0
    %1943 = vmatprep.subr.mxu0 0.0
    %1944 = vmatpush2.msra.mxu0 0.0
    %1945 = vmatprep.subr.mxu0 0.0
    %1946 = vmatpush2.msra.mxu0 0.0
    %1947 = vmatprep.subr.mxu0 0.0
    %1948 = vmatpush2.msra.mxu0 0.0
    %1949 = vmatprep.subr.mxu0 0.0
    %1950 = vmatpush2.msra.mxu0 0.0
    %1951 = vmatprep.subr.mxu0 0.0
    %1952 = vmatpush2.msra.mxu0 0.0
    %1953 = vmatprep.subr.mxu0 0.0
    %1954 = vmatpush2.msra.mxu0 0.0
    %1955 = vmatprep.subr.mxu0 0.0
    %1956 = vmatpush2.msra.mxu0 0.0
    %1957 = vmatprep.subr.mxu0 0.0
    %1958 = vmatpush2.msra.mxu0 0.0
    %1959 = vmatprep.subr.mxu0 0.0
    %1960 = vmatpush2.msra.mxu0 0.0
    %1961 = vmatprep.subr.mxu0 0.0
    %1962 = vmatpush2.msra.mxu0 0.0
    %1963 = vmatprep.subr.mxu0 0.0
    %1964 = vmatpush2.msra.mxu0 0.0
    %1965 = vmatprep.subr.mxu0 0.0
    %1966 = vmatpush2.msra.mxu0 0.0
    %1967 = vmatprep.subr.mxu0 0.0
    %1968 = vmatpush2.msra.mxu0 0.0
    %1969 = vmatprep.mubr.f32.mxu0 0.0
    %1970 = vmatmul.mubr.f32.gmra.mxu0 %v1903
    %v1971 = vpop.f32.mrf.mxu0
    %v1972 = vadd.f32 0.0, %v1971
    %v1973 = vpop.f32.mrf.mxu0
    %v1974 = vadd.f32 0.0, %v1973
    %1975 = vdwg.mxu0
    %v1976 = vadd.f32 %v1900, %v1972
    %v1977 = vadd.f32 %v1901, %v1974
    %v1978 = vxor.u32 %v1976, 2147483648
    %v1979 = vxor.u32 %v1977, 2147483648
    %v1980 = vmul.f32 %v1978, 1.442695
    %v1981 = vpow.pop %v1980
    %v1982 = vmul.f32 %v1979, 1.442695
    %v1983 = vpow.pop %v1982
    %v1984 = vadd.f32 %v1981, 1.0
    %v1985 = vadd.f32 %v1983, 1.0
    %v1986 = vrcp.pop %v1984
    %v1987 = vmul.f32 1.0, %v1986
    %v1988 = vrcp.pop %v1985
    %v1989 = vmul.f32 1.0, %v1988
    %v1990 = vtanh.pop %v1977
    %v1991 = vmul.f32 %v1987, %v1893
    %1993 = vrot.lane.b32.xlu0 %v1990, 64
    %v1994 = vpop.permute.xlu0 %1993
    %v1996 = vmul.f32 %v1987, %v1994
    %1998 = vrot.lane.b32.xlu0 %v1996, 64
    %v1999 = vpop.permute.xlu0 %1998
    %v2001 = vadd.f32 %v1991, %v1999
    %v2002 = vtanh.pop %v2001
    %2004 = vrot.lane.b32.xlu0 %v2002, 64
    %v2005 = vpop.permute.xlu0 %2004
    %v2007 = vmul.f32 %v1989, %v2005
    %v2008 = vld [vmem:[#allocation2 + $0x30] sm:$0xff]
    %v2009 = vld [vmem:[#allocation2 + $0x38] sm:$0xff]
    %v2011 = vsel %vm466, %v2007, 0
    %2013 = vmatprep.subr.mxu0 0.0
    %2014 = vmatpush1.msra.mxu0 0.0
    %2015 = vmatprep.subr.mxu0 0.0
    %2016 = vmatpush1.msra.mxu0 0.0
    %2017 = vmatprep.subr.mxu0 0.0
    %2018 = vmatpush1.msra.mxu0 0.0
    %2019 = vmatprep.subr.mxu0 0.0
    %2020 = vmatpush1.msra.mxu0 0.0
    %2021 = vmatprep.subr.mxu0 0.0
    %2022 = vmatpush1.msra.mxu0 0.0
    %2023 = vmatprep.subr.mxu0 0.0
    %2024 = vmatpush1.msra.mxu0 0.0
    %2025 = vmatprep.subr.mxu0 0.0
    %2026 = vmatpush1.msra.mxu0 0.0
    %2027 = vmatprep.subr.mxu0 0.0
    %2028 = vmatpush1.msra.mxu0 0.0
    %2029 = vmatprep.subr.mxu0 %v1686
    %2030 = vmatpush1.msra.mxu0 %v1685
    %2031 = vmatprep.subr.mxu0 %v1684
    %2032 = vmatpush1.msra.mxu0 %v1683
    %2033 = vmatprep.subr.mxu0 %v1682
    %2034 = vmatpush1.msra.mxu0 %v1681
    %2035 = vmatprep.subr.mxu0 %v1680
    %2036 = vmatpush1.msra.mxu0 %v1679
    %2037 = vmatprep.subr.mxu0 %v1678
    %2038 = vmatpush1.msra.mxu0 %v1677
    %2039 = vmatprep.subr.mxu0 %v1676
    %2040 = vmatpush1.msra.mxu0 %v1675
    %2041 = vmatprep.subr.mxu0 %v1674
    %2042 = vmatpush1.msra.mxu0 %v1673
    %2043 = vmatprep.subr.mxu0 %v1672
    %2044 = vmatpush1.msra.mxu0 %v1671
    %2045 = vmatprep.subr.mxu0 0.0
    %2046 = vmatpush2.msra.mxu0 0.0
    %2047 = vmatprep.subr.mxu0 0.0
    %2048 = vmatpush2.msra.mxu0 0.0
    %2049 = vmatprep.subr.mxu0 0.0
    %2050 = vmatpush2.msra.mxu0 0.0
    %2051 = vmatprep.subr.mxu0 0.0
    %2052 = vmatpush2.msra.mxu0 0.0
    %2053 = vmatprep.subr.mxu0 0.0
    %2054 = vmatpush2.msra.mxu0 0.0
    %2055 = vmatprep.subr.mxu0 0.0
    %2056 = vmatpush2.msra.mxu0 0.0
    %2057 = vmatprep.subr.mxu0 0.0
    %2058 = vmatpush2.msra.mxu0 0.0
    %2059 = vmatprep.subr.mxu0 0.0
    %2060 = vmatpush2.msra.mxu0 0.0
    %2061 = vmatprep.subr.mxu0 0.0
    %2062 = vmatpush2.msra.mxu0 0.0
    %2063 = vmatprep.subr.mxu0 0.0
    %2064 = vmatpush2.msra.mxu0 0.0
    %2065 = vmatprep.subr.mxu0 0.0
    %2066 = vmatpush2.msra.mxu0 0.0
    %2067 = vmatprep.subr.mxu0 0.0
    %2068 = vmatpush2.msra.mxu0 0.0
    %2069 = vmatprep.subr.mxu0 0.0
    %2070 = vmatpush2.msra.mxu0 0.0
    %2071 = vmatprep.subr.mxu0 0.0
    %2072 = vmatpush2.msra.mxu0 0.0
    %2073 = vmatprep.subr.mxu0 0.0
    %2074 = vmatpush2.msra.mxu0 0.0
    %2075 = vmatprep.subr.mxu0 0.0
    %2076 = vmatpush2.msra.mxu0 0.0
    %2077 = vmatprep.mubr.f32.mxu0 0.0
    %2078 = vmatmul.mubr.f32.gmra.mxu0 %v2011
    %v2079 = vpop.f32.mrf.mxu0
    %v2080 = vadd.f32 0.0, %v2079
    %v2081 = vpop.f32.mrf.mxu0
    %v2082 = vadd.f32 0.0, %v2081
    %2083 = vdwg.mxu0
    %v2084 = vadd.f32 %v2008, %v2080
    %v2085 = vadd.f32 %v2009, %v2082
    %v2086 = vxor.u32 %v2084, 2147483648
    %v2087 = vxor.u32 %v2085, 2147483648
    %v2088 = vmul.f32 %v2086, 1.442695
    %v2089 = vpow.pop %v2088
    %v2090 = vmul.f32 %v2087, 1.442695
    %v2091 = vpow.pop %v2090
    %v2092 = vadd.f32 %v2089, 1.0
    %v2093 = vadd.f32 %v2091, 1.0
    %v2094 = vrcp.pop %v2092
    %v2095 = vmul.f32 1.0, %v2094
    %v2096 = vrcp.pop %v2093
    %v2097 = vmul.f32 1.0, %v2096
    %v2098 = vtanh.pop %v2085
    %v2099 = vmul.f32 %v2095, %v2001
    %2101 = vrot.lane.b32.xlu0 %v2098, 64
    %v2102 = vpop.permute.xlu0 %2101
    %v2104 = vmul.f32 %v2095, %v2102
    %2106 = vrot.lane.b32.xlu0 %v2104, 64
    %v2107 = vpop.permute.xlu0 %2106
    %v2109 = vadd.f32 %v2099, %v2107
    %v2110 = vtanh.pop %v2109
    %2112 = vrot.lane.b32.xlu0 %v2110, 64
    %v2113 = vpop.permute.xlu0 %2112
    %v2115 = vmul.f32 %v2097, %v2113
    %v2116 = vld [vmem:[#allocation2 + $0x40] sm:$0xff]
    %v2117 = vld [vmem:[#allocation2 + $0x48] sm:$0xff]
    %v2119 = vsel %vm466, %v2115, 0
    %2121 = vmatprep.subr.mxu0 0.0
    %2122 = vmatpush1.msra.mxu0 0.0
    %2123 = vmatprep.subr.mxu0 0.0
    %2124 = vmatpush1.msra.mxu0 0.0
    %2125 = vmatprep.subr.mxu0 0.0
    %2126 = vmatpush1.msra.mxu0 0.0
    %2127 = vmatprep.subr.mxu0 0.0
    %2128 = vmatpush1.msra.mxu0 0.0
    %2129 = vmatprep.subr.mxu0 0.0
    %2130 = vmatpush1.msra.mxu0 0.0
    %2131 = vmatprep.subr.mxu0 0.0
    %2132 = vmatpush1.msra.mxu0 0.0
    %2133 = vmatprep.subr.mxu0 0.0
    %2134 = vmatpush1.msra.mxu0 0.0
    %2135 = vmatprep.subr.mxu0 0.0
    %2136 = vmatpush1.msra.mxu0 0.0
    %2137 = vmatprep.subr.mxu0 %v1686
    %2138 = vmatpush1.msra.mxu0 %v1685
    %2139 = vmatprep.subr.mxu0 %v1684
    %2140 = vmatpush1.msra.mxu0 %v1683
    %2141 = vmatprep.subr.mxu0 %v1682
    %2142 = vmatpush1.msra.mxu0 %v1681
    %2143 = vmatprep.subr.mxu0 %v1680
    %2144 = vmatpush1.msra.mxu0 %v1679
    %2145 = vmatprep.subr.mxu0 %v1678
    %2146 = vmatpush1.msra.mxu0 %v1677
    %2147 = vmatprep.subr.mxu0 %v1676
    %2148 = vmatpush1.msra.mxu0 %v1675
    %2149 = vmatprep.subr.mxu0 %v1674
    %2150 = vmatpush1.msra.mxu0 %v1673
    %2151 = vmatprep.subr.mxu0 %v1672
    %2152 = vmatpush1.msra.mxu0 %v1671
    %2153 = vmatprep.subr.mxu0 0.0
    %2154 = vmatpush2.msra.mxu0 0.0
    %2155 = vmatprep.subr.mxu0 0.0
    %2156 = vmatpush2.msra.mxu0 0.0
    %2157 = vmatprep.subr.mxu0 0.0
    %2158 = vmatpush2.msra.mxu0 0.0
    %2159 = vmatprep.subr.mxu0 0.0
    %2160 = vmatpush2.msra.mxu0 0.0
    %2161 = vmatprep.subr.mxu0 0.0
    %2162 = vmatpush2.msra.mxu0 0.0
    %2163 = vmatprep.subr.mxu0 0.0
    %2164 = vmatpush2.msra.mxu0 0.0
    %2165 = vmatprep.subr.mxu0 0.0
    %2166 = vmatpush2.msra.mxu0 0.0
    %2167 = vmatprep.subr.mxu0 0.0
    %2168 = vmatpush2.msra.mxu0 0.0
    %2169 = vmatprep.subr.mxu0 0.0
    %2170 = vmatpush2.msra.mxu0 0.0
    %2171 = vmatprep.subr.mxu0 0.0
    %2172 = vmatpush2.msra.mxu0 0.0
    %2173 = vmatprep.subr.mxu0 0.0
    %2174 = vmatpush2.msra.mxu0 0.0
    %2175 = vmatprep.subr.mxu0 0.0
    %2176 = vmatpush2.msra.mxu0 0.0
    %2177 = vmatprep.subr.mxu0 0.0
    %2178 = vmatpush2.msra.mxu0 0.0
    %2179 = vmatprep.subr.mxu0 0.0
    %2180 = vmatpush2.msra.mxu0 0.0
    %2181 = vmatprep.subr.mxu0 0.0
    %2182 = vmatpush2.msra.mxu0 0.0
    %2183 = vmatprep.subr.mxu0 0.0
    %2184 = vmatpush2.msra.mxu0 0.0
    %2185 = vmatprep.mubr.f32.mxu0 0.0
    %2186 = vmatmul.mubr.f32.gmra.mxu0 %v2119
    %v2187 = vpop.f32.mrf.mxu0
    %v2188 = vadd.f32 0.0, %v2187
    %v2189 = vpop.f32.mrf.mxu0
    %v2190 = vadd.f32 0.0, %v2189
    %2191 = vdwg.mxu0
    %v2192 = vadd.f32 %v2116, %v2188
    %v2193 = vadd.f32 %v2117, %v2190
    %v2194 = vxor.u32 %v2192, 2147483648
    %v2195 = vxor.u32 %v2193, 2147483648
    %v2196 = vmul.f32 %v2194, 1.442695
    %v2197 = vpow.pop %v2196
    %v2198 = vmul.f32 %v2195, 1.442695
    %v2199 = vpow.pop %v2198
    %v2200 = vadd.f32 %v2197, 1.0
    %v2201 = vadd.f32 %v2199, 1.0
    %v2202 = vrcp.pop %v2200
    %v2203 = vmul.f32 1.0, %v2202
    %v2204 = vrcp.pop %v2201
    %v2205 = vmul.f32 1.0, %v2204
    %v2206 = vtanh.pop %v2193
    %v2207 = vmul.f32 %v2203, %v2109
    %2209 = vrot.lane.b32.xlu0 %v2206, 64
    %v2210 = vpop.permute.xlu0 %2209
    %v2212 = vmul.f32 %v2203, %v2210
    %2214 = vrot.lane.b32.xlu0 %v2212, 64
    %v2215 = vpop.permute.xlu0 %2214
    %v2217 = vadd.f32 %v2207, %v2215
    %v2218 = vtanh.pop %v2217
    %2220 = vrot.lane.b32.xlu0 %v2218, 64
    %v2221 = vpop.permute.xlu0 %2220
    %v2223 = vmul.f32 %v2205, %v2221
    %v2224 = vld [vmem:[#allocation2 + $0x50] sm:$0xff]
    %v2225 = vld [vmem:[#allocation2 + $0x58] sm:$0xff]
    %v2227 = vsel %vm466, %v2223, 0
    %2229 = vmatprep.subr.mxu0 0.0
    %2230 = vmatpush1.msra.mxu0 0.0
    %2231 = vmatprep.subr.mxu0 0.0
    %2232 = vmatpush1.msra.mxu0 0.0
    %2233 = vmatprep.subr.mxu0 0.0
    %2234 = vmatpush1.msra.mxu0 0.0
    %2235 = vmatprep.subr.mxu0 0.0
    %2236 = vmatpush1.msra.mxu0 0.0
    %2237 = vmatprep.subr.mxu0 0.0
    %2238 = vmatpush1.msra.mxu0 0.0
    %2239 = vmatprep.subr.mxu0 0.0
    %2240 = vmatpush1.msra.mxu0 0.0
    %2241 = vmatprep.subr.mxu0 0.0
    %2242 = vmatpush1.msra.mxu0 0.0
    %2243 = vmatprep.subr.mxu0 0.0
    %2244 = vmatpush1.msra.mxu0 0.0
    %2245 = vmatprep.subr.mxu0 %v1686
    %2246 = vmatpush1.msra.mxu0 %v1685
    %2247 = vmatprep.subr.mxu0 %v1684
    %2248 = vmatpush1.msra.mxu0 %v1683
    %2249 = vmatprep.subr.mxu0 %v1682
    %2250 = vmatpush1.msra.mxu0 %v1681
    %2251 = vmatprep.subr.mxu0 %v1680
    %2252 = vmatpush1.msra.mxu0 %v1679
    %2253 = vmatprep.subr.mxu0 %v1678
    %2254 = vmatpush1.msra.mxu0 %v1677
    %2255 = vmatprep.subr.mxu0 %v1676
    %2256 = vmatpush1.msra.mxu0 %v1675
    %2257 = vmatprep.subr.mxu0 %v1674
    %2258 = vmatpush1.msra.mxu0 %v1673
    %2259 = vmatprep.subr.mxu0 %v1672
    %2260 = vmatpush1.msra.mxu0 %v1671
    %2261 = vmatprep.subr.mxu0 0.0
    %2262 = vmatpush2.msra.mxu0 0.0
    %2263 = vmatprep.subr.mxu0 0.0
    %2264 = vmatpush2.msra.mxu0 0.0
    %2265 = vmatprep.subr.mxu0 0.0
    %2266 = vmatpush2.msra.mxu0 0.0
    %2267 = vmatprep.subr.mxu0 0.0
    %2268 = vmatpush2.msra.mxu0 0.0
    %2269 = vmatprep.subr.mxu0 0.0
    %2270 = vmatpush2.msra.mxu0 0.0
    %2271 = vmatprep.subr.mxu0 0.0
    %2272 = vmatpush2.msra.mxu0 0.0
    %2273 = vmatprep.subr.mxu0 0.0
    %2274 = vmatpush2.msra.mxu0 0.0
    %2275 = vmatprep.subr.mxu0 0.0
    %2276 = vmatpush2.msra.mxu0 0.0
    %2277 = vmatprep.subr.mxu0 0.0
    %2278 = vmatpush2.msra.mxu0 0.0
    %2279 = vmatprep.subr.mxu0 0.0
    %2280 = vmatpush2.msra.mxu0 0.0
    %2281 = vmatprep.subr.mxu0 0.0
    %2282 = vmatpush2.msra.mxu0 0.0
    %2283 = vmatprep.subr.mxu0 0.0
    %2284 = vmatpush2.msra.mxu0 0.0
    %2285 = vmatprep.subr.mxu0 0.0
    %2286 = vmatpush2.msra.mxu0 0.0
    %2287 = vmatprep.subr.mxu0 0.0
    %2288 = vmatpush2.msra.mxu0 0.0
    %2289 = vmatprep.subr.mxu0 0.0
    %2290 = vmatpush2.msra.mxu0 0.0
    %2291 = vmatprep.subr.mxu0 0.0
    %2292 = vmatpush2.msra.mxu0 0.0
    %2293 = vmatprep.mubr.f32.mxu0 0.0
    %2294 = vmatmul.mubr.f32.gmra.mxu0 %v2227
    %v2295 = vpop.f32.mrf.mxu0
    %v2296 = vadd.f32 0.0, %v2295
    %v2297 = vpop.f32.mrf.mxu0
    %v2298 = vadd.f32 0.0, %v2297
    %2299 = vdwg.mxu0
    %v2300 = vadd.f32 %v2224, %v2296
    %v2301 = vadd.f32 %v2225, %v2298
    %v2302 = vxor.u32 %v2300, 2147483648
    %v2303 = vxor.u32 %v2301, 2147483648
    %v2304 = vmul.f32 %v2302, 1.442695
    %v2305 = vpow.pop %v2304
    %v2306 = vmul.f32 %v2303, 1.442695
    %v2307 = vpow.pop %v2306
    %v2308 = vadd.f32 %v2305, 1.0
    %v2309 = vadd.f32 %v2307, 1.0
    %v2310 = vrcp.pop %v2308
    %v2311 = vmul.f32 1.0, %v2310
    %v2312 = vrcp.pop %v2309
    %v2313 = vmul.f32 1.0, %v2312
    %v2314 = vtanh.pop %v2301
    %v2315 = vmul.f32 %v2311, %v2217
    %2317 = vrot.lane.b32.xlu0 %v2314, 64
    %v2318 = vpop.permute.xlu0 %2317
    %v2320 = vmul.f32 %v2311, %v2318
    %2322 = vrot.lane.b32.xlu0 %v2320, 64
    %v2323 = vpop.permute.xlu0 %2322
    %v2325 = vadd.f32 %v2315, %v2323
    %v2326 = vtanh.pop %v2325
    %2328 = vrot.lane.b32.xlu0 %v2326, 64
    %v2329 = vpop.permute.xlu0 %2328
    %v2331 = vmul.f32 %v2313, %v2329
    %v2332 = vld [vmem:[#allocation2 + $0x60] sm:$0xff]
    %v2333 = vld [vmem:[#allocation2 + $0x68] sm:$0xff]
    %v2335 = vsel %vm466, %v2331, 0
    %2337 = vmatprep.subr.mxu0 0.0
    %2338 = vmatpush1.msra.mxu0 0.0
    %2339 = vmatprep.subr.mxu0 0.0
    %2340 = vmatpush1.msra.mxu0 0.0
    %2341 = vmatprep.subr.mxu0 0.0
    %2342 = vmatpush1.msra.mxu0 0.0
    %2343 = vmatprep.subr.mxu0 0.0
    %2344 = vmatpush1.msra.mxu0 0.0
    %2345 = vmatprep.subr.mxu0 0.0
    %2346 = vmatpush1.msra.mxu0 0.0
    %2347 = vmatprep.subr.mxu0 0.0
    %2348 = vmatpush1.msra.mxu0 0.0
    %2349 = vmatprep.subr.mxu0 0.0
    %2350 = vmatpush1.msra.mxu0 0.0
    %2351 = vmatprep.subr.mxu0 0.0
    %2352 = vmatpush1.msra.mxu0 0.0
    %2353 = vmatprep.subr.mxu0 %v1686
    %2354 = vmatpush1.msra.mxu0 %v1685
    %2355 = vmatprep.subr.mxu0 %v1684
    %2356 = vmatpush1.msra.mxu0 %v1683
    %2357 = vmatprep.subr.mxu0 %v1682
    %2358 = vmatpush1.msra.mxu0 %v1681
    %2359 = vmatprep.subr.mxu0 %v1680
    %2360 = vmatpush1.msra.mxu0 %v1679
    %2361 = vmatprep.subr.mxu0 %v1678
    %2362 = vmatpush1.msra.mxu0 %v1677
    %2363 = vmatprep.subr.mxu0 %v1676
    %2364 = vmatpush1.msra.mxu0 %v1675
    %2365 = vmatprep.subr.mxu0 %v1674
    %2366 = vmatpush1.msra.mxu0 %v1673
    %2367 = vmatprep.subr.mxu0 %v1672
    %2368 = vmatpush1.msra.mxu0 %v1671
    %2369 = vmatprep.subr.mxu0 0.0
    %2370 = vmatpush2.msra.mxu0 0.0
    %2371 = vmatprep.subr.mxu0 0.0
    %2372 = vmatpush2.msra.mxu0 0.0
    %2373 = vmatprep.subr.mxu0 0.0
    %2374 = vmatpush2.msra.mxu0 0.0
    %2375 = vmatprep.subr.mxu0 0.0
    %2376 = vmatpush2.msra.mxu0 0.0
    %2377 = vmatprep.subr.mxu0 0.0
    %2378 = vmatpush2.msra.mxu0 0.0
    %2379 = vmatprep.subr.mxu0 0.0
    %2380 = vmatpush2.msra.mxu0 0.0
    %2381 = vmatprep.subr.mxu0 0.0
    %2382 = vmatpush2.msra.mxu0 0.0
    %2383 = vmatprep.subr.mxu0 0.0
    %2384 = vmatpush2.msra.mxu0 0.0
    %2385 = vmatprep.subr.mxu0 0.0
    %2386 = vmatpush2.msra.mxu0 0.0
    %2387 = vmatprep.subr.mxu0 0.0
    %2388 = vmatpush2.msra.mxu0 0.0
    %2389 = vmatprep.subr.mxu0 0.0
    %2390 = vmatpush2.msra.mxu0 0.0
    %2391 = vmatprep.subr.mxu0 0.0
    %2392 = vmatpush2.msra.mxu0 0.0
    %2393 = vmatprep.subr.mxu0 0.0
    %2394 = vmatpush2.msra.mxu0 0.0
    %2395 = vmatprep.subr.mxu0 0.0
    %2396 = vmatpush2.msra.mxu0 0.0
    %2397 = vmatprep.subr.mxu0 0.0
    %2398 = vmatpush2.msra.mxu0 0.0
    %2399 = vmatprep.subr.mxu0 0.0
    %2400 = vmatpush2.msra.mxu0 0.0
    %2401 = vmatprep.mubr.f32.mxu0 0.0
    %2402 = vmatmul.mubr.f32.gmra.mxu0 %v2335
    %v2403 = vpop.f32.mrf.mxu0
    %v2404 = vadd.f32 0.0, %v2403
    %v2405 = vpop.f32.mrf.mxu0
    %v2406 = vadd.f32 0.0, %v2405
    %2407 = vdwg.mxu0
    %v2408 = vadd.f32 %v2332, %v2404
    %v2409 = vadd.f32 %v2333, %v2406
    %v2410 = vxor.u32 %v2408, 2147483648
    %v2411 = vxor.u32 %v2409, 2147483648
    %v2412 = vmul.f32 %v2410, 1.442695
    %v2413 = vpow.pop %v2412
    %v2414 = vmul.f32 %v2411, 1.442695
    %v2415 = vpow.pop %v2414
    %v2416 = vadd.f32 %v2413, 1.0
    %v2417 = vadd.f32 %v2415, 1.0
    %v2418 = vrcp.pop %v2416
    %v2419 = vmul.f32 1.0, %v2418
    %v2420 = vrcp.pop %v2417
    %v2421 = vmul.f32 1.0, %v2420
    %v2422 = vtanh.pop %v2409
    %v2423 = vmul.f32 %v2419, %v2325
    %2425 = vrot.lane.b32.xlu0 %v2422, 64
    %v2426 = vpop.permute.xlu0 %2425
    %v2428 = vmul.f32 %v2419, %v2426
    %2430 = vrot.lane.b32.xlu0 %v2428, 64
    %v2431 = vpop.permute.xlu0 %2430
    %v2433 = vadd.f32 %v2423, %v2431
    %v2434 = vtanh.pop %v2433
    %2436 = vrot.lane.b32.xlu0 %v2434, 64
    %v2437 = vpop.permute.xlu0 %2436
    %v2439 = vmul.f32 %v2421, %v2437
    %v2440 = vld [vmem:[#allocation2 + $0x70] sm:$0xff]
    %v2441 = vld [vmem:[#allocation2 + $0x78] sm:$0xff]
    %v2443 = vsel %vm466, %v2439, 0
    %2445 = vmatprep.subr.mxu0 0.0
    %2446 = vmatpush1.msra.mxu0 0.0
    %2447 = vmatprep.subr.mxu0 0.0
    %2448 = vmatpush1.msra.mxu0 0.0
    %2449 = vmatprep.subr.mxu0 0.0
    %2450 = vmatpush1.msra.mxu0 0.0
    %2451 = vmatprep.subr.mxu0 0.0
    %2452 = vmatpush1.msra.mxu0 0.0
    %2453 = vmatprep.subr.mxu0 0.0
    %2454 = vmatpush1.msra.mxu0 0.0
    %2455 = vmatprep.subr.mxu0 0.0
    %2456 = vmatpush1.msra.mxu0 0.0
    %2457 = vmatprep.subr.mxu0 0.0
    %2458 = vmatpush1.msra.mxu0 0.0
    %2459 = vmatprep.subr.mxu0 0.0
    %2460 = vmatpush1.msra.mxu0 0.0
    %2461 = vmatprep.subr.mxu0 %v1686
    %2462 = vmatpush1.msra.mxu0 %v1685
    %2463 = vmatprep.subr.mxu0 %v1684
    %2464 = vmatpush1.msra.mxu0 %v1683
    %2465 = vmatprep.subr.mxu0 %v1682
    %2466 = vmatpush1.msra.mxu0 %v1681
    %2467 = vmatprep.subr.mxu0 %v1680
    %2468 = vmatpush1.msra.mxu0 %v1679
    %2469 = vmatprep.subr.mxu0 %v1678
    %2470 = vmatpush1.msra.mxu0 %v1677
    %2471 = vmatprep.subr.mxu0 %v1676
    %2472 = vmatpush1.msra.mxu0 %v1675
    %2473 = vmatprep.subr.mxu0 %v1674
    %2474 = vmatpush1.msra.mxu0 %v1673
    %2475 = vmatprep.subr.mxu0 %v1672
    %2476 = vmatpush1.msra.mxu0 %v1671
    %2477 = vmatprep.subr.mxu0 0.0
    %2478 = vmatpush2.msra.mxu0 0.0
    %2479 = vmatprep.subr.mxu0 0.0
    %2480 = vmatpush2.msra.mxu0 0.0
    %2481 = vmatprep.subr.mxu0 0.0
    %2482 = vmatpush2.msra.mxu0 0.0
    %2483 = vmatprep.subr.mxu0 0.0
    %2484 = vmatpush2.msra.mxu0 0.0
    %2485 = vmatprep.subr.mxu0 0.0
    %2486 = vmatpush2.msra.mxu0 0.0
    %2487 = vmatprep.subr.mxu0 0.0
    %2488 = vmatpush2.msra.mxu0 0.0
    %2489 = vmatprep.subr.mxu0 0.0
    %2490 = vmatpush2.msra.mxu0 0.0
    %2491 = vmatprep.subr.mxu0 0.0
    %2492 = vmatpush2.msra.mxu0 0.0
    %2493 = vmatprep.subr.mxu0 0.0
    %2494 = vmatpush2.msra.mxu0 0.0
    %2495 = vmatprep.subr.mxu0 0.0
    %2496 = vmatpush2.msra.mxu0 0.0
    %2497 = vmatprep.subr.mxu0 0.0
    %2498 = vmatpush2.msra.mxu0 0.0
    %2499 = vmatprep.subr.mxu0 0.0
    %2500 = vmatpush2.msra.mxu0 0.0
    %2501 = vmatprep.subr.mxu0 0.0
    %2502 = vmatpush2.msra.mxu0 0.0
    %2503 = vmatprep.subr.mxu0 0.0
    %2504 = vmatpush2.msra.mxu0 0.0
    %2505 = vmatprep.subr.mxu0 0.0
    %2506 = vmatpush2.msra.mxu0 0.0
    %2507 = vmatprep.subr.mxu0 0.0
    %2508 = vmatpush2.msra.mxu0 0.0
    %2509 = vmatprep.mubr.f32.mxu0 0.0
    %2510 = vmatmul.mubr.f32.gmra.mxu0 %v2443
    %v2511 = vpop.f32.mrf.mxu0
    %v2512 = vadd.f32 0.0, %v2511
    %v2513 = vpop.f32.mrf.mxu0
    %v2514 = vadd.f32 0.0, %v2513
    %2515 = vdwg.mxu0
    %v2516 = vadd.f32 %v2440, %v2512
    %v2517 = vadd.f32 %v2441, %v2514
    %v2518 = vxor.u32 %v2516, 2147483648
    %v2519 = vxor.u32 %v2517, 2147483648
    %v2520 = vmul.f32 %v2518, 1.442695
    %v2521 = vpow.pop %v2520
    %v2522 = vmul.f32 %v2519, 1.442695
    %v2523 = vpow.pop %v2522
    %v2524 = vadd.f32 %v2521, 1.0
    %v2525 = vadd.f32 %v2523, 1.0
    %v2526 = vrcp.pop %v2524
    %v2527 = vmul.f32 1.0, %v2526
    %v2528 = vrcp.pop %v2525
    %v2529 = vmul.f32 1.0, %v2528
    %v2530 = vtanh.pop %v2517
    %v2531 = vmul.f32 %v2527, %v2433
    %2533 = vrot.lane.b32.xlu0 %v2530, 64
    %v2534 = vpop.permute.xlu0 %2533
    %v2536 = vmul.f32 %v2527, %v2534
    %2538 = vrot.lane.b32.xlu0 %v2536, 64
    %v2539 = vpop.permute.xlu0 %2538
    %v2541 = vadd.f32 %v2531, %v2539
    %v2542 = vtanh.pop %v2541
    %2544 = vrot.lane.b32.xlu0 %v2542, 64
    %v2545 = vpop.permute.xlu0 %2544
    %v2547 = vmul.f32 %v2529, %v2545
    %v2548 = vld [vmem:[%s9] sm:$0xff]
    %v2549 = vld [vmem:[%s9 + $0x8] sm:$0xff]
    %v2550 = vld [vmem:[%s9 + $0x10] sm:$0xff]
    %v2551 = vld [vmem:[%s9 + $0x18] sm:$0xff]
    %v2552 = vld [vmem:[%s9 + $0x20] sm:$0xff]
    %v2553 = vld [vmem:[%s9 + $0x28] sm:$0xff]
    %v2554 = vld [vmem:[%s9 + $0x30] sm:$0xff]
    %v2555 = vld [vmem:[%s9 + $0x38] sm:$0xff]
    %v2556 = vld [vmem:[#allocation13] sm:$0x1]
    %v2558 = vlaneseq
    %v2559 = vshrl.u32 %v2558, 7
    %v2560 = vsub.s32 0, %v2559
    %v2561 = vrot.slane %v2556, %v2560
    %v2564 = vsel %vm466, %v2547, 0
    %2566 = vmatprep.subr.mxu0 0.0
    %2567 = vmatpush1.msra.mxu0 0.0
    %2568 = vmatprep.subr.mxu0 0.0
    %2569 = vmatpush1.msra.mxu0 0.0
    %2570 = vmatprep.subr.mxu0 0.0
    %2571 = vmatpush1.msra.mxu0 0.0
    %2572 = vmatprep.subr.mxu0 0.0
    %2573 = vmatpush1.msra.mxu0 0.0
    %2574 = vmatprep.subr.mxu0 0.0
    %2575 = vmatpush1.msra.mxu0 0.0
    %2576 = vmatprep.subr.mxu0 0.0
    %2577 = vmatpush1.msra.mxu0 0.0
    %2578 = vmatprep.subr.mxu0 0.0
    %2579 = vmatpush1.msra.mxu0 0.0
    %2580 = vmatprep.subr.mxu0 0.0
    %2581 = vmatpush1.msra.mxu0 0.0
    %2582 = vmatprep.subr.mxu0 0.0
    %2583 = vmatpush1.msra.mxu0 %v2555
    %2584 = vmatprep.subr.mxu0 0.0
    %2585 = vmatpush1.msra.mxu0 %v2554
    %2586 = vmatprep.subr.mxu0 0.0
    %2587 = vmatpush1.msra.mxu0 %v2553
    %2588 = vmatprep.subr.mxu0 0.0
    %2589 = vmatpush1.msra.mxu0 %v2552
    %2590 = vmatprep.subr.mxu0 0.0
    %2591 = vmatpush1.msra.mxu0 %v2551
    %2592 = vmatprep.subr.mxu0 0.0
    %2593 = vmatpush1.msra.mxu0 %v2550
    %2594 = vmatprep.subr.mxu0 0.0
    %2595 = vmatpush1.msra.mxu0 %v2549
    %2596 = vmatprep.subr.mxu0 0.0
    %2597 = vmatpush1.msra.mxu0 %v2548
    %2598 = vmatprep.subr.mxu0 0.0
    %2599 = vmatpush2.msra.mxu0 0.0
    %2600 = vmatprep.subr.mxu0 0.0
    %2601 = vmatpush2.msra.mxu0 0.0
    %2602 = vmatprep.subr.mxu0 0.0
    %2603 = vmatpush2.msra.mxu0 0.0
    %2604 = vmatprep.subr.mxu0 0.0
    %2605 = vmatpush2.msra.mxu0 0.0
    %2606 = vmatprep.subr.mxu0 0.0
    %2607 = vmatpush2.msra.mxu0 0.0
    %2608 = vmatprep.subr.mxu0 0.0
    %2609 = vmatpush2.msra.mxu0 0.0
    %2610 = vmatprep.subr.mxu0 0.0
    %2611 = vmatpush2.msra.mxu0 0.0
    %2612 = vmatprep.subr.mxu0 0.0
    %2613 = vmatpush2.msra.mxu0 0.0
    %2614 = vmatprep.subr.mxu0 0.0
    %2615 = vmatpush2.msra.mxu0 0.0
    %2616 = vmatprep.subr.mxu0 0.0
    %2617 = vmatpush2.msra.mxu0 0.0
    %2618 = vmatprep.subr.mxu0 0.0
    %2619 = vmatpush2.msra.mxu0 0.0
    %2620 = vmatprep.subr.mxu0 0.0
    %2621 = vmatpush2.msra.mxu0 0.0
    %2622 = vmatprep.subr.mxu0 0.0
    %2623 = vmatpush2.msra.mxu0 0.0
    %2624 = vmatprep.subr.mxu0 0.0
    %2625 = vmatpush2.msra.mxu0 0.0
    %2626 = vmatprep.subr.mxu0 0.0
    %2627 = vmatpush2.msra.mxu0 0.0
    %2628 = vmatprep.subr.mxu0 0.0
    %2629 = vmatpush2.msra.mxu0 0.0
    %2630 = vmatprep.mubr.f32.mxu0 0.0
    %2631 = vmatmul.mubr.f32.gmra.mxu0 %v2564
    %v2632 = vpop.f32.mrf.mxu0
    %v2633 = vadd.f32 %v2561, %v2632
    %v2634 = vpop.f32.mrf.mxu0
    %2635 = vdwg.mxu0
    %v2636 = vmax.f32 %v2633, 0.0
    %v2637 = vld [vmem:[#allocation15] sm:$0xff]
    %v2638 = vld [vmem:[#allocation15 + $0x8] sm:$0xff]
    %v2639 = vld [vmem:[#allocation15 + $0x10] sm:$0xff]
    %v2640 = vld [vmem:[#allocation15 + $0x18] sm:$0xff]
    %v2641 = vld [vmem:[#allocation4] sm:$0x1]
    %v2643 = vlaneseq
    %v2644 = vshrl.u32 %v2643, 7
    %v2645 = vsub.s32 0, %v2644
    %v2646 = vrot.slane %v2641, %v2645
    %vm2648 = vcmask 261120
    %v2650 = vsel %vm2648, %v2636, 0
    %2652 = vmatprep.subr.mxu0 0.0
    %2653 = vmatpush1.msra.mxu0 0.0
    %2654 = vmatprep.subr.mxu0 0.0
    %2655 = vmatpush1.msra.mxu0 0.0
    %2656 = vmatprep.subr.mxu0 0.0
    %2657 = vmatpush1.msra.mxu0 0.0
    %2658 = vmatprep.subr.mxu0 0.0
    %2659 = vmatpush1.msra.mxu0 0.0
    %2660 = vmatprep.subr.mxu0 0.0
    %2661 = vmatpush1.msra.mxu0 0.0
    %2662 = vmatprep.subr.mxu0 0.0
    %2663 = vmatpush1.msra.mxu0 0.0
    %2664 = vmatprep.subr.mxu0 0.0
    %2665 = vmatpush1.msra.mxu0 0.0
    %2666 = vmatprep.subr.mxu0 0.0
    %2667 = vmatpush1.msra.mxu0 0.0
    %2668 = vmatprep.subr.mxu0 0.0
    %2669 = vmatpush1.msra.mxu0 0.0
    %2670 = vmatprep.subr.mxu0 0.0
    %2671 = vmatpush1.msra.mxu0 0.0
    %2672 = vmatprep.subr.mxu0 0.0
    %2673 = vmatpush1.msra.mxu0 0.0
    %2674 = vmatprep.subr.mxu0 0.0
    %2675 = vmatpush1.msra.mxu0 0.0
    %2676 = vmatprep.subr.mxu0 0.0
    %2677 = vmatpush1.msra.mxu0 %v2640
    %2678 = vmatprep.subr.mxu0 0.0
    %2679 = vmatpush1.msra.mxu0 %v2639
    %2680 = vmatprep.subr.mxu0 0.0
    %2681 = vmatpush1.msra.mxu0 %v2638
    %2682 = vmatprep.subr.mxu0 0.0
    %2683 = vmatpush1.msra.mxu0 %v2637
    %2684 = vmatprep.subr.mxu0 0.0
    %2685 = vmatpush2.msra.mxu0 0.0
    %2686 = vmatprep.subr.mxu0 0.0
    %2687 = vmatpush2.msra.mxu0 0.0
    %2688 = vmatprep.subr.mxu0 0.0
    %2689 = vmatpush2.msra.mxu0 0.0
    %2690 = vmatprep.subr.mxu0 0.0
    %2691 = vmatpush2.msra.mxu0 0.0
    %2692 = vmatprep.subr.mxu0 0.0
    %2693 = vmatpush2.msra.mxu0 0.0
    %2694 = vmatprep.subr.mxu0 0.0
    %2695 = vmatpush2.msra.mxu0 0.0
    %2696 = vmatprep.subr.mxu0 0.0
    %2697 = vmatpush2.msra.mxu0 0.0
    %2698 = vmatprep.subr.mxu0 0.0
    %2699 = vmatpush2.msra.mxu0 0.0
    %2700 = vmatprep.subr.mxu0 0.0
    %2701 = vmatpush2.msra.mxu0 0.0
    %2702 = vmatprep.subr.mxu0 0.0
    %2703 = vmatpush2.msra.mxu0 0.0
    %2704 = vmatprep.subr.mxu0 0.0
    %2705 = vmatpush2.msra.mxu0 0.0
    %2706 = vmatprep.subr.mxu0 0.0
    %2707 = vmatpush2.msra.mxu0 0.0
    %2708 = vmatprep.subr.mxu0 0.0
    %2709 = vmatpush2.msra.mxu0 0.0
    %2710 = vmatprep.subr.mxu0 0.0
    %2711 = vmatpush2.msra.mxu0 0.0
    %2712 = vmatprep.subr.mxu0 0.0
    %2713 = vmatpush2.msra.mxu0 0.0
    %2714 = vmatprep.subr.mxu0 0.0
    %2715 = vmatpush2.msra.mxu0 0.0
    %2716 = vmatprep.mubr.f32.mxu0 0.0
    %2717 = vmatmul.mubr.f32.gmra.mxu0 %v2650
    %v2718 = vpop.f32.mrf.mxu0
    %v2719 = vadd.f32 %v2646, %v2718
    %v2720 = vpop.f32.mrf.mxu0
    %2721 = vdwg.mxu0
    %vm2722 = vcmask 7168
    %2723 = vst.msk [vmem:[%s13] sm:$0xff] %vm2722, %v2719
    // Predicated region
    $region82: #{lstm_baseline_forward.1} parent=1 // pred_check
      _
    $region83: #{lstm_baseline_forward.1} parent=1 // pred_check_branch
      %2725 = sbr.rel (0) target = $region85
    $region84: #{lstm_baseline_forward.1} parent=1 // pred_region
      _
    $region85: #{lstm_baseline_forward.1} parent=1 // pred_fallthru
      _
    // Predicated region
    $region86: #{lstm_baseline_forward.1} parent=1 // pred_check
      _
    $region87: #{lstm_baseline_forward.1} parent=1 // pred_check_branch
      %2727 = sbr.rel (0) target = $region89
    $region88: #{lstm_baseline_forward.1} parent=1 // pred_region
      _
    $region89: #{lstm_baseline_forward.1} parent=1 // pred_fallthru
      _
    %2728 = vsyncpa [#allocation6], 1
    %2729 = vsyncpa [#allocation8], 1
    %2730 = vsyncpa [#allocation11], 1
    %2731 = vsyncpa [#allocation14], 1

</llo_original>
